<compile_context>
chip_gen: v7x
topology: tpu7x:2x2x1
jax: 0.10.0
libtpu: 0.0.40
codegen_flags: <defaults>
</compile_context>

<pallas_src>
import jax
import jax.numpy as jnp
from jax.experimental import pallas as pl
from jax.experimental.pallas import tpu as pltpu

Z_SHAPE = 128
HIDDEN_SHAPE = 2 * 120            # 240 (true hidden width)
HIDDEN_PAD = 256                  # lane-dense / MXU-native padded width
H1, H2, H3 = 1024, 512, 256
LANE = 128                        # output padded to a lane-dense width


def _controller_kernel(z_ref, h_ref,
                       w1z_ref, w1h_ref, b1_ref,
                       w2_ref, b2_ref,
                       w3_ref, b3_ref,
                       w4_ref, b4_ref,
                       o_ref):
    # Inputs arrive f32; cast to bf16 in-kernel (VPU, essentially free).
    z = z_ref[...].astype(jnp.bfloat16)      # (bt, 128)
    hid = h_ref[...].astype(jnp.bfloat16)    # (bt, 256), lanes 240..255 are zero

    # Layer 1: split contraction replaces the concat; f32 MXU accumulation.
    a1 = (jnp.dot(z, w1z_ref[...], preferred_element_type=jnp.float32)
          + jnp.dot(hid, w1h_ref[...], preferred_element_type=jnp.float32)
          + b1_ref[...])
    h = jnp.tanh(a1).astype(jnp.bfloat16)    # tanh in f32, store bf16

    # Layer 2 (+ Dropout(p=0.1) -> identity in eval mode).
    a2 = jnp.dot(h, w2_ref[...], preferred_element_type=jnp.float32) + b2_ref[...]
    h = jnp.tanh(a2).astype(jnp.bfloat16)

    # Layer 3.
    a3 = jnp.dot(h, w3_ref[...], preferred_element_type=jnp.float32) + b3_ref[...]
    h = jnp.tanh(a3).astype(jnp.bfloat16)

    # Output layer (lane-padded to 128 columns), stored as bf16.
    out = jnp.dot(h, w4_ref[...], preferred_element_type=jnp.float32) + b4_ref[...]
    o_ref[...] = out.astype(o_ref.dtype)


def init_params(key, action_size):
    """Deterministic init mimicking nn.Linear (uniform +-1/sqrt(fan_in)).
    Weights stored as (in, out) - transposed relative to PyTorch."""
    dims = [(IN_DIM, H1), (H1, H2), (H2, H3), (H3, action_size)]
    params = {}
    for i, (fan_in, fan_out) in enumerate(dims, start=1):
        key, kw, kb = jax.random.split(key, 3)
        bound = 1.0 / jnp.sqrt(fan_in)
        params[f"w{i}"] = jax.random.uniform(
            kw, (fan_in, fan_out), jnp.float32, -bound, bound)
        params[f"b{i}"] = jax.random.uniform(
            kb, (1, fan_out), jnp.float32, -bound, bound)
    return params


IN_DIM = Z_SHAPE + HIDDEN_SHAPE   # 368 (placed after init_params uses it lazily)


def prepare_params(params):
    """One-time prep: split w1 (pad the hidden half to 256 rows), cast weights
    to bf16, pad the last layer to 128 output lanes."""
    action_size = params["w4"].shape[1]
    out_pad = pl.cdiv(action_size, LANE) * LANE

    w1 = params["w1"]
    w1_h = jnp.zeros((HIDDEN_PAD, H1), jnp.bfloat16)
    w1_h = w1_h.at[:HIDDEN_SHAPE].set(w1[Z_SHAPE:].astype(jnp.bfloat16))

    w4_pad = jnp.zeros((H3, out_pad), jnp.bfloat16)
    w4_pad = w4_pad.at[:, :action_size].set(params["w4"].astype(jnp.bfloat16))
    b4_pad = jnp.zeros((1, out_pad), jnp.float32)
    b4_pad = b4_pad.at[:, :action_size].set(params["b4"])

    return {
        "w1_z": w1[:Z_SHAPE].astype(jnp.bfloat16),
        "w1_h": w1_h,                       # (256, 1024), rows 240..255 zero
        "b1": params["b1"],
        "w2": params["w2"].astype(jnp.bfloat16),
        "b2": params["b2"],
        "w3": params["w3"].astype(jnp.bfloat16),
        "b3": params["b3"],
        "w4": w4_pad,
        "b4": b4_pad,
        "action_size": action_size,
        "out_pad": out_pad,
    }


def _row_map(i):
    return (i, 0)


def _rep_map(i):
    return (0, 0)


def controller_forward(Z, hidden, kp, *, b_tile_max=256):
    """Z: (B, 128) f32, hidden: (B, 240) f32. Returns (B, ACTION_SIZE) f32.

    b_tile_max=256 suits the 256-deep MXU of v6e/v7x; pass 128 on v5e if the
    batch is large (M=128 is already MXU-native there)."""
    assert Z.ndim == 2, "Output should be resized before inputted"
    B = Z.shape[0]
    action_size = kp["action_size"]
    out_pad = kp["out_pad"]

    # Pad batch to a multiple of 8 sublanes; single grid step for small B,
    # 256-row tiles (MXU-native on v6e/v7x) for large B.
    b_pad = pl.cdiv(B, 8) * 8
    if b_pad > b_tile_max:
        b_tile = b_tile_max
        b_pad = pl.cdiv(b_pad, b_tile) * b_tile
    else:
        b_tile = b_pad
    grid = (b_pad // b_tile,)

    # At most one pad op per input; stay f32 (bf16 cast happens in-kernel).
    Zp = jnp.pad(Z, ((0, b_pad - B), (0, 0))) if b_pad != B else Z
    Hp = jnp.pad(hidden, ((0, b_pad - B), (0, HIDDEN_PAD - HIDDEN_SHAPE)))

    in_specs = [
        pl.BlockSpec((b_tile, Z_SHAPE), _row_map),        # Z tile (f32)
        pl.BlockSpec((b_tile, HIDDEN_PAD), _row_map),     # hidden tile (f32, padded)
        pl.BlockSpec((Z_SHAPE, H1), _rep_map),            # w1_z (VMEM-resident)
        pl.BlockSpec((HIDDEN_PAD, H1), _rep_map),         # w1_h (VMEM-resident)
        pl.BlockSpec((1, H1), _rep_map),                  # b1
        pl.BlockSpec((H1, H2), _rep_map),                 # w2
        pl.BlockSpec((1, H2), _rep_map),                  # b2
        pl.BlockSpec((H2, H3), _rep_map),                 # w3
        pl.BlockSpec((1, H3), _rep_map),                  # b3
        pl.BlockSpec((H3, out_pad), _rep_map),            # w4 (lane-padded)
        pl.BlockSpec((1, out_pad), _rep_map),             # b4 (lane-padded)
    ]
    out_spec = pl.BlockSpec((b_tile, out_pad), _row_map)

    out_padded = pl.pallas_call(
        _controller_kernel,
        out_shape=jax.ShapeDtypeStruct((b_pad, out_pad), jnp.bfloat16),
        grid=grid,
        in_specs=in_specs,
        out_specs=out_spec,
        compiler_params=pltpu.CompilerParams(
            dimension_semantics=("parallel",),
            vmem_limit_bytes=32 << 20,
        ),
    )(Zp, Hp,
      kp["w1_z"], kp["w1_h"], kp["b1"],
      kp["w2"], kp["b2"],
      kp["w3"], kp["b3"],
      kp["w4"], kp["b4"])

    return out_padded[:B, :action_size].astype(jnp.float32)


def reference_forward(Z, hidden, params):
    """Pure-JAX reference emulating the kernel's bf16 weight/activation rounding
    with f32 accumulation."""
    def bf(x):
        return x.astype(jnp.bfloat16).astype(jnp.float32)

    x = jnp.concatenate([Z, hidden], axis=1)
    h = jnp.tanh(bf(x) @ bf(params["w1"]) + params["b1"])
    h = jnp.tanh(bf(h) @ bf(params["w2"]) + params["b2"])   # dropout = identity (eval)
    h = jnp.tanh(bf(h) @ bf(params["w3"]) + params["b3"])
    return bf(h) @ bf(params["w4"]) + params["b4"]


if __name__ == "__main__":
    ACTION_SIZE = 3

    key = jax.random.PRNGKey(0)
    kparam, kz, kh = jax.random.split(key, 3)
    params = init_params(kparam, ACTION_SIZE)
    kernel_params = prepare_params(params)

    # Small per-env-step batch (the module's typical use).
    B = 2
    Z = jax.random.normal(kz, (B, Z_SHAPE), jnp.float32)
    hidden = jax.random.normal(kh, (B, HIDDEN_SHAPE), jnp.float32)

    out = controller_forward(Z, hidden, kernel_params)
    out = jax.block_until_ready(out)
    ref = reference_forward(Z, hidden, params)
    assert out.shape == (B, ACTION_SIZE)
    assert jnp.allclose(out, ref, atol=2e-2, rtol=2e-2), "mismatch vs. JAX reference (B=2)"

    # Larger batch exercises the 256-row-tile, multi-step grid path.
    B2 = 300
    kz2, kh2 = jax.random.split(jax.random.PRNGKey(1))
    Z2 = jax.random.normal(kz2, (B2, Z_SHAPE), jnp.float32)
    hidden2 = jax.random.normal(kh2, (B2, HIDDEN_SHAPE), jnp.float32)
    out2 = jax.block_until_ready(controller_forward(Z2, hidden2, kernel_params))
    ref2 = reference_forward(Z2, hidden2, params)
    assert out2.shape == (B2, ACTION_SIZE)
    assert jnp.allclose(out2, ref2, atol=2e-2, rtol=2e-2), "mismatch vs. JAX reference (B=300)"

    print("KERNEL_OK")
</pallas_src>

<mosaic_0001>
module attributes {stable_mosaic.version = 11 : i64} {
  func.func @_controller_kernel(%arg0: i32, %arg1: memref<8x128xf32, #tpu.memory_space<vmem>>, %arg2: memref<8x256xf32, #tpu.memory_space<vmem>>, %arg3: memref<128x1024xbf16, #tpu.memory_space<vmem>>, %arg4: memref<256x1024xbf16, #tpu.memory_space<vmem>>, %arg5: memref<1x1024xf32, #tpu.memory_space<vmem>>, %arg6: memref<1024x512xbf16, #tpu.memory_space<vmem>>, %arg7: memref<1x512xf32, #tpu.memory_space<vmem>>, %arg8: memref<512x256xbf16, #tpu.memory_space<vmem>>, %arg9: memref<1x256xf32, #tpu.memory_space<vmem>>, %arg10: memref<256x128xbf16, #tpu.memory_space<vmem>>, %arg11: memref<1x128xf32, #tpu.memory_space<vmem>>, %arg12: memref<8x128xbf16, #tpu.memory_space<vmem>>) attributes {dimension_semantics = [#tpu.dimension_semantics<parallel>], iteration_bounds = array<i64: 1>, scalar_prefetch = 0 : i64, scratch_operands = 0 : i64, tpu.core_type = #tpu.core_type<tc>, window_params = [{transform_indices = @transform_0, window_bounds = array<i64: 8, 128>}, {transform_indices = @transform_1, window_bounds = array<i64: 8, 256>}, {pipeline_mode = #tpu.pipeline_mode<synchronous>, transform_indices = @transform_2, window_bounds = array<i64: 128, 1024>}, {pipeline_mode = #tpu.pipeline_mode<synchronous>, transform_indices = @transform_3, window_bounds = array<i64: 256, 1024>}, {pipeline_mode = #tpu.pipeline_mode<synchronous>, transform_indices = @transform_4, window_bounds = array<i64: 1, 1024>}, {pipeline_mode = #tpu.pipeline_mode<synchronous>, transform_indices = @transform_5, window_bounds = array<i64: 1024, 512>}, {pipeline_mode = #tpu.pipeline_mode<synchronous>, transform_indices = @transform_6, window_bounds = array<i64: 1, 512>}, {pipeline_mode = #tpu.pipeline_mode<synchronous>, transform_indices = @transform_7, window_bounds = array<i64: 512, 256>}, {pipeline_mode = #tpu.pipeline_mode<synchronous>, transform_indices = @transform_8, window_bounds = array<i64: 1, 256>}, {pipeline_mode = #tpu.pipeline_mode<synchronous>, transform_indices = @transform_9, window_bounds = array<i64: 256, 128>}, {pipeline_mode = #tpu.pipeline_mode<synchronous>, transform_indices = @transform_10, window_bounds = array<i64: 1, 128>}, {transform_indices = @transform_11, window_bounds = array<i64: 8, 128>}]} {
    %c0 = arith.constant 0 : index
    %c0_0 = arith.constant 0 : index
    %0 = vector.load %arg1[%c0, %c0_0] : memref<8x128xf32, #tpu.memory_space<vmem>>, vector<8x128xf32>
    %1 = arith.truncf %0 : vector<8x128xf32> to vector<8x128xbf16>
    %c0_1 = arith.constant 0 : index
    %c0_2 = arith.constant 0 : index
    %2 = vector.load %arg2[%c0_1, %c0_2] : memref<8x256xf32, #tpu.memory_space<vmem>>, vector<8x256xf32>
    %3 = arith.truncf %2 : vector<8x256xf32> to vector<8x256xbf16>
    %c0_3 = arith.constant 0 : index
    %c0_4 = arith.constant 0 : index
    %4 = vector.load %arg3[%c0_3, %c0_4] : memref<128x1024xbf16, #tpu.memory_space<vmem>>, vector<128x1024xbf16>
    %cst = arith.constant dense<0.000000e+00> : vector<8x1024xf32>
    %5 = tpu.matmul %1, %4, %cst {dimension_numbers = #tpu.dot_dimension_numbers<[1], [0], [0], [1], [0, 0, 1, 1], [], []>} : vector<8x128xbf16>, vector<128x1024xbf16>, vector<8x1024xf32> -> vector<8x1024xf32>
    %c0_5 = arith.constant 0 : index
    %c0_6 = arith.constant 0 : index
    %6 = vector.load %arg4[%c0_5, %c0_6] : memref<256x1024xbf16, #tpu.memory_space<vmem>>, vector<256x1024xbf16>
    %cst_7 = arith.constant dense<0.000000e+00> : vector<8x1024xf32>
    %7 = tpu.matmul %3, %6, %cst_7 {dimension_numbers = #tpu.dot_dimension_numbers<[1], [0], [0], [1], [0, 0, 1, 1], [], []>} : vector<8x256xbf16>, vector<256x1024xbf16>, vector<8x1024xf32> -> vector<8x1024xf32>
    %8 = arith.addf %5, %7 : vector<8x1024xf32>
    %c0_8 = arith.constant 0 : index
    %c0_9 = arith.constant 0 : index
    %9 = vector.load %arg5[%c0_8, %c0_9] : memref<1x1024xf32, #tpu.memory_space<vmem>>, vector<1x1024xf32>
    %10 = vector.broadcast %9 : vector<1x1024xf32> to vector<8x1024xf32>
    %11 = arith.addf %8, %10 : vector<8x1024xf32>
    %12 = math.tanh %11 : vector<8x1024xf32>
    %13 = arith.truncf %12 : vector<8x1024xf32> to vector<8x1024xbf16>
    %c0_10 = arith.constant 0 : index
    %c0_11 = arith.constant 0 : index
    %14 = vector.load %arg6[%c0_10, %c0_11] : memref<1024x512xbf16, #tpu.memory_space<vmem>>, vector<1024x512xbf16>
    %cst_12 = arith.constant dense<0.000000e+00> : vector<8x512xf32>
    %15 = tpu.matmul %13, %14, %cst_12 {dimension_numbers = #tpu.dot_dimension_numbers<[1], [0], [0], [1], [0, 0, 1, 1], [], []>} : vector<8x1024xbf16>, vector<1024x512xbf16>, vector<8x512xf32> -> vector<8x512xf32>
    %c0_13 = arith.constant 0 : index
    %c0_14 = arith.constant 0 : index
    %16 = vector.load %arg7[%c0_13, %c0_14] : memref<1x512xf32, #tpu.memory_space<vmem>>, vector<1x512xf32>
    %17 = vector.broadcast %16 : vector<1x512xf32> to vector<8x512xf32>
    %18 = arith.addf %15, %17 : vector<8x512xf32>
    %19 = math.tanh %18 : vector<8x512xf32>
    %20 = arith.truncf %19 : vector<8x512xf32> to vector<8x512xbf16>
    %c0_15 = arith.constant 0 : index
    %c0_16 = arith.constant 0 : index
    %21 = vector.load %arg8[%c0_15, %c0_16] : memref<512x256xbf16, #tpu.memory_space<vmem>>, vector<512x256xbf16>
    %cst_17 = arith.constant dense<0.000000e+00> : vector<8x256xf32>
    %22 = tpu.matmul %20, %21, %cst_17 {dimension_numbers = #tpu.dot_dimension_numbers<[1], [0], [0], [1], [0, 0, 1, 1], [], []>} : vector<8x512xbf16>, vector<512x256xbf16>, vector<8x256xf32> -> vector<8x256xf32>
    %c0_18 = arith.constant 0 : index
    %c0_19 = arith.constant 0 : index
    %23 = vector.load %arg9[%c0_18, %c0_19] : memref<1x256xf32, #tpu.memory_space<vmem>>, vector<1x256xf32>
    %24 = vector.broadcast %23 : vector<1x256xf32> to vector<8x256xf32>
    %25 = arith.addf %22, %24 : vector<8x256xf32>
    %26 = math.tanh %25 : vector<8x256xf32>
    %27 = arith.truncf %26 : vector<8x256xf32> to vector<8x256xbf16>
    %c0_20 = arith.constant 0 : index
    %c0_21 = arith.constant 0 : index
    %28 = vector.load %arg10[%c0_20, %c0_21] : memref<256x128xbf16, #tpu.memory_space<vmem>>, vector<256x128xbf16>
    %cst_22 = arith.constant dense<0.000000e+00> : vector<8x128xf32>
    %29 = tpu.matmul %27, %28, %cst_22 {dimension_numbers = #tpu.dot_dimension_numbers<[1], [0], [0], [1], [0, 0, 1, 1], [], []>} : vector<8x256xbf16>, vector<256x128xbf16>, vector<8x128xf32> -> vector<8x128xf32>
    %c0_23 = arith.constant 0 : index
    %c0_24 = arith.constant 0 : index
    %30 = vector.load %arg11[%c0_23, %c0_24] : memref<1x128xf32, #tpu.memory_space<vmem>>, vector<1x128xf32>
    %31 = vector.broadcast %30 : vector<1x128xf32> to vector<8x128xf32>
    %32 = arith.addf %29, %31 : vector<8x128xf32>
    %33 = arith.truncf %32 : vector<8x128xf32> to vector<8x128xbf16>
    %c0_25 = arith.constant 0 : index
    %c0_26 = arith.constant 0 : index
    %34 = vector.load %arg12[%c0_25, %c0_26] : memref<8x128xbf16, #tpu.memory_space<vmem>>, vector<8x128xbf16>
    tpu.vector_store %arg12[%c0_25, %c0_26], %33 {strides = array<i32>} : memref<8x128xbf16, #tpu.memory_space<vmem>>, vector<8x128xbf16>,
    return
  }
  func.func @transform_0(%arg0: i32) -> (i32, i32) {
    %c0_i32 = arith.constant 0 : i32
    %c0_i32_0 = arith.constant 0 : i32
    return %arg0, %c0_i32 : i32, i32
  }
  func.func @transform_1(%arg0: i32) -> (i32, i32) {
    %c0_i32 = arith.constant 0 : i32
    %c0_i32_0 = arith.constant 0 : i32
    return %arg0, %c0_i32 : i32, i32
  }
  func.func @transform_2(%arg0: i32) -> (i32, i32) {
    %c0_i32 = arith.constant 0 : i32
    %c0_i32_0 = arith.constant 0 : i32
    %c0_i32_1 = arith.constant 0 : i32
    return %c0_i32, %c0_i32_0 : i32, i32
  }
  func.func @transform_3(%arg0: i32) -> (i32, i32) {
    %c0_i32 = arith.constant 0 : i32
    %c0_i32_0 = arith.constant 0 : i32
    %c0_i32_1 = arith.constant 0 : i32
    return %c0_i32, %c0_i32_0 : i32, i32
  }
  func.func @transform_4(%arg0: i32) -> (i32, i32) {
    %c0_i32 = arith.constant 0 : i32
    %c0_i32_0 = arith.constant 0 : i32
    %c0_i32_1 = arith.constant 0 : i32
    return %c0_i32, %c0_i32_0 : i32, i32
  }
  func.func @transform_5(%arg0: i32) -> (i32, i32) {
    %c0_i32 = arith.constant 0 : i32
    %c0_i32_0 = arith.constant 0 : i32
    %c0_i32_1 = arith.constant 0 : i32
    return %c0_i32, %c0_i32_0 : i32, i32
  }
  func.func @transform_6(%arg0: i32) -> (i32, i32) {
    %c0_i32 = arith.constant 0 : i32
    %c0_i32_0 = arith.constant 0 : i32
    %c0_i32_1 = arith.constant 0 : i32
    return %c0_i32, %c0_i32_0 : i32, i32
  }
  func.func @transform_7(%arg0: i32) -> (i32, i32) {
    %c0_i32 = arith.constant 0 : i32
    %c0_i32_0 = arith.constant 0 : i32
    %c0_i32_1 = arith.constant 0 : i32
    return %c0_i32, %c0_i32_0 : i32, i32
  }
  func.func @transform_8(%arg0: i32) -> (i32, i32) {
    %c0_i32 = arith.constant 0 : i32
    %c0_i32_0 = arith.constant 0 : i32
    %c0_i32_1 = arith.constant 0 : i32
    return %c0_i32, %c0_i32_0 : i32, i32
  }
  func.func @transform_9(%arg0: i32) -> (i32, i32) {
    %c0_i32 = arith.constant 0 : i32
    %c0_i32_0 = arith.constant 0 : i32
    %c0_i32_1 = arith.constant 0 : i32
    return %c0_i32, %c0_i32_0 : i32, i32
  }
  func.func @transform_10(%arg0: i32) -> (i32, i32) {
    %c0_i32 = arith.constant 0 : i32
    %c0_i32_0 = arith.constant 0 : i32
    %c0_i32_1 = arith.constant 0 : i32
    return %c0_i32, %c0_i32_0 : i32, i32
  }
  func.func @transform_11(%arg0: i32) -> (i32, i32) {
    %c0_i32 = arith.constant 0 : i32
    %c0_i32_0 = arith.constant 0 : i32
    return %arg0, %c0_i32 : i32, i32
  }
}

</mosaic_0001>

<llo_original>
// kernel: tpu_custom_call.1
$region0: #{tpu_custom_call.1}
  #allocation0 [shape = 'u32[]', space=smem, size = 0x4, offset = 0x4, fixed_abs, tag = 'smem constant byte address 0x4 - core index']
  #allocation1 [shape = 'u32[144,128]{1,0:T(1,128)}', space=vmem, size = 0x12000, scoped, tag = 'internal scratch']
  %s0 = inlined_call_operand.hbm [shape: f32[8,128], index: 0, kind: input, shape index: {}]
  %s1 = inlined_call_operand.hbm [shape: f32[8,256], index: 1, kind: input, shape index: {}]
  %s2 = inlined_call_operand.hbm [shape: bf16[128,1024], index: 2, kind: input, shape index: {}]
  %s3 = inlined_call_operand.hbm [shape: bf16[256,1024], index: 3, kind: input, shape index: {}]
  %s4 = inlined_call_operand.vmem [shape: f32[1,1024], index: 4, kind: input, shape index: {}]
  %s5 = inlined_call_operand.hbm [shape: bf16[1024,512], index: 5, kind: input, shape index: {}]
  %s6 = inlined_call_operand.vmem [shape: f32[1,512], index: 6, kind: input, shape index: {}]
  %s7 = inlined_call_operand.hbm [shape: bf16[512,256], index: 7, kind: input, shape index: {}]
  %s8 = inlined_call_operand.vmem [shape: f32[1,256], index: 8, kind: input, shape index: {}]
  %s9 = inlined_call_operand.hbm [shape: bf16[256,128], index: 9, kind: input, shape index: {}]
  %s10 = inlined_call_operand.vmem [shape: f32[1,128], index: 10, kind: input, shape index: {}]
  %s11 = inlined_call_operand.hbm [shape: bf16[8,128], index: 11, kind: output, shape index: {}]
  %s12 = sld [smem:[#allocation0]]
  $region82: #{tpu_custom_call.1} parent=0
    _
  %s14 = ssub.s32 1, %s12
  %s15 = scalar_select 0, %s14, %s12
  $region1: #{tpu_custom_call.1} parent=0
    #allocation2 [shape = 'u8[4096]{0}', space=vmem, size = 0x1000, scoped, tag = 'input window, operand 0, single buffered']
    #allocation3 [shape = 's32[1]{0}', space=sflag, size = 0x4, scoped, tag = 'scoped memory for tpu_custom_call.1']
    #allocation4 [shape = 's32[1]{0}', space=sflag, size = 0x4, scoped, tag = 'scoped memory for tpu_custom_call.1']
    #allocation5 [shape = 'u8[8192]{0}', space=vmem, size = 0x2000, scoped, tag = 'input window, operand 1, single buffered']
    #allocation6 [shape = 's32[1]{0}', space=sflag, size = 0x4, scoped, tag = 'scoped memory for tpu_custom_call.1']
    #allocation7 [shape = 'u8[262144]{0}', space=vmem, size = 0x40000, scoped, tag = 'input window, operand 2, single buffered']
    #allocation8 [shape = 'u8[524288]{0}', space=vmem, size = 0x80000, scoped, tag = 'input window, operand 3, single buffered']
    #allocation9 [shape = 's32[1]{0}', space=sflag, size = 0x4, scoped, tag = 'scoped memory for tpu_custom_call.1']
    #allocation10 [shape = 'u8[1048576]{0}', space=vmem, size = 0x100000, scoped, tag = 'input window, operand 5, single buffered']
    #allocation11 [shape = 'u8[262144]{0}', space=vmem, size = 0x40000, scoped, tag = 'input window, operand 7, single buffered']
    #allocation12 [shape = 's32[1]{0}', space=sflag, size = 0x4, scoped, tag = 'scoped memory for tpu_custom_call.1']
    #allocation13 [shape = 'u8[65536]{0}', space=vmem, size = 0x10000, scoped, tag = 'input window, operand 9, single buffered']
    #allocation14 [shape = 'u8[2048]{0}', space=vmem, size = 0x800, scoped, tag = 'output window, operand 0, single buffered']
    %16 = vsyncpa [#allocation3], 0
    %17 = vsyncpa [#allocation6], 0
    %18 = vsyncpa [#allocation9], 0
    %19 = vsyncpa [#allocation12], 0
    %20 = vsyncpa [#allocation4], 0
    // Predicated region
    $region2: #{tpu_custom_call.1} parent=1 // pred_check
      _
    $region3: #{tpu_custom_call.1} parent=1 // pred_check_branch
      %22 = sbr.rel (0) target = $region5
    $region4: #{tpu_custom_call.1} parent=1 // pred_region
      %s24 = ssub.s32 128, 128
      %25 = vsyncadd [#allocation3], %s24
      %s27 = sshll.u32 [#allocation2], 4
      %s28 = int_to_ptr.vmem [resolvable:$true] %s27
      %30 = dma.hbm_to_vmem [thread:$0]  %s0, 128, %s28, [#allocation3]
    $region5: #{tpu_custom_call.1} parent=1 // pred_fallthru
      _
    // Predicated region
    $region6: #{tpu_custom_call.1} parent=1 // pred_check
      _
    $region7: #{tpu_custom_call.1} parent=1 // pred_check_branch
      %32 = sbr.rel (0) target = $region9
    $region8: #{tpu_custom_call.1} parent=1 // pred_region
      %s34 = ssub.s32 256, 256
      %35 = vsyncadd [#allocation6], %s34
      %s37 = sshll.u32 [#allocation5], 4
      %s38 = int_to_ptr.vmem [resolvable:$true] %s37
      %40 = dma.hbm_to_vmem [thread:$0]  %s1, 256, %s38, [#allocation6]
    $region9: #{tpu_custom_call.1} parent=1 // pred_fallthru
      _
    // Predicated region
    $region10: #{tpu_custom_call.1} parent=1 // pred_check
      _
    $region11: #{tpu_custom_call.1} parent=1 // pred_check_branch
      %42 = sbr.rel (0) target = $region13
    $region12: #{tpu_custom_call.1} parent=1 // pred_region
      %s44 = ssub.s32 8192, 8192
      %45 = vsyncadd [#allocation6], %s44
      %s46 = sshll.u32 [#allocation7], 4
      %s47 = int_to_ptr.vmem [resolvable:$true] %s46
      %52 = dma.hbm_to_vmem [thread:$0]  %s2, 8192, %s47, [#allocation6], 512, 512, 32
    $region13: #{tpu_custom_call.1} parent=1 // pred_fallthru
      _
    // Predicated region
    $region14: #{tpu_custom_call.1} parent=1 // pred_check
      _
    $region15: #{tpu_custom_call.1} parent=1 // pred_check_branch
      %54 = sbr.rel (0) target = $region17
    $region16: #{tpu_custom_call.1} parent=1 // pred_region
      %s56 = ssub.s32 16384, 16384
      %57 = vsyncadd [#allocation9], %s56
      %s58 = sshll.u32 [#allocation8], 4
      %s59 = int_to_ptr.vmem [resolvable:$true] %s58
      %64 = dma.hbm_to_vmem [thread:$0]  %s3, 16384, %s59, [#allocation9], 512, 512, 32
    $region17: #{tpu_custom_call.1} parent=1 // pred_fallthru
      _
    // Predicated region
    $region18: #{tpu_custom_call.1} parent=1 // pred_check
      _
    $region19: #{tpu_custom_call.1} parent=1 // pred_check_branch
      %66 = sbr.rel (0) target = $region21
    $region20: #{tpu_custom_call.1} parent=1 // pred_region
      _
    $region21: #{tpu_custom_call.1} parent=1 // pred_fallthru
      _
    // Predicated region
    $region22: #{tpu_custom_call.1} parent=1 // pred_check
      _
    $region23: #{tpu_custom_call.1} parent=1 // pred_check_branch
      %68 = sbr.rel (0) target = $region25
    $region24: #{tpu_custom_call.1} parent=1 // pred_region
      %s70 = ssub.s32 32768, 32768
      %71 = vsyncadd [#allocation9], %s70
      %s72 = sshll.u32 [#allocation10], 4
      %s73 = int_to_ptr.vmem [resolvable:$true] %s72
      %78 = dma.hbm_to_vmem [thread:$0]  %s5, 32768, %s73, [#allocation9], 256, 256, 16
    $region25: #{tpu_custom_call.1} parent=1 // pred_fallthru
      _
    // Predicated region
    $region26: #{tpu_custom_call.1} parent=1 // pred_check
      _
    $region27: #{tpu_custom_call.1} parent=1 // pred_check_branch
      %80 = sbr.rel (0) target = $region29
    $region28: #{tpu_custom_call.1} parent=1 // pred_region
      _
    $region29: #{tpu_custom_call.1} parent=1 // pred_fallthru
      _
    // Predicated region
    $region30: #{tpu_custom_call.1} parent=1 // pred_check
      _
    $region31: #{tpu_custom_call.1} parent=1 // pred_check_branch
      %82 = sbr.rel (0) target = $region33
    $region32: #{tpu_custom_call.1} parent=1 // pred_region
      %s84 = ssub.s32 8192, 8192
      %85 = vsyncadd [#allocation12], %s84
      %s86 = sshll.u32 [#allocation11], 4
      %s87 = int_to_ptr.vmem [resolvable:$true] %s86
      %92 = dma.hbm_to_vmem [thread:$0]  %s7, 8192, %s87, [#allocation12], 128, 128, 8
    $region33: #{tpu_custom_call.1} parent=1 // pred_fallthru
      _
    // Predicated region
    $region34: #{tpu_custom_call.1} parent=1 // pred_check
      _
    $region35: #{tpu_custom_call.1} parent=1 // pred_check_branch
      %94 = sbr.rel (0) target = $region37
    $region36: #{tpu_custom_call.1} parent=1 // pred_region
      _
    $region37: #{tpu_custom_call.1} parent=1 // pred_fallthru
      _
    // Predicated region
    $region38: #{tpu_custom_call.1} parent=1 // pred_check
      _
    $region39: #{tpu_custom_call.1} parent=1 // pred_check_branch
      %96 = sbr.rel (0) target = $region41
    $region40: #{tpu_custom_call.1} parent=1 // pred_region
      %s98 = ssub.s32 2048, 2048
      %99 = vsyncadd [#allocation12], %s98
      %s100 = sshll.u32 [#allocation13], 4
      %s101 = int_to_ptr.vmem [resolvable:$true] %s100
      %106 = dma.hbm_to_vmem [thread:$0]  %s9, 2048, %s101, [#allocation12], 64, 64, 4
    $region41: #{tpu_custom_call.1} parent=1 // pred_fallthru
      _
    // Predicated region
    $region42: #{tpu_custom_call.1} parent=1 // pred_check
      _
    $region43: #{tpu_custom_call.1} parent=1 // pred_check_branch
      %108 = sbr.rel (0) target = $region45
    $region44: #{tpu_custom_call.1} parent=1 // pred_region
      _
    $region45: #{tpu_custom_call.1} parent=1 // pred_fallthru
      _
    // Predicated region
    $region46: #{tpu_custom_call.1} parent=1 // pred_check
      _
    $region47: #{tpu_custom_call.1} parent=1 // pred_check_branch
      %110 = sbr.rel (0) target = $region49
    $region48: #{tpu_custom_call.1} parent=1 // pred_region
      %111 = dma.done [#allocation3], 128
    $region49: #{tpu_custom_call.1} parent=1 // pred_fallthru
      _
    // Predicated region
    $region50: #{tpu_custom_call.1} parent=1 // pred_check
      _
    $region51: #{tpu_custom_call.1} parent=1 // pred_check_branch
      %113 = sbr.rel (0) target = $region53
    $region52: #{tpu_custom_call.1} parent=1 // pred_region
      %114 = dma.done [#allocation6], 256
    $region53: #{tpu_custom_call.1} parent=1 // pred_fallthru
      _
    // Predicated region
    $region54: #{tpu_custom_call.1} parent=1 // pred_check
      _
    $region55: #{tpu_custom_call.1} parent=1 // pred_check_branch
      %116 = sbr.rel (0) target = $region57
    $region56: #{tpu_custom_call.1} parent=1 // pred_region
      %117 = dma.done [#allocation6], 8192
    $region57: #{tpu_custom_call.1} parent=1 // pred_fallthru
      _
    // Predicated region
    $region58: #{tpu_custom_call.1} parent=1 // pred_check
      _
    $region59: #{tpu_custom_call.1} parent=1 // pred_check_branch
      %119 = sbr.rel (0) target = $region61
    $region60: #{tpu_custom_call.1} parent=1 // pred_region
      %120 = dma.done [#allocation9], 16384
    $region61: #{tpu_custom_call.1} parent=1 // pred_fallthru
      _
    // Predicated region
    $region62: #{tpu_custom_call.1} parent=1 // pred_check
      _
    $region63: #{tpu_custom_call.1} parent=1 // pred_check_branch
      %122 = sbr.rel (0) target = $region65
    $region64: #{tpu_custom_call.1} parent=1 // pred_region
      %123 = dma.done [#allocation9], 32768
    $region65: #{tpu_custom_call.1} parent=1 // pred_fallthru
      _
    // Predicated region
    $region66: #{tpu_custom_call.1} parent=1 // pred_check
      _
    $region67: #{tpu_custom_call.1} parent=1 // pred_check_branch
      %125 = sbr.rel (0) target = $region69
    $region68: #{tpu_custom_call.1} parent=1 // pred_region
      %126 = dma.done [#allocation12], 8192
    $region69: #{tpu_custom_call.1} parent=1 // pred_fallthru
      _
    // Predicated region
    $region70: #{tpu_custom_call.1} parent=1 // pred_check
      _
    $region71: #{tpu_custom_call.1} parent=1 // pred_check_branch
      %128 = sbr.rel (0) target = $region73
    $region72: #{tpu_custom_call.1} parent=1 // pred_region
      %129 = dma.done [#allocation12], 2048
    $region73: #{tpu_custom_call.1} parent=1 // pred_fallthru
      _
    %v131 = vld [vmem:[#allocation2] sm:$0xff]
    %v132 = vpack.c.bf16 %v131, %v131
    %v133 = vld [vmem:[#allocation5] sm:$0xff]
    %v134 = vld [vmem:[#allocation5 + $0x8] sm:$0xff]
    %v135 = vpack.c.bf16 %v133, %v133
    %v136 = vpack.c.bf16 %v134, %v134
    %v137 = vld [vmem:[#allocation7] sm:$0xff]
    %v138 = vld [vmem:[#allocation7 + $0x8] sm:$0xff]
    %v139 = vld [vmem:[#allocation7 + $0x10] sm:$0xff]
    %v140 = vld [vmem:[#allocation7 + $0x18] sm:$0xff]
    %v141 = vld [vmem:[#allocation7 + $0x20] sm:$0xff]
    %v142 = vld [vmem:[#allocation7 + $0x28] sm:$0xff]
    %v143 = vld [vmem:[#allocation7 + $0x30] sm:$0xff]
    %v144 = vld [vmem:[#allocation7 + $0x38] sm:$0xff]
    %v145 = vld [vmem:[#allocation7 + $0x40] sm:$0xff]
    %v146 = vld [vmem:[#allocation7 + $0x48] sm:$0xff]
    %v147 = vld [vmem:[#allocation7 + $0x50] sm:$0xff]
    %v148 = vld [vmem:[#allocation7 + $0x58] sm:$0xff]
    %v149 = vld [vmem:[#allocation7 + $0x60] sm:$0xff]
    %v150 = vld [vmem:[#allocation7 + $0x68] sm:$0xff]
    %v151 = vld [vmem:[#allocation7 + $0x70] sm:$0xff]
    %v152 = vld [vmem:[#allocation7 + $0x78] sm:$0xff]
    %v153 = vld [vmem:[#allocation7 + $0x80] sm:$0xff]
    %v154 = vld [vmem:[#allocation7 + $0x88] sm:$0xff]
    %v155 = vld [vmem:[#allocation7 + $0x90] sm:$0xff]
    %v156 = vld [vmem:[#allocation7 + $0x98] sm:$0xff]
    %v157 = vld [vmem:[#allocation7 + $0xa0] sm:$0xff]
    %v158 = vld [vmem:[#allocation7 + $0xa8] sm:$0xff]
    %v159 = vld [vmem:[#allocation7 + $0xb0] sm:$0xff]
    %v160 = vld [vmem:[#allocation7 + $0xb8] sm:$0xff]
    %v161 = vld [vmem:[#allocation7 + $0xc0] sm:$0xff]
    %v162 = vld [vmem:[#allocation7 + $0xc8] sm:$0xff]
    %v163 = vld [vmem:[#allocation7 + $0xd0] sm:$0xff]
    %v164 = vld [vmem:[#allocation7 + $0xd8] sm:$0xff]
    %v165 = vld [vmem:[#allocation7 + $0xe0] sm:$0xff]
    %v166 = vld [vmem:[#allocation7 + $0xe8] sm:$0xff]
    %v167 = vld [vmem:[#allocation7 + $0xf0] sm:$0xff]
    %v168 = vld [vmem:[#allocation7 + $0xf8] sm:$0xff]
    %v169 = vld [vmem:[#allocation7 + $0x100] sm:$0xff]
    %v170 = vld [vmem:[#allocation7 + $0x108] sm:$0xff]
    %v171 = vld [vmem:[#allocation7 + $0x110] sm:$0xff]
    %v172 = vld [vmem:[#allocation7 + $0x118] sm:$0xff]
    %v173 = vld [vmem:[#allocation7 + $0x120] sm:$0xff]
    %v174 = vld [vmem:[#allocation7 + $0x128] sm:$0xff]
    %v175 = vld [vmem:[#allocation7 + $0x130] sm:$0xff]
    %v176 = vld [vmem:[#allocation7 + $0x138] sm:$0xff]
    %v177 = vld [vmem:[#allocation7 + $0x140] sm:$0xff]
    %v178 = vld [vmem:[#allocation7 + $0x148] sm:$0xff]
    %v179 = vld [vmem:[#allocation7 + $0x150] sm:$0xff]
    %v180 = vld [vmem:[#allocation7 + $0x158] sm:$0xff]
    %v181 = vld [vmem:[#allocation7 + $0x160] sm:$0xff]
    %v182 = vld [vmem:[#allocation7 + $0x168] sm:$0xff]
    %v183 = vld [vmem:[#allocation7 + $0x170] sm:$0xff]
    %v184 = vld [vmem:[#allocation7 + $0x178] sm:$0xff]
    %v185 = vld [vmem:[#allocation7 + $0x180] sm:$0xff]
    %v186 = vld [vmem:[#allocation7 + $0x188] sm:$0xff]
    %v187 = vld [vmem:[#allocation7 + $0x190] sm:$0xff]
    %v188 = vld [vmem:[#allocation7 + $0x198] sm:$0xff]
    %v189 = vld [vmem:[#allocation7 + $0x1a0] sm:$0xff]
    %v190 = vld [vmem:[#allocation7 + $0x1a8] sm:$0xff]
    %v191 = vld [vmem:[#allocation7 + $0x1b0] sm:$0xff]
    %v192 = vld [vmem:[#allocation7 + $0x1b8] sm:$0xff]
    %v193 = vld [vmem:[#allocation7 + $0x1c0] sm:$0xff]
    %v194 = vld [vmem:[#allocation7 + $0x1c8] sm:$0xff]
    %v195 = vld [vmem:[#allocation7 + $0x1d0] sm:$0xff]
    %v196 = vld [vmem:[#allocation7 + $0x1d8] sm:$0xff]
    %v197 = vld [vmem:[#allocation7 + $0x1e0] sm:$0xff]
    %v198 = vld [vmem:[#allocation7 + $0x1e8] sm:$0xff]
    %v199 = vld [vmem:[#allocation7 + $0x1f0] sm:$0xff]
    %v200 = vld [vmem:[#allocation7 + $0x1f8] sm:$0xff]
    %v201 = vld [vmem:[#allocation8] sm:$0xff]
    %v202 = vld [vmem:[#allocation8 + $0x8] sm:$0xff]
    %v203 = vld [vmem:[#allocation8 + $0x10] sm:$0xff]
    %v204 = vld [vmem:[#allocation8 + $0x18] sm:$0xff]
    %v205 = vld [vmem:[#allocation8 + $0x20] sm:$0xff]
    %v206 = vld [vmem:[#allocation8 + $0x28] sm:$0xff]
    %v207 = vld [vmem:[#allocation8 + $0x30] sm:$0xff]
    %v208 = vld [vmem:[#allocation8 + $0x38] sm:$0xff]
    %v209 = vld [vmem:[#allocation8 + $0x40] sm:$0xff]
    %v210 = vld [vmem:[#allocation8 + $0x48] sm:$0xff]
    %v211 = vld [vmem:[#allocation8 + $0x50] sm:$0xff]
    %v212 = vld [vmem:[#allocation8 + $0x58] sm:$0xff]
    %v213 = vld [vmem:[#allocation8 + $0x60] sm:$0xff]
    %v214 = vld [vmem:[#allocation8 + $0x68] sm:$0xff]
    %v215 = vld [vmem:[#allocation8 + $0x70] sm:$0xff]
    %v216 = vld [vmem:[#allocation8 + $0x78] sm:$0xff]
    %v217 = vld [vmem:[#allocation8 + $0x80] sm:$0xff]
    %v218 = vld [vmem:[#allocation8 + $0x88] sm:$0xff]
    %v219 = vld [vmem:[#allocation8 + $0x90] sm:$0xff]
    %v220 = vld [vmem:[#allocation8 + $0x98] sm:$0xff]
    %v221 = vld [vmem:[#allocation8 + $0xa0] sm:$0xff]
    %v222 = vld [vmem:[#allocation8 + $0xa8] sm:$0xff]
    %v223 = vld [vmem:[#allocation8 + $0xb0] sm:$0xff]
    %v224 = vld [vmem:[#allocation8 + $0xb8] sm:$0xff]
    %v225 = vld [vmem:[#allocation8 + $0xc0] sm:$0xff]
    %v226 = vld [vmem:[#allocation8 + $0xc8] sm:$0xff]
    %v227 = vld [vmem:[#allocation8 + $0xd0] sm:$0xff]
    %v228 = vld [vmem:[#allocation8 + $0xd8] sm:$0xff]
    %v229 = vld [vmem:[#allocation8 + $0xe0] sm:$0xff]
    %v230 = vld [vmem:[#allocation8 + $0xe8] sm:$0xff]
    %v231 = vld [vmem:[#allocation8 + $0xf0] sm:$0xff]
    %v232 = vld [vmem:[#allocation8 + $0xf8] sm:$0xff]
    %v233 = vld [vmem:[#allocation8 + $0x100] sm:$0xff]
    %v234 = vld [vmem:[#allocation8 + $0x108] sm:$0xff]
    %v235 = vld [vmem:[#allocation8 + $0x110] sm:$0xff]
    %v236 = vld [vmem:[#allocation8 + $0x118] sm:$0xff]
    %v237 = vld [vmem:[#allocation8 + $0x120] sm:$0xff]
    %v238 = vld [vmem:[#allocation8 + $0x128] sm:$0xff]
    %v239 = vld [vmem:[#allocation8 + $0x130] sm:$0xff]
    %v240 = vld [vmem:[#allocation8 + $0x138] sm:$0xff]
    %v241 = vld [vmem:[#allocation8 + $0x140] sm:$0xff]
    %v242 = vld [vmem:[#allocation8 + $0x148] sm:$0xff]
    %v243 = vld [vmem:[#allocation8 + $0x150] sm:$0xff]
    %v244 = vld [vmem:[#allocation8 + $0x158] sm:$0xff]
    %v245 = vld [vmem:[#allocation8 + $0x160] sm:$0xff]
    %v246 = vld [vmem:[#allocation8 + $0x168] sm:$0xff]
    %v247 = vld [vmem:[#allocation8 + $0x170] sm:$0xff]
    %v248 = vld [vmem:[#allocation8 + $0x178] sm:$0xff]
    %v249 = vld [vmem:[#allocation8 + $0x180] sm:$0xff]
    %v250 = vld [vmem:[#allocation8 + $0x188] sm:$0xff]
    %v251 = vld [vmem:[#allocation8 + $0x190] sm:$0xff]
    %v252 = vld [vmem:[#allocation8 + $0x198] sm:$0xff]
    %v253 = vld [vmem:[#allocation8 + $0x1a0] sm:$0xff]
    %v254 = vld [vmem:[#allocation8 + $0x1a8] sm:$0xff]
    %v255 = vld [vmem:[#allocation8 + $0x1b0] sm:$0xff]
    %v256 = vld [vmem:[#allocation8 + $0x1b8] sm:$0xff]
    %v257 = vld [vmem:[#allocation8 + $0x1c0] sm:$0xff]
    %v258 = vld [vmem:[#allocation8 + $0x1c8] sm:$0xff]
    %v259 = vld [vmem:[#allocation8 + $0x1d0] sm:$0xff]
    %v260 = vld [vmem:[#allocation8 + $0x1d8] sm:$0xff]
    %v261 = vld [vmem:[#allocation8 + $0x1e0] sm:$0xff]
    %v262 = vld [vmem:[#allocation8 + $0x1e8] sm:$0xff]
    %v263 = vld [vmem:[#allocation8 + $0x1f0] sm:$0xff]
    %v264 = vld [vmem:[#allocation8 + $0x1f8] sm:$0xff]
    %v265 = vld [vmem:[#allocation8 + $0x200] sm:$0xff]
    %v266 = vld [vmem:[#allocation8 + $0x208] sm:$0xff]
    %v267 = vld [vmem:[#allocation8 + $0x210] sm:$0xff]
    %v268 = vld [vmem:[#allocation8 + $0x218] sm:$0xff]
    %v269 = vld [vmem:[#allocation8 + $0x220] sm:$0xff]
    %v270 = vld [vmem:[#allocation8 + $0x228] sm:$0xff]
    %v271 = vld [vmem:[#allocation8 + $0x230] sm:$0xff]
    %v272 = vld [vmem:[#allocation8 + $0x238] sm:$0xff]
    %v273 = vld [vmem:[#allocation8 + $0x240] sm:$0xff]
    %v274 = vld [vmem:[#allocation8 + $0x248] sm:$0xff]
    %v275 = vld [vmem:[#allocation8 + $0x250] sm:$0xff]
    %v276 = vld [vmem:[#allocation8 + $0x258] sm:$0xff]
    %v277 = vld [vmem:[#allocation8 + $0x260] sm:$0xff]
    %v278 = vld [vmem:[#allocation8 + $0x268] sm:$0xff]
    %v279 = vld [vmem:[#allocation8 + $0x270] sm:$0xff]
    %v280 = vld [vmem:[#allocation8 + $0x278] sm:$0xff]
    %v281 = vld [vmem:[#allocation8 + $0x280] sm:$0xff]
    %v282 = vld [vmem:[#allocation8 + $0x288] sm:$0xff]
    %v283 = vld [vmem:[#allocation8 + $0x290] sm:$0xff]
    %v284 = vld [vmem:[#allocation8 + $0x298] sm:$0xff]
    %v285 = vld [vmem:[#allocation8 + $0x2a0] sm:$0xff]
    %v286 = vld [vmem:[#allocation8 + $0x2a8] sm:$0xff]
    %v287 = vld [vmem:[#allocation8 + $0x2b0] sm:$0xff]
    %v288 = vld [vmem:[#allocation8 + $0x2b8] sm:$0xff]
    %v289 = vld [vmem:[#allocation8 + $0x2c0] sm:$0xff]
    %v290 = vld [vmem:[#allocation8 + $0x2c8] sm:$0xff]
    %v291 = vld [vmem:[#allocation8 + $0x2d0] sm:$0xff]
    %v292 = vld [vmem:[#allocation8 + $0x2d8] sm:$0xff]
    %v293 = vld [vmem:[#allocation8 + $0x2e0] sm:$0xff]
    %v294 = vld [vmem:[#allocation8 + $0x2e8] sm:$0xff]
    %v295 = vld [vmem:[#allocation8 + $0x2f0] sm:$0xff]
    %v296 = vld [vmem:[#allocation8 + $0x2f8] sm:$0xff]
    %v297 = vld [vmem:[#allocation8 + $0x300] sm:$0xff]
    %v298 = vld [vmem:[#allocation8 + $0x308] sm:$0xff]
    %v299 = vld [vmem:[#allocation8 + $0x310] sm:$0xff]
    %v300 = vld [vmem:[#allocation8 + $0x318] sm:$0xff]
    %v301 = vld [vmem:[#allocation8 + $0x320] sm:$0xff]
    %v302 = vld [vmem:[#allocation8 + $0x328] sm:$0xff]
    %v303 = vld [vmem:[#allocation8 + $0x330] sm:$0xff]
    %v304 = vld [vmem:[#allocation8 + $0x338] sm:$0xff]
    %v305 = vld [vmem:[#allocation8 + $0x340] sm:$0xff]
    %v306 = vld [vmem:[#allocation8 + $0x348] sm:$0xff]
    %v307 = vld [vmem:[#allocation8 + $0x350] sm:$0xff]
    %v308 = vld [vmem:[#allocation8 + $0x358] sm:$0xff]
    %v309 = vld [vmem:[#allocation8 + $0x360] sm:$0xff]
    %v310 = vld [vmem:[#allocation8 + $0x368] sm:$0xff]
    %v311 = vld [vmem:[#allocation8 + $0x370] sm:$0xff]
    %v312 = vld [vmem:[#allocation8 + $0x378] sm:$0xff]
    %v313 = vld [vmem:[#allocation8 + $0x380] sm:$0xff]
    %v314 = vld [vmem:[#allocation8 + $0x388] sm:$0xff]
    %v315 = vld [vmem:[#allocation8 + $0x390] sm:$0xff]
    %v316 = vld [vmem:[#allocation8 + $0x398] sm:$0xff]
    %v317 = vld [vmem:[#allocation8 + $0x3a0] sm:$0xff]
    %v318 = vld [vmem:[#allocation8 + $0x3a8] sm:$0xff]
    %v319 = vld [vmem:[#allocation8 + $0x3b0] sm:$0xff]
    %v320 = vld [vmem:[#allocation8 + $0x3b8] sm:$0xff]
    %v321 = vld [vmem:[#allocation8 + $0x3c0] sm:$0xff]
    %v322 = vld [vmem:[#allocation8 + $0x3c8] sm:$0xff]
    %v323 = vld [vmem:[#allocation8 + $0x3d0] sm:$0xff]
    %v324 = vld [vmem:[#allocation8 + $0x3d8] sm:$0xff]
    %v325 = vld [vmem:[#allocation8 + $0x3e0] sm:$0xff]
    %v326 = vld [vmem:[#allocation8 + $0x3e8] sm:$0xff]
    %v327 = vld [vmem:[#allocation8 + $0x3f0] sm:$0xff]
    %v328 = vld [vmem:[#allocation8 + $0x3f8] sm:$0xff]
    %v457 = vunpack.c.l.b16 %v201
    %v458 = vunpack.c.h.b16 %v201
    %v459 = vunpack.c.l.b16 %v202
    %v460 = vunpack.c.h.b16 %v202
    %v461 = vunpack.c.l.b16 %v203
    %v462 = vunpack.c.h.b16 %v203
    %v463 = vunpack.c.l.b16 %v204
    %v464 = vunpack.c.h.b16 %v204
    %v465 = vunpack.c.l.b16 %v205
    %v466 = vunpack.c.h.b16 %v205
    %v467 = vunpack.c.l.b16 %v206
    %v468 = vunpack.c.h.b16 %v206
    %v469 = vunpack.c.l.b16 %v207
    %v470 = vunpack.c.h.b16 %v207
    %v471 = vunpack.c.l.b16 %v208
    %v472 = vunpack.c.h.b16 %v208
    %v473 = vunpack.c.l.b16 %v209
    %v474 = vunpack.c.h.b16 %v209
    %v475 = vunpack.c.l.b16 %v210
    %v476 = vunpack.c.h.b16 %v210
    %v477 = vunpack.c.l.b16 %v211
    %v478 = vunpack.c.h.b16 %v211
    %v479 = vunpack.c.l.b16 %v212
    %v480 = vunpack.c.h.b16 %v212
    %v481 = vunpack.c.l.b16 %v213
    %v482 = vunpack.c.h.b16 %v213
    %v483 = vunpack.c.l.b16 %v214
    %v484 = vunpack.c.h.b16 %v214
    %v485 = vunpack.c.l.b16 %v215
    %v486 = vunpack.c.h.b16 %v215
    %v487 = vunpack.c.l.b16 %v216
    %v488 = vunpack.c.h.b16 %v216
    %v489 = vunpack.c.l.b16 %v217
    %v490 = vunpack.c.h.b16 %v217
    %v491 = vunpack.c.l.b16 %v218
    %v492 = vunpack.c.h.b16 %v218
    %v493 = vunpack.c.l.b16 %v219
    %v494 = vunpack.c.h.b16 %v219
    %v495 = vunpack.c.l.b16 %v220
    %v496 = vunpack.c.h.b16 %v220
    %v497 = vunpack.c.l.b16 %v221
    %v498 = vunpack.c.h.b16 %v221
    %v499 = vunpack.c.l.b16 %v222
    %v500 = vunpack.c.h.b16 %v222
    %v501 = vunpack.c.l.b16 %v223
    %v502 = vunpack.c.h.b16 %v223
    %v503 = vunpack.c.l.b16 %v224
    %v504 = vunpack.c.h.b16 %v224
    %v505 = vunpack.c.l.b16 %v225
    %v506 = vunpack.c.h.b16 %v225
    %v507 = vunpack.c.l.b16 %v226
    %v508 = vunpack.c.h.b16 %v226
    %v509 = vunpack.c.l.b16 %v227
    %v510 = vunpack.c.h.b16 %v227
    %v511 = vunpack.c.l.b16 %v228
    %v512 = vunpack.c.h.b16 %v228
    %v513 = vunpack.c.l.b16 %v229
    %v514 = vunpack.c.h.b16 %v229
    %v515 = vunpack.c.l.b16 %v230
    %v516 = vunpack.c.h.b16 %v230
    %v517 = vunpack.c.l.b16 %v231
    %v518 = vunpack.c.h.b16 %v231
    %v519 = vunpack.c.l.b16 %v232
    %v520 = vunpack.c.h.b16 %v232
    %v521 = vunpack.c.l.b16 %v233
    %v522 = vunpack.c.h.b16 %v233
    %v523 = vunpack.c.l.b16 %v234
    %v524 = vunpack.c.h.b16 %v234
    %v525 = vunpack.c.l.b16 %v235
    %v526 = vunpack.c.h.b16 %v235
    %v527 = vunpack.c.l.b16 %v236
    %v528 = vunpack.c.h.b16 %v236
    %v529 = vunpack.c.l.b16 %v237
    %v530 = vunpack.c.h.b16 %v237
    %v531 = vunpack.c.l.b16 %v238
    %v532 = vunpack.c.h.b16 %v238
    %v533 = vunpack.c.l.b16 %v239
    %v534 = vunpack.c.h.b16 %v239
    %v535 = vunpack.c.l.b16 %v240
    %v536 = vunpack.c.h.b16 %v240
    %v537 = vunpack.c.l.b16 %v241
    %v538 = vunpack.c.h.b16 %v241
    %v539 = vunpack.c.l.b16 %v242
    %v540 = vunpack.c.h.b16 %v242
    %v541 = vunpack.c.l.b16 %v243
    %v542 = vunpack.c.h.b16 %v243
    %v543 = vunpack.c.l.b16 %v244
    %v544 = vunpack.c.h.b16 %v244
    %v545 = vunpack.c.l.b16 %v245
    %v546 = vunpack.c.h.b16 %v245
    %v547 = vunpack.c.l.b16 %v246
    %v548 = vunpack.c.h.b16 %v246
    %v549 = vunpack.c.l.b16 %v247
    %v550 = vunpack.c.h.b16 %v247
    %v551 = vunpack.c.l.b16 %v248
    %v552 = vunpack.c.h.b16 %v248
    %v553 = vunpack.c.l.b16 %v249
    %v554 = vunpack.c.h.b16 %v249
    %v555 = vunpack.c.l.b16 %v250
    %v556 = vunpack.c.h.b16 %v250
    %v557 = vunpack.c.l.b16 %v251
    %v558 = vunpack.c.h.b16 %v251
    %v559 = vunpack.c.l.b16 %v252
    %v560 = vunpack.c.h.b16 %v252
    %v561 = vunpack.c.l.b16 %v253
    %v562 = vunpack.c.h.b16 %v253
    %v563 = vunpack.c.l.b16 %v254
    %v564 = vunpack.c.h.b16 %v254
    %v565 = vunpack.c.l.b16 %v255
    %v566 = vunpack.c.h.b16 %v255
    %v567 = vunpack.c.l.b16 %v256
    %v568 = vunpack.c.h.b16 %v256
    %v569 = vunpack.c.l.b16 %v257
    %v570 = vunpack.c.h.b16 %v257
    %v571 = vunpack.c.l.b16 %v258
    %v572 = vunpack.c.h.b16 %v258
    %v573 = vunpack.c.l.b16 %v259
    %v574 = vunpack.c.h.b16 %v259
    %v575 = vunpack.c.l.b16 %v260
    %v576 = vunpack.c.h.b16 %v260
    %v577 = vunpack.c.l.b16 %v261
    %v578 = vunpack.c.h.b16 %v261
    %v579 = vunpack.c.l.b16 %v262
    %v580 = vunpack.c.h.b16 %v262
    %v581 = vunpack.c.l.b16 %v263
    %v582 = vunpack.c.h.b16 %v263
    %v583 = vunpack.c.l.b16 %v264
    %v584 = vunpack.c.h.b16 %v264
    %v585 = vunpack.c.l.b16 %v265
    %v586 = vunpack.c.h.b16 %v265
    %v587 = vunpack.c.l.b16 %v266
    %v588 = vunpack.c.h.b16 %v266
    %v589 = vunpack.c.l.b16 %v267
    %v590 = vunpack.c.h.b16 %v267
    %v591 = vunpack.c.l.b16 %v268
    %v592 = vunpack.c.h.b16 %v268
    %v593 = vunpack.c.l.b16 %v269
    %v594 = vunpack.c.h.b16 %v269
    %v595 = vunpack.c.l.b16 %v270
    %v596 = vunpack.c.h.b16 %v270
    %v597 = vunpack.c.l.b16 %v271
    %v598 = vunpack.c.h.b16 %v271
    %v599 = vunpack.c.l.b16 %v272
    %v600 = vunpack.c.h.b16 %v272
    %v601 = vunpack.c.l.b16 %v273
    %v602 = vunpack.c.h.b16 %v273
    %v603 = vunpack.c.l.b16 %v274
    %v604 = vunpack.c.h.b16 %v274
    %v605 = vunpack.c.l.b16 %v275
    %v606 = vunpack.c.h.b16 %v275
    %v607 = vunpack.c.l.b16 %v276
    %v608 = vunpack.c.h.b16 %v276
    %v609 = vunpack.c.l.b16 %v277
    %v610 = vunpack.c.h.b16 %v277
    %v611 = vunpack.c.l.b16 %v278
    %v612 = vunpack.c.h.b16 %v278
    %v613 = vunpack.c.l.b16 %v279
    %v614 = vunpack.c.h.b16 %v279
    %v615 = vunpack.c.l.b16 %v280
    %v616 = vunpack.c.h.b16 %v280
    %v617 = vunpack.c.l.b16 %v281
    %v618 = vunpack.c.h.b16 %v281
    %v619 = vunpack.c.l.b16 %v282
    %v620 = vunpack.c.h.b16 %v282
    %v621 = vunpack.c.l.b16 %v283
    %v622 = vunpack.c.h.b16 %v283
    %v623 = vunpack.c.l.b16 %v284
    %v624 = vunpack.c.h.b16 %v284
    %v625 = vunpack.c.l.b16 %v285
    %v626 = vunpack.c.h.b16 %v285
    %v627 = vunpack.c.l.b16 %v286
    %v628 = vunpack.c.h.b16 %v286
    %v629 = vunpack.c.l.b16 %v287
    %v630 = vunpack.c.h.b16 %v287
    %v631 = vunpack.c.l.b16 %v288
    %v632 = vunpack.c.h.b16 %v288
    %v633 = vunpack.c.l.b16 %v289
    %v634 = vunpack.c.h.b16 %v289
    %v635 = vunpack.c.l.b16 %v290
    %v636 = vunpack.c.h.b16 %v290
    %v637 = vunpack.c.l.b16 %v291
    %v638 = vunpack.c.h.b16 %v291
    %v639 = vunpack.c.l.b16 %v292
    %v640 = vunpack.c.h.b16 %v292
    %v641 = vunpack.c.l.b16 %v293
    %v642 = vunpack.c.h.b16 %v293
    %v643 = vunpack.c.l.b16 %v294
    %v644 = vunpack.c.h.b16 %v294
    %v645 = vunpack.c.l.b16 %v295
    %v646 = vunpack.c.h.b16 %v295
    %v647 = vunpack.c.l.b16 %v296
    %v648 = vunpack.c.h.b16 %v296
    %v649 = vunpack.c.l.b16 %v297
    %v650 = vunpack.c.h.b16 %v297
    %v651 = vunpack.c.l.b16 %v298
    %v652 = vunpack.c.h.b16 %v298
    %v653 = vunpack.c.l.b16 %v299
    %v654 = vunpack.c.h.b16 %v299
    %v655 = vunpack.c.l.b16 %v300
    %v656 = vunpack.c.h.b16 %v300
    %v657 = vunpack.c.l.b16 %v301
    %v658 = vunpack.c.h.b16 %v301
    %v659 = vunpack.c.l.b16 %v302
    %v660 = vunpack.c.h.b16 %v302
    %v661 = vunpack.c.l.b16 %v303
    %v662 = vunpack.c.h.b16 %v303
    %v663 = vunpack.c.l.b16 %v304
    %v664 = vunpack.c.h.b16 %v304
    %v665 = vunpack.c.l.b16 %v305
    %v666 = vunpack.c.h.b16 %v305
    %v667 = vunpack.c.l.b16 %v306
    %v668 = vunpack.c.h.b16 %v306
    %v669 = vunpack.c.l.b16 %v307
    %v670 = vunpack.c.h.b16 %v307
    %v671 = vunpack.c.l.b16 %v308
    %v672 = vunpack.c.h.b16 %v308
    %v673 = vunpack.c.l.b16 %v309
    %v674 = vunpack.c.h.b16 %v309
    %v675 = vunpack.c.l.b16 %v310
    %v676 = vunpack.c.h.b16 %v310
    %v677 = vunpack.c.l.b16 %v311
    %v678 = vunpack.c.h.b16 %v311
    %v679 = vunpack.c.l.b16 %v312
    %v680 = vunpack.c.h.b16 %v312
    %v681 = vunpack.c.l.b16 %v313
    %v682 = vunpack.c.h.b16 %v313
    %v683 = vunpack.c.l.b16 %v314
    %v684 = vunpack.c.h.b16 %v314
    %v685 = vunpack.c.l.b16 %v315
    %v686 = vunpack.c.h.b16 %v315
    %v687 = vunpack.c.l.b16 %v316
    %v688 = vunpack.c.h.b16 %v316
    %v689 = vunpack.c.l.b16 %v317
    %v690 = vunpack.c.h.b16 %v317
    %v691 = vunpack.c.l.b16 %v318
    %v692 = vunpack.c.h.b16 %v318
    %v693 = vunpack.c.l.b16 %v319
    %v694 = vunpack.c.h.b16 %v319
    %v695 = vunpack.c.l.b16 %v320
    %v696 = vunpack.c.h.b16 %v320
    %v697 = vunpack.c.l.b16 %v321
    %v698 = vunpack.c.h.b16 %v321
    %v699 = vunpack.c.l.b16 %v322
    %v700 = vunpack.c.h.b16 %v322
    %v701 = vunpack.c.l.b16 %v323
    %v702 = vunpack.c.h.b16 %v323
    %v703 = vunpack.c.l.b16 %v324
    %v704 = vunpack.c.h.b16 %v324
    %v705 = vunpack.c.l.b16 %v325
    %v706 = vunpack.c.h.b16 %v325
    %v707 = vunpack.c.l.b16 %v326
    %v708 = vunpack.c.h.b16 %v326
    %v709 = vunpack.c.l.b16 %v327
    %v710 = vunpack.c.h.b16 %v327
    %v711 = vunpack.c.l.b16 %v328
    %v712 = vunpack.c.h.b16 %v328
    %v713 = vpack.c.b16 %v465, %v457
    %v714 = vpack.c.b16 %v466, %v458
    %v715 = vpack.c.b16 %v467, %v459
    %v716 = vpack.c.b16 %v468, %v460
    %v717 = vpack.c.b16 %v469, %v461
    %v718 = vpack.c.b16 %v470, %v462
    %v719 = vpack.c.b16 %v471, %v463
    %v720 = vpack.c.b16 %v472, %v464
    %v721 = vpack.c.b16 %v481, %v473
    %v722 = vpack.c.b16 %v482, %v474
    %v723 = vpack.c.b16 %v483, %v475
    %v724 = vpack.c.b16 %v484, %v476
    %v725 = vpack.c.b16 %v485, %v477
    %v726 = vpack.c.b16 %v486, %v478
    %v727 = vpack.c.b16 %v487, %v479
    %v728 = vpack.c.b16 %v488, %v480
    %v729 = vpack.c.b16 %v497, %v489
    %v730 = vpack.c.b16 %v498, %v490
    %v731 = vpack.c.b16 %v499, %v491
    %v732 = vpack.c.b16 %v500, %v492
    %v733 = vpack.c.b16 %v501, %v493
    %v734 = vpack.c.b16 %v502, %v494
    %v735 = vpack.c.b16 %v503, %v495
    %v736 = vpack.c.b16 %v504, %v496
    %v737 = vpack.c.b16 %v513, %v505
    %v738 = vpack.c.b16 %v514, %v506
    %v739 = vpack.c.b16 %v515, %v507
    %v740 = vpack.c.b16 %v516, %v508
    %v741 = vpack.c.b16 %v517, %v509
    %v742 = vpack.c.b16 %v518, %v510
    %v743 = vpack.c.b16 %v519, %v511
    %v744 = vpack.c.b16 %v520, %v512
    %v745 = vpack.c.b16 %v529, %v521
    %v746 = vpack.c.b16 %v530, %v522
    %v747 = vpack.c.b16 %v531, %v523
    %v748 = vpack.c.b16 %v532, %v524
    %v749 = vpack.c.b16 %v533, %v525
    %v750 = vpack.c.b16 %v534, %v526
    %v751 = vpack.c.b16 %v535, %v527
    %v752 = vpack.c.b16 %v536, %v528
    %v753 = vpack.c.b16 %v545, %v537
    %v754 = vpack.c.b16 %v546, %v538
    %v755 = vpack.c.b16 %v547, %v539
    %v756 = vpack.c.b16 %v548, %v540
    %v757 = vpack.c.b16 %v549, %v541
    %v758 = vpack.c.b16 %v550, %v542
    %v759 = vpack.c.b16 %v551, %v543
    %v760 = vpack.c.b16 %v552, %v544
    %v761 = vpack.c.b16 %v561, %v553
    %v762 = vpack.c.b16 %v562, %v554
    %v763 = vpack.c.b16 %v563, %v555
    %v764 = vpack.c.b16 %v564, %v556
    %v765 = vpack.c.b16 %v565, %v557
    %v766 = vpack.c.b16 %v566, %v558
    %v767 = vpack.c.b16 %v567, %v559
    %v768 = vpack.c.b16 %v568, %v560
    %v769 = vpack.c.b16 %v577, %v569
    %v770 = vpack.c.b16 %v578, %v570
    %v771 = vpack.c.b16 %v579, %v571
    %v772 = vpack.c.b16 %v580, %v572
    %v773 = vpack.c.b16 %v581, %v573
    %v774 = vpack.c.b16 %v582, %v574
    %v775 = vpack.c.b16 %v583, %v575
    %v776 = vpack.c.b16 %v584, %v576
    %v777 = vpack.c.b16 %v593, %v585
    %v778 = vpack.c.b16 %v594, %v586
    %v779 = vpack.c.b16 %v595, %v587
    %v780 = vpack.c.b16 %v596, %v588
    %v781 = vpack.c.b16 %v597, %v589
    %v782 = vpack.c.b16 %v598, %v590
    %v783 = vpack.c.b16 %v599, %v591
    %v784 = vpack.c.b16 %v600, %v592
    %v785 = vpack.c.b16 %v609, %v601
    %v786 = vpack.c.b16 %v610, %v602
    %v787 = vpack.c.b16 %v611, %v603
    %v788 = vpack.c.b16 %v612, %v604
    %v789 = vpack.c.b16 %v613, %v605
    %v790 = vpack.c.b16 %v614, %v606
    %v791 = vpack.c.b16 %v615, %v607
    %v792 = vpack.c.b16 %v616, %v608
    %v793 = vpack.c.b16 %v625, %v617
    %v794 = vpack.c.b16 %v626, %v618
    %v795 = vpack.c.b16 %v627, %v619
    %v796 = vpack.c.b16 %v628, %v620
    %v797 = vpack.c.b16 %v629, %v621
    %v798 = vpack.c.b16 %v630, %v622
    %v799 = vpack.c.b16 %v631, %v623
    %v800 = vpack.c.b16 %v632, %v624
    %v801 = vpack.c.b16 %v641, %v633
    %v802 = vpack.c.b16 %v642, %v634
    %v803 = vpack.c.b16 %v643, %v635
    %v804 = vpack.c.b16 %v644, %v636
    %v805 = vpack.c.b16 %v645, %v637
    %v806 = vpack.c.b16 %v646, %v638
    %v807 = vpack.c.b16 %v647, %v639
    %v808 = vpack.c.b16 %v648, %v640
    %v809 = vpack.c.b16 %v657, %v649
    %v810 = vpack.c.b16 %v658, %v650
    %v811 = vpack.c.b16 %v659, %v651
    %v812 = vpack.c.b16 %v660, %v652
    %v813 = vpack.c.b16 %v661, %v653
    %v814 = vpack.c.b16 %v662, %v654
    %v815 = vpack.c.b16 %v663, %v655
    %v816 = vpack.c.b16 %v664, %v656
    %v817 = vpack.c.b16 %v673, %v665
    %v818 = vpack.c.b16 %v674, %v666
    %v819 = vpack.c.b16 %v675, %v667
    %v820 = vpack.c.b16 %v676, %v668
    %v821 = vpack.c.b16 %v677, %v669
    %v822 = vpack.c.b16 %v678, %v670
    %v823 = vpack.c.b16 %v679, %v671
    %v824 = vpack.c.b16 %v680, %v672
    %v825 = vpack.c.b16 %v689, %v681
    %v826 = vpack.c.b16 %v690, %v682
    %v827 = vpack.c.b16 %v691, %v683
    %v828 = vpack.c.b16 %v692, %v684
    %v829 = vpack.c.b16 %v693, %v685
    %v830 = vpack.c.b16 %v694, %v686
    %v831 = vpack.c.b16 %v695, %v687
    %v832 = vpack.c.b16 %v696, %v688
    %v833 = vpack.c.b16 %v705, %v697
    %v834 = vpack.c.b16 %v706, %v698
    %v835 = vpack.c.b16 %v707, %v699
    %v836 = vpack.c.b16 %v708, %v700
    %v837 = vpack.c.b16 %v709, %v701
    %v838 = vpack.c.b16 %v710, %v702
    %v839 = vpack.c.b16 %v711, %v703
    %v840 = vpack.c.b16 %v712, %v704
    %969 = vmatprep.subr.bf16.mxu0 %v714
    %970 = vmatpush1.bf16.msra.mxu0 %v713
    %971 = vmatprep.subr.bf16.mxu0 %v722
    %972 = vmatpush1.bf16.msra.mxu0 %v721
    %973 = vmatprep.subr.bf16.mxu0 %v730
    %974 = vmatpush1.bf16.msra.mxu0 %v729
    %975 = vmatprep.subr.bf16.mxu0 %v738
    %976 = vmatpush1.bf16.msra.mxu0 %v737
    %977 = vmatprep.subr.bf16.mxu0 %v746
    %978 = vmatpush1.bf16.msra.mxu0 %v745
    %979 = vmatprep.subr.bf16.mxu0 %v754
    %980 = vmatpush1.bf16.msra.mxu0 %v753
    %981 = vmatprep.subr.bf16.mxu0 %v762
    %982 = vmatpush1.bf16.msra.mxu0 %v761
    %983 = vmatprep.subr.bf16.mxu0 %v770
    %984 = vmatpush1.bf16.msra.mxu0 %v769
    %985 = vmatprep.subr.bf16.mxu0 %v778
    %986 = vmatpush1.bf16.msra.mxu0 %v777
    %987 = vmatprep.subr.bf16.mxu0 %v786
    %988 = vmatpush1.bf16.msra.mxu0 %v785
    %989 = vmatprep.subr.bf16.mxu0 %v794
    %990 = vmatpush1.bf16.msra.mxu0 %v793
    %991 = vmatprep.subr.bf16.mxu0 %v802
    %992 = vmatpush1.bf16.msra.mxu0 %v801
    %993 = vmatprep.subr.bf16.mxu0 %v810
    %994 = vmatpush1.bf16.msra.mxu0 %v809
    %995 = vmatprep.subr.bf16.mxu0 %v818
    %996 = vmatpush1.bf16.msra.mxu0 %v817
    %997 = vmatprep.subr.bf16.mxu0 %v826
    %998 = vmatpush1.bf16.msra.mxu0 %v825
    %999 = vmatprep.subr.bf16.mxu0 %v834
    %1000 = vmatpush1.bf16.msra.mxu0 %v833
    %1001 = vmatprep.mubr.bf16.mxu0 %v136
    %1002 = vmatmul.mubr.bf16.gmra.mrb[0].mxu0 %v135
    %v1003 = vpop.f32.mrb[0].mxu0
    %v1004 = vadd.f32 0.0, %v1003
    %v1005 = vpop.f32.mrb[0].mxu0
    %v1006 = vadd.f32 0.0, %v1005
    %v1007 = vpop.f32.mrb[0].mxu0
    %v1008 = vpop.f32.mrb[0].mxu0
    %1009 = vdwg.mxu0
    %1010 = vmatprep.subr.bf16.mxu0 %v716
    %1011 = vmatpush1.bf16.msra.mxu0 %v715
    %1012 = vmatprep.subr.bf16.mxu0 %v724
    %1013 = vmatpush1.bf16.msra.mxu0 %v723
    %1014 = vmatprep.subr.bf16.mxu0 %v732
    %1015 = vmatpush1.bf16.msra.mxu0 %v731
    %1016 = vmatprep.subr.bf16.mxu0 %v740
    %1017 = vmatpush1.bf16.msra.mxu0 %v739
    %1018 = vmatprep.subr.bf16.mxu0 %v748
    %1019 = vmatpush1.bf16.msra.mxu0 %v747
    %1020 = vmatprep.subr.bf16.mxu0 %v756
    %1021 = vmatpush1.bf16.msra.mxu0 %v755
    %1022 = vmatprep.subr.bf16.mxu0 %v764
    %1023 = vmatpush1.bf16.msra.mxu0 %v763
    %1024 = vmatprep.subr.bf16.mxu0 %v772
    %1025 = vmatpush1.bf16.msra.mxu0 %v771
    %1026 = vmatprep.subr.bf16.mxu0 %v780
    %1027 = vmatpush1.bf16.msra.mxu0 %v779
    %1028 = vmatprep.subr.bf16.mxu0 %v788
    %1029 = vmatpush1.bf16.msra.mxu0 %v787
    %1030 = vmatprep.subr.bf16.mxu0 %v796
    %1031 = vmatpush1.bf16.msra.mxu0 %v795
    %1032 = vmatprep.subr.bf16.mxu0 %v804
    %1033 = vmatpush1.bf16.msra.mxu0 %v803
    %1034 = vmatprep.subr.bf16.mxu0 %v812
    %1035 = vmatpush1.bf16.msra.mxu0 %v811
    %1036 = vmatprep.subr.bf16.mxu0 %v820
    %1037 = vmatpush1.bf16.msra.mxu0 %v819
    %1038 = vmatprep.subr.bf16.mxu0 %v828
    %1039 = vmatpush1.bf16.msra.mxu0 %v827
    %1040 = vmatprep.subr.bf16.mxu0 %v836
    %1041 = vmatpush1.bf16.msra.mxu0 %v835
    %1042 = vmatprep.mubr.bf16.mxu0 %v136
    %1043 = vmatmul.mubr.bf16.gmra.mrb[0].mxu0 %v135
    %v1044 = vpop.f32.mrb[0].mxu0
    %v1045 = vadd.f32 0.0, %v1044
    %v1046 = vpop.f32.mrb[0].mxu0
    %v1047 = vadd.f32 0.0, %v1046
    %v1048 = vpop.f32.mrb[0].mxu0
    %v1049 = vpop.f32.mrb[0].mxu0
    %1050 = vdwg.mxu0
    %1051 = vmatprep.subr.bf16.mxu0 %v718
    %1052 = vmatpush1.bf16.msra.mxu0 %v717
    %1053 = vmatprep.subr.bf16.mxu0 %v726
    %1054 = vmatpush1.bf16.msra.mxu0 %v725
    %1055 = vmatprep.subr.bf16.mxu0 %v734
    %1056 = vmatpush1.bf16.msra.mxu0 %v733
    %1057 = vmatprep.subr.bf16.mxu0 %v742
    %1058 = vmatpush1.bf16.msra.mxu0 %v741
    %1059 = vmatprep.subr.bf16.mxu0 %v750
    %1060 = vmatpush1.bf16.msra.mxu0 %v749
    %1061 = vmatprep.subr.bf16.mxu0 %v758
    %1062 = vmatpush1.bf16.msra.mxu0 %v757
    %1063 = vmatprep.subr.bf16.mxu0 %v766
    %1064 = vmatpush1.bf16.msra.mxu0 %v765
    %1065 = vmatprep.subr.bf16.mxu0 %v774
    %1066 = vmatpush1.bf16.msra.mxu0 %v773
    %1067 = vmatprep.subr.bf16.mxu0 %v782
    %1068 = vmatpush1.bf16.msra.mxu0 %v781
    %1069 = vmatprep.subr.bf16.mxu0 %v790
    %1070 = vmatpush1.bf16.msra.mxu0 %v789
    %1071 = vmatprep.subr.bf16.mxu0 %v798
    %1072 = vmatpush1.bf16.msra.mxu0 %v797
    %1073 = vmatprep.subr.bf16.mxu0 %v806
    %1074 = vmatpush1.bf16.msra.mxu0 %v805
    %1075 = vmatprep.subr.bf16.mxu0 %v814
    %1076 = vmatpush1.bf16.msra.mxu0 %v813
    %1077 = vmatprep.subr.bf16.mxu0 %v822
    %1078 = vmatpush1.bf16.msra.mxu0 %v821
    %1079 = vmatprep.subr.bf16.mxu0 %v830
    %1080 = vmatpush1.bf16.msra.mxu0 %v829
    %1081 = vmatprep.subr.bf16.mxu0 %v838
    %1082 = vmatpush1.bf16.msra.mxu0 %v837
    %1083 = vmatprep.mubr.bf16.mxu0 %v136
    %1084 = vmatmul.mubr.bf16.gmra.mrb[0].mxu0 %v135
    %v1085 = vpop.f32.mrb[0].mxu0
    %v1086 = vadd.f32 0.0, %v1085
    %v1087 = vpop.f32.mrb[0].mxu0
    %v1088 = vadd.f32 0.0, %v1087
    %v1089 = vpop.f32.mrb[0].mxu0
    %v1090 = vpop.f32.mrb[0].mxu0
    %1091 = vdwg.mxu0
    %1092 = vmatprep.subr.bf16.mxu0 %v720
    %1093 = vmatpush1.bf16.msra.mxu0 %v719
    %1094 = vmatprep.subr.bf16.mxu0 %v728
    %1095 = vmatpush1.bf16.msra.mxu0 %v727
    %1096 = vmatprep.subr.bf16.mxu0 %v736
    %1097 = vmatpush1.bf16.msra.mxu0 %v735
    %1098 = vmatprep.subr.bf16.mxu0 %v744
    %1099 = vmatpush1.bf16.msra.mxu0 %v743
    %1100 = vmatprep.subr.bf16.mxu0 %v752
    %1101 = vmatpush1.bf16.msra.mxu0 %v751
    %1102 = vmatprep.subr.bf16.mxu0 %v760
    %1103 = vmatpush1.bf16.msra.mxu0 %v759
    %1104 = vmatprep.subr.bf16.mxu0 %v768
    %1105 = vmatpush1.bf16.msra.mxu0 %v767
    %1106 = vmatprep.subr.bf16.mxu0 %v776
    %1107 = vmatpush1.bf16.msra.mxu0 %v775
    %1108 = vmatprep.subr.bf16.mxu0 %v784
    %1109 = vmatpush1.bf16.msra.mxu0 %v783
    %1110 = vmatprep.subr.bf16.mxu0 %v792
    %1111 = vmatpush1.bf16.msra.mxu0 %v791
    %1112 = vmatprep.subr.bf16.mxu0 %v800
    %1113 = vmatpush1.bf16.msra.mxu0 %v799
    %1114 = vmatprep.subr.bf16.mxu0 %v808
    %1115 = vmatpush1.bf16.msra.mxu0 %v807
    %1116 = vmatprep.subr.bf16.mxu0 %v816
    %1117 = vmatpush1.bf16.msra.mxu0 %v815
    %1118 = vmatprep.subr.bf16.mxu0 %v824
    %1119 = vmatpush1.bf16.msra.mxu0 %v823
    %1120 = vmatprep.subr.bf16.mxu0 %v832
    %1121 = vmatpush1.bf16.msra.mxu0 %v831
    %1122 = vmatprep.subr.bf16.mxu0 %v840
    %1123 = vmatpush1.bf16.msra.mxu0 %v839
    %1124 = vmatprep.mubr.bf16.mxu0 %v136
    %1125 = vmatmul.mubr.bf16.gmra.mrb[0].mxu0 %v135
    %v1126 = vpop.f32.mrb[0].mxu0
    %v1127 = vadd.f32 0.0, %v1126
    %v1128 = vpop.f32.mrb[0].mxu0
    %v1129 = vadd.f32 0.0, %v1128
    %v1130 = vpop.f32.mrb[0].mxu0
    %v1131 = vpop.f32.mrb[0].mxu0
    %1132 = vdwg.mxu0
    %v1197 = vunpack.c.l.b16 %v137
    %v1198 = vunpack.c.h.b16 %v137
    %v1199 = vunpack.c.l.b16 %v138
    %v1200 = vunpack.c.h.b16 %v138
    %v1201 = vunpack.c.l.b16 %v139
    %v1202 = vunpack.c.h.b16 %v139
    %v1203 = vunpack.c.l.b16 %v140
    %v1204 = vunpack.c.h.b16 %v140
    %v1205 = vunpack.c.l.b16 %v141
    %v1206 = vunpack.c.h.b16 %v141
    %v1207 = vunpack.c.l.b16 %v142
    %v1208 = vunpack.c.h.b16 %v142
    %v1209 = vunpack.c.l.b16 %v143
    %v1210 = vunpack.c.h.b16 %v143
    %v1211 = vunpack.c.l.b16 %v144
    %v1212 = vunpack.c.h.b16 %v144
    %v1213 = vunpack.c.l.b16 %v145
    %v1214 = vunpack.c.h.b16 %v145
    %v1215 = vunpack.c.l.b16 %v146
    %v1216 = vunpack.c.h.b16 %v146
    %v1217 = vunpack.c.l.b16 %v147
    %v1218 = vunpack.c.h.b16 %v147
    %v1219 = vunpack.c.l.b16 %v148
    %v1220 = vunpack.c.h.b16 %v148
    %v1221 = vunpack.c.l.b16 %v149
    %v1222 = vunpack.c.h.b16 %v149
    %v1223 = vunpack.c.l.b16 %v150
    %v1224 = vunpack.c.h.b16 %v150
    %v1225 = vunpack.c.l.b16 %v151
    %v1226 = vunpack.c.h.b16 %v151
    %v1227 = vunpack.c.l.b16 %v152
    %v1228 = vunpack.c.h.b16 %v152
    %v1229 = vunpack.c.l.b16 %v153
    %v1230 = vunpack.c.h.b16 %v153
    %v1231 = vunpack.c.l.b16 %v154
    %v1232 = vunpack.c.h.b16 %v154
    %v1233 = vunpack.c.l.b16 %v155
    %v1234 = vunpack.c.h.b16 %v155
    %v1235 = vunpack.c.l.b16 %v156
    %v1236 = vunpack.c.h.b16 %v156
    %v1237 = vunpack.c.l.b16 %v157
    %v1238 = vunpack.c.h.b16 %v157
    %v1239 = vunpack.c.l.b16 %v158
    %v1240 = vunpack.c.h.b16 %v158
    %v1241 = vunpack.c.l.b16 %v159
    %v1242 = vunpack.c.h.b16 %v159
    %v1243 = vunpack.c.l.b16 %v160
    %v1244 = vunpack.c.h.b16 %v160
    %v1245 = vunpack.c.l.b16 %v161
    %v1246 = vunpack.c.h.b16 %v161
    %v1247 = vunpack.c.l.b16 %v162
    %v1248 = vunpack.c.h.b16 %v162
    %v1249 = vunpack.c.l.b16 %v163
    %v1250 = vunpack.c.h.b16 %v163
    %v1251 = vunpack.c.l.b16 %v164
    %v1252 = vunpack.c.h.b16 %v164
    %v1253 = vunpack.c.l.b16 %v165
    %v1254 = vunpack.c.h.b16 %v165
    %v1255 = vunpack.c.l.b16 %v166
    %v1256 = vunpack.c.h.b16 %v166
    %v1257 = vunpack.c.l.b16 %v167
    %v1258 = vunpack.c.h.b16 %v167
    %v1259 = vunpack.c.l.b16 %v168
    %v1260 = vunpack.c.h.b16 %v168
    %v1261 = vunpack.c.l.b16 %v169
    %v1262 = vunpack.c.h.b16 %v169
    %v1263 = vunpack.c.l.b16 %v170
    %v1264 = vunpack.c.h.b16 %v170
    %v1265 = vunpack.c.l.b16 %v171
    %v1266 = vunpack.c.h.b16 %v171
    %v1267 = vunpack.c.l.b16 %v172
    %v1268 = vunpack.c.h.b16 %v172
    %v1269 = vunpack.c.l.b16 %v173
    %v1270 = vunpack.c.h.b16 %v173
    %v1271 = vunpack.c.l.b16 %v174
    %v1272 = vunpack.c.h.b16 %v174
    %v1273 = vunpack.c.l.b16 %v175
    %v1274 = vunpack.c.h.b16 %v175
    %v1275 = vunpack.c.l.b16 %v176
    %v1276 = vunpack.c.h.b16 %v176
    %v1277 = vunpack.c.l.b16 %v177
    %v1278 = vunpack.c.h.b16 %v177
    %v1279 = vunpack.c.l.b16 %v178
    %v1280 = vunpack.c.h.b16 %v178
    %v1281 = vunpack.c.l.b16 %v179
    %v1282 = vunpack.c.h.b16 %v179
    %v1283 = vunpack.c.l.b16 %v180
    %v1284 = vunpack.c.h.b16 %v180
    %v1285 = vunpack.c.l.b16 %v181
    %v1286 = vunpack.c.h.b16 %v181
    %v1287 = vunpack.c.l.b16 %v182
    %v1288 = vunpack.c.h.b16 %v182
    %v1289 = vunpack.c.l.b16 %v183
    %v1290 = vunpack.c.h.b16 %v183
    %v1291 = vunpack.c.l.b16 %v184
    %v1292 = vunpack.c.h.b16 %v184
    %v1293 = vunpack.c.l.b16 %v185
    %v1294 = vunpack.c.h.b16 %v185
    %v1295 = vunpack.c.l.b16 %v186
    %v1296 = vunpack.c.h.b16 %v186
    %v1297 = vunpack.c.l.b16 %v187
    %v1298 = vunpack.c.h.b16 %v187
    %v1299 = vunpack.c.l.b16 %v188
    %v1300 = vunpack.c.h.b16 %v188
    %v1301 = vunpack.c.l.b16 %v189
    %v1302 = vunpack.c.h.b16 %v189
    %v1303 = vunpack.c.l.b16 %v190
    %v1304 = vunpack.c.h.b16 %v190
    %v1305 = vunpack.c.l.b16 %v191
    %v1306 = vunpack.c.h.b16 %v191
    %v1307 = vunpack.c.l.b16 %v192
    %v1308 = vunpack.c.h.b16 %v192
    %v1309 = vunpack.c.l.b16 %v193
    %v1310 = vunpack.c.h.b16 %v193
    %v1311 = vunpack.c.l.b16 %v194
    %v1312 = vunpack.c.h.b16 %v194
    %v1313 = vunpack.c.l.b16 %v195
    %v1314 = vunpack.c.h.b16 %v195
    %v1315 = vunpack.c.l.b16 %v196
    %v1316 = vunpack.c.h.b16 %v196
    %v1317 = vunpack.c.l.b16 %v197
    %v1318 = vunpack.c.h.b16 %v197
    %v1319 = vunpack.c.l.b16 %v198
    %v1320 = vunpack.c.h.b16 %v198
    %v1321 = vunpack.c.l.b16 %v199
    %v1322 = vunpack.c.h.b16 %v199
    %v1323 = vunpack.c.l.b16 %v200
    %v1324 = vunpack.c.h.b16 %v200
    %v1325 = vpack.c.b16 %v1205, %v1197
    %v1326 = vpack.c.b16 %v1206, %v1198
    %v1327 = vpack.c.b16 %v1207, %v1199
    %v1328 = vpack.c.b16 %v1208, %v1200
    %v1329 = vpack.c.b16 %v1209, %v1201
    %v1330 = vpack.c.b16 %v1210, %v1202
    %v1331 = vpack.c.b16 %v1211, %v1203
    %v1332 = vpack.c.b16 %v1212, %v1204
    %v1333 = vpack.c.b16 %v1221, %v1213
    %v1334 = vpack.c.b16 %v1222, %v1214
    %v1335 = vpack.c.b16 %v1223, %v1215
    %v1336 = vpack.c.b16 %v1224, %v1216
    %v1337 = vpack.c.b16 %v1225, %v1217
    %v1338 = vpack.c.b16 %v1226, %v1218
    %v1339 = vpack.c.b16 %v1227, %v1219
    %v1340 = vpack.c.b16 %v1228, %v1220
    %v1341 = vpack.c.b16 %v1237, %v1229
    %v1342 = vpack.c.b16 %v1238, %v1230
    %v1343 = vpack.c.b16 %v1239, %v1231
    %v1344 = vpack.c.b16 %v1240, %v1232
    %v1345 = vpack.c.b16 %v1241, %v1233
    %v1346 = vpack.c.b16 %v1242, %v1234
    %v1347 = vpack.c.b16 %v1243, %v1235
    %v1348 = vpack.c.b16 %v1244, %v1236
    %v1349 = vpack.c.b16 %v1253, %v1245
    %v1350 = vpack.c.b16 %v1254, %v1246
    %v1351 = vpack.c.b16 %v1255, %v1247
    %v1352 = vpack.c.b16 %v1256, %v1248
    %v1353 = vpack.c.b16 %v1257, %v1249
    %v1354 = vpack.c.b16 %v1258, %v1250
    %v1355 = vpack.c.b16 %v1259, %v1251
    %v1356 = vpack.c.b16 %v1260, %v1252
    %v1357 = vpack.c.b16 %v1269, %v1261
    %v1358 = vpack.c.b16 %v1270, %v1262
    %v1359 = vpack.c.b16 %v1271, %v1263
    %v1360 = vpack.c.b16 %v1272, %v1264
    %v1361 = vpack.c.b16 %v1273, %v1265
    %v1362 = vpack.c.b16 %v1274, %v1266
    %v1363 = vpack.c.b16 %v1275, %v1267
    %v1364 = vpack.c.b16 %v1276, %v1268
    %v1365 = vpack.c.b16 %v1285, %v1277
    %v1366 = vpack.c.b16 %v1286, %v1278
    %v1367 = vpack.c.b16 %v1287, %v1279
    %v1368 = vpack.c.b16 %v1288, %v1280
    %v1369 = vpack.c.b16 %v1289, %v1281
    %v1370 = vpack.c.b16 %v1290, %v1282
    %v1371 = vpack.c.b16 %v1291, %v1283
    %v1372 = vpack.c.b16 %v1292, %v1284
    %v1373 = vpack.c.b16 %v1301, %v1293
    %v1374 = vpack.c.b16 %v1302, %v1294
    %v1375 = vpack.c.b16 %v1303, %v1295
    %v1376 = vpack.c.b16 %v1304, %v1296
    %v1377 = vpack.c.b16 %v1305, %v1297
    %v1378 = vpack.c.b16 %v1306, %v1298
    %v1379 = vpack.c.b16 %v1307, %v1299
    %v1380 = vpack.c.b16 %v1308, %v1300
    %v1381 = vpack.c.b16 %v1317, %v1309
    %v1382 = vpack.c.b16 %v1318, %v1310
    %v1383 = vpack.c.b16 %v1319, %v1311
    %v1384 = vpack.c.b16 %v1320, %v1312
    %v1385 = vpack.c.b16 %v1321, %v1313
    %v1386 = vpack.c.b16 %v1322, %v1314
    %v1387 = vpack.c.b16 %v1323, %v1315
    %v1388 = vpack.c.b16 %v1324, %v1316
    %1453 = vmatprep.subr.bf16.mxu0 %v1326
    %1454 = vmatpush1.bf16.msra.mxu0 %v1325
    %1455 = vmatprep.subr.bf16.mxu0 %v1334
    %1456 = vmatpush1.bf16.msra.mxu0 %v1333
    %1457 = vmatprep.subr.bf16.mxu0 %v1342
    %1458 = vmatpush1.bf16.msra.mxu0 %v1341
    %1459 = vmatprep.subr.bf16.mxu0 %v1350
    %1460 = vmatpush1.bf16.msra.mxu0 %v1349
    %1461 = vmatprep.subr.bf16.mxu0 %v1358
    %1462 = vmatpush1.bf16.msra.mxu0 %v1357
    %1463 = vmatprep.subr.bf16.mxu0 %v1366
    %1464 = vmatpush1.bf16.msra.mxu0 %v1365
    %1465 = vmatprep.subr.bf16.mxu0 %v1374
    %1466 = vmatpush1.bf16.msra.mxu0 %v1373
    %1467 = vmatprep.subr.bf16.mxu0 %v1382
    %1468 = vmatpush1.bf16.msra.mxu0 %v1381
    %1469 = vmatprep.subr.bf16.mxu0 0
    %1470 = vmatpush1.bf16.msra.mxu0 0
    %1471 = vmatprep.subr.bf16.mxu0 0
    %1472 = vmatpush1.bf16.msra.mxu0 0
    %1473 = vmatprep.subr.bf16.mxu0 0
    %1474 = vmatpush1.bf16.msra.mxu0 0
    %1475 = vmatprep.subr.bf16.mxu0 0
    %1476 = vmatpush1.bf16.msra.mxu0 0
    %1477 = vmatprep.subr.bf16.mxu0 0
    %1478 = vmatpush1.bf16.msra.mxu0 0
    %1479 = vmatprep.subr.bf16.mxu0 0
    %1480 = vmatpush1.bf16.msra.mxu0 0
    %1481 = vmatprep.subr.bf16.mxu0 0
    %1482 = vmatpush1.bf16.msra.mxu0 0
    %1483 = vmatprep.subr.bf16.mxu0 0
    %1484 = vmatpush1.bf16.msra.mxu0 0
    %1485 = vmatprep.mubr.bf16.mxu0 0
    %1486 = vmatmul.mubr.bf16.gmra.mrb[0].mxu0 %v132
    %v1487 = vpop.f32.mrb[0].mxu0
    %v1488 = vadd.f32 %v1004, %v1487
    %v1489 = vpop.f32.mrb[0].mxu0
    %v1490 = vadd.f32 %v1006, %v1489
    %v1491 = vpop.f32.mrb[0].mxu0
    %v1492 = vpop.f32.mrb[0].mxu0
    %1493 = vdwg.mxu0
    %1494 = vmatprep.subr.bf16.mxu0 %v1328
    %1495 = vmatpush1.bf16.msra.mxu0 %v1327
    %1496 = vmatprep.subr.bf16.mxu0 %v1336
    %1497 = vmatpush1.bf16.msra.mxu0 %v1335
    %1498 = vmatprep.subr.bf16.mxu0 %v1344
    %1499 = vmatpush1.bf16.msra.mxu0 %v1343
    %1500 = vmatprep.subr.bf16.mxu0 %v1352
    %1501 = vmatpush1.bf16.msra.mxu0 %v1351
    %1502 = vmatprep.subr.bf16.mxu0 %v1360
    %1503 = vmatpush1.bf16.msra.mxu0 %v1359
    %1504 = vmatprep.subr.bf16.mxu0 %v1368
    %1505 = vmatpush1.bf16.msra.mxu0 %v1367
    %1506 = vmatprep.subr.bf16.mxu0 %v1376
    %1507 = vmatpush1.bf16.msra.mxu0 %v1375
    %1508 = vmatprep.subr.bf16.mxu0 %v1384
    %1509 = vmatpush1.bf16.msra.mxu0 %v1383
    %1510 = vmatprep.subr.bf16.mxu0 0
    %1511 = vmatpush1.bf16.msra.mxu0 0
    %1512 = vmatprep.subr.bf16.mxu0 0
    %1513 = vmatpush1.bf16.msra.mxu0 0
    %1514 = vmatprep.subr.bf16.mxu0 0
    %1515 = vmatpush1.bf16.msra.mxu0 0
    %1516 = vmatprep.subr.bf16.mxu0 0
    %1517 = vmatpush1.bf16.msra.mxu0 0
    %1518 = vmatprep.subr.bf16.mxu0 0
    %1519 = vmatpush1.bf16.msra.mxu0 0
    %1520 = vmatprep.subr.bf16.mxu0 0
    %1521 = vmatpush1.bf16.msra.mxu0 0
    %1522 = vmatprep.subr.bf16.mxu0 0
    %1523 = vmatpush1.bf16.msra.mxu0 0
    %1524 = vmatprep.subr.bf16.mxu0 0
    %1525 = vmatpush1.bf16.msra.mxu0 0
    %1526 = vmatprep.mubr.bf16.mxu0 0
    %1527 = vmatmul.mubr.bf16.gmra.mrb[0].mxu0 %v132
    %v1528 = vpop.f32.mrb[0].mxu0
    %v1529 = vadd.f32 %v1045, %v1528
    %v1530 = vpop.f32.mrb[0].mxu0
    %v1531 = vadd.f32 %v1047, %v1530
    %v1532 = vpop.f32.mrb[0].mxu0
    %v1533 = vpop.f32.mrb[0].mxu0
    %1534 = vdwg.mxu0
    %1535 = vmatprep.subr.bf16.mxu0 %v1330
    %1536 = vmatpush1.bf16.msra.mxu0 %v1329
    %1537 = vmatprep.subr.bf16.mxu0 %v1338
    %1538 = vmatpush1.bf16.msra.mxu0 %v1337
    %1539 = vmatprep.subr.bf16.mxu0 %v1346
    %1540 = vmatpush1.bf16.msra.mxu0 %v1345
    %1541 = vmatprep.subr.bf16.mxu0 %v1354
    %1542 = vmatpush1.bf16.msra.mxu0 %v1353
    %1543 = vmatprep.subr.bf16.mxu0 %v1362
    %1544 = vmatpush1.bf16.msra.mxu0 %v1361
    %1545 = vmatprep.subr.bf16.mxu0 %v1370
    %1546 = vmatpush1.bf16.msra.mxu0 %v1369
    %1547 = vmatprep.subr.bf16.mxu0 %v1378
    %1548 = vmatpush1.bf16.msra.mxu0 %v1377
    %1549 = vmatprep.subr.bf16.mxu0 %v1386
    %1550 = vmatpush1.bf16.msra.mxu0 %v1385
    %1551 = vmatprep.subr.bf16.mxu0 0
    %1552 = vmatpush1.bf16.msra.mxu0 0
    %1553 = vmatprep.subr.bf16.mxu0 0
    %1554 = vmatpush1.bf16.msra.mxu0 0
    %1555 = vmatprep.subr.bf16.mxu0 0
    %1556 = vmatpush1.bf16.msra.mxu0 0
    %1557 = vmatprep.subr.bf16.mxu0 0
    %1558 = vmatpush1.bf16.msra.mxu0 0
    %1559 = vmatprep.subr.bf16.mxu0 0
    %1560 = vmatpush1.bf16.msra.mxu0 0
    %1561 = vmatprep.subr.bf16.mxu0 0
    %1562 = vmatpush1.bf16.msra.mxu0 0
    %1563 = vmatprep.subr.bf16.mxu0 0
    %1564 = vmatpush1.bf16.msra.mxu0 0
    %1565 = vmatprep.subr.bf16.mxu0 0
    %1566 = vmatpush1.bf16.msra.mxu0 0
    %1567 = vmatprep.mubr.bf16.mxu0 0
    %1568 = vmatmul.mubr.bf16.gmra.mrb[0].mxu0 %v132
    %v1569 = vpop.f32.mrb[0].mxu0
    %v1570 = vadd.f32 %v1086, %v1569
    %v1571 = vpop.f32.mrb[0].mxu0
    %v1572 = vadd.f32 %v1088, %v1571
    %v1573 = vpop.f32.mrb[0].mxu0
    %v1574 = vpop.f32.mrb[0].mxu0
    %1575 = vdwg.mxu0
    %1576 = vmatprep.subr.bf16.mxu0 %v1332
    %1577 = vmatpush1.bf16.msra.mxu0 %v1331
    %1578 = vmatprep.subr.bf16.mxu0 %v1340
    %1579 = vmatpush1.bf16.msra.mxu0 %v1339
    %1580 = vmatprep.subr.bf16.mxu0 %v1348
    %1581 = vmatpush1.bf16.msra.mxu0 %v1347
    %1582 = vmatprep.subr.bf16.mxu0 %v1356
    %1583 = vmatpush1.bf16.msra.mxu0 %v1355
    %1584 = vmatprep.subr.bf16.mxu0 %v1364
    %1585 = vmatpush1.bf16.msra.mxu0 %v1363
    %1586 = vmatprep.subr.bf16.mxu0 %v1372
    %1587 = vmatpush1.bf16.msra.mxu0 %v1371
    %1588 = vmatprep.subr.bf16.mxu0 %v1380
    %1589 = vmatpush1.bf16.msra.mxu0 %v1379
    %1590 = vmatprep.subr.bf16.mxu0 %v1388
    %1591 = vmatpush1.bf16.msra.mxu0 %v1387
    %1592 = vmatprep.subr.bf16.mxu0 0
    %1593 = vmatpush1.bf16.msra.mxu0 0
    %1594 = vmatprep.subr.bf16.mxu0 0
    %1595 = vmatpush1.bf16.msra.mxu0 0
    %1596 = vmatprep.subr.bf16.mxu0 0
    %1597 = vmatpush1.bf16.msra.mxu0 0
    %1598 = vmatprep.subr.bf16.mxu0 0
    %1599 = vmatpush1.bf16.msra.mxu0 0
    %1600 = vmatprep.subr.bf16.mxu0 0
    %1601 = vmatpush1.bf16.msra.mxu0 0
    %1602 = vmatprep.subr.bf16.mxu0 0
    %1603 = vmatpush1.bf16.msra.mxu0 0
    %1604 = vmatprep.subr.bf16.mxu0 0
    %1605 = vmatpush1.bf16.msra.mxu0 0
    %1606 = vmatprep.subr.bf16.mxu0 0
    %1607 = vmatpush1.bf16.msra.mxu0 0
    %1608 = vmatprep.mubr.bf16.mxu0 0
    %1609 = vmatmul.mubr.bf16.gmra.mrb[0].mxu0 %v132
    %v1610 = vpop.f32.mrb[0].mxu0
    %v1611 = vadd.f32 %v1127, %v1610
    %v1612 = vpop.f32.mrb[0].mxu0
    %v1613 = vadd.f32 %v1129, %v1612
    %v1614 = vpop.f32.mrb[0].mxu0
    %v1615 = vpop.f32.mrb[0].mxu0
    %1616 = vdwg.mxu0
    %v1617 = vld [vmem:[%s4] sm:$0xff]
    %v1619 = vlaneseq
    %v1620 = vshrl.u32 %v1619, 7
    %v1621 = vsub.s32 0, %v1620
    %v1622 = vrot.slane %v1617, %v1621
    %v1623 = vlaneseq
    %v1624 = vshrl.u32 %v1623, 7
    %v1625 = vsub.s32 1, %v1624
    %v1626 = vrot.slane %v1617, %v1625
    %v1627 = vlaneseq
    %v1628 = vshrl.u32 %v1627, 7
    %v1629 = vsub.s32 2, %v1628
    %v1630 = vrot.slane %v1617, %v1629
    %v1631 = vlaneseq
    %v1632 = vshrl.u32 %v1631, 7
    %v1633 = vsub.s32 3, %v1632
    %v1634 = vrot.slane %v1617, %v1633
    %v1635 = vlaneseq
    %v1636 = vshrl.u32 %v1635, 7
    %v1637 = vsub.s32 4, %v1636
    %v1638 = vrot.slane %v1617, %v1637
    %v1639 = vlaneseq
    %v1640 = vshrl.u32 %v1639, 7
    %v1641 = vsub.s32 5, %v1640
    %v1642 = vrot.slane %v1617, %v1641
    %v1643 = vlaneseq
    %v1644 = vshrl.u32 %v1643, 7
    %v1645 = vsub.s32 6, %v1644
    %v1646 = vrot.slane %v1617, %v1645
    %v1647 = vlaneseq
    %v1648 = vshrl.u32 %v1647, 7
    %v1649 = vsub.s32 7, %v1648
    %v1650 = vrot.slane %v1617, %v1649
    %v1659 = vadd.f32 %v1488, %v1622
    %v1660 = vadd.f32 %v1490, %v1626
    %v1661 = vadd.f32 %v1529, %v1630
    %v1662 = vadd.f32 %v1531, %v1634
    %v1663 = vadd.f32 %v1570, %v1638
    %v1664 = vadd.f32 %v1572, %v1642
    %v1665 = vadd.f32 %v1611, %v1646
    %v1666 = vadd.f32 %v1613, %v1650
    %v1667 = vtanh.pop %v1659
    %v1668 = vtanh.pop %v1660
    %v1669 = vtanh.pop %v1661
    %v1670 = vtanh.pop %v1662
    %v1671 = vtanh.pop %v1663
    %v1672 = vtanh.pop %v1664
    %v1673 = vtanh.pop %v1665
    %v1674 = vtanh.pop %v1666
    %v1675 = vpack.c.bf16 %v1667, %v1667
    %v1676 = vpack.c.bf16 %v1668, %v1668
    %v1677 = vpack.c.bf16 %v1669, %v1669
    %v1678 = vpack.c.bf16 %v1670, %v1670
    %v1679 = vpack.c.bf16 %v1671, %v1671
    %v1680 = vpack.c.bf16 %v1672, %v1672
    %v1681 = vpack.c.bf16 %v1673, %v1673
    %v1682 = vpack.c.bf16 %v1674, %v1674
    %v1683 = vld [vmem:[#allocation10] sm:$0xff]
    %v1684 = vld [vmem:[#allocation10 + $0x8] sm:$0xff]
    %v1685 = vld [vmem:[#allocation10 + $0x10] sm:$0xff]
    %v1686 = vld [vmem:[#allocation10 + $0x18] sm:$0xff]
    %v1687 = vld [vmem:[#allocation10 + $0x20] sm:$0xff]
    %v1688 = vld [vmem:[#allocation10 + $0x28] sm:$0xff]
    %v1689 = vld [vmem:[#allocation10 + $0x30] sm:$0xff]
    %v1690 = vld [vmem:[#allocation10 + $0x38] sm:$0xff]
    %v1691 = vld [vmem:[#allocation10 + $0x40] sm:$0xff]
    %v1692 = vld [vmem:[#allocation10 + $0x48] sm:$0xff]
    %v1693 = vld [vmem:[#allocation10 + $0x50] sm:$0xff]
    %v1694 = vld [vmem:[#allocation10 + $0x58] sm:$0xff]
    %v1695 = vld [vmem:[#allocation10 + $0x60] sm:$0xff]
    %v1696 = vld [vmem:[#allocation10 + $0x68] sm:$0xff]
    %v1697 = vld [vmem:[#allocation10 + $0x70] sm:$0xff]
    %v1698 = vld [vmem:[#allocation10 + $0x78] sm:$0xff]
    %v1699 = vld [vmem:[#allocation10 + $0x80] sm:$0xff]
    %v1700 = vld [vmem:[#allocation10 + $0x88] sm:$0xff]
    %v1701 = vld [vmem:[#allocation10 + $0x90] sm:$0xff]
    %v1702 = vld [vmem:[#allocation10 + $0x98] sm:$0xff]
    %v1703 = vld [vmem:[#allocation10 + $0xa0] sm:$0xff]
    %v1704 = vld [vmem:[#allocation10 + $0xa8] sm:$0xff]
    %v1705 = vld [vmem:[#allocation10 + $0xb0] sm:$0xff]
    %v1706 = vld [vmem:[#allocation10 + $0xb8] sm:$0xff]
    %v1707 = vld [vmem:[#allocation10 + $0xc0] sm:$0xff]
    %v1708 = vld [vmem:[#allocation10 + $0xc8] sm:$0xff]
    %v1709 = vld [vmem:[#allocation10 + $0xd0] sm:$0xff]
    %v1710 = vld [vmem:[#allocation10 + $0xd8] sm:$0xff]
    %v1711 = vld [vmem:[#allocation10 + $0xe0] sm:$0xff]
    %v1712 = vld [vmem:[#allocation10 + $0xe8] sm:$0xff]
    %v1713 = vld [vmem:[#allocation10 + $0xf0] sm:$0xff]
    %v1714 = vld [vmem:[#allocation10 + $0xf8] sm:$0xff]
    %v1715 = vld [vmem:[#allocation10 + $0x100] sm:$0xff]
    %v1716 = vld [vmem:[#allocation10 + $0x108] sm:$0xff]
    %v1717 = vld [vmem:[#allocation10 + $0x110] sm:$0xff]
    %v1718 = vld [vmem:[#allocation10 + $0x118] sm:$0xff]
    %v1719 = vld [vmem:[#allocation10 + $0x120] sm:$0xff]
    %v1720 = vld [vmem:[#allocation10 + $0x128] sm:$0xff]
    %v1721 = vld [vmem:[#allocation10 + $0x130] sm:$0xff]
    %v1722 = vld [vmem:[#allocation10 + $0x138] sm:$0xff]
    %v1723 = vld [vmem:[#allocation10 + $0x140] sm:$0xff]
    %v1724 = vld [vmem:[#allocation10 + $0x148] sm:$0xff]
    %v1725 = vld [vmem:[#allocation10 + $0x150] sm:$0xff]
    %v1726 = vld [vmem:[#allocation10 + $0x158] sm:$0xff]
    %v1727 = vld [vmem:[#allocation10 + $0x160] sm:$0xff]
    %v1728 = vld [vmem:[#allocation10 + $0x168] sm:$0xff]
    %v1729 = vld [vmem:[#allocation10 + $0x170] sm:$0xff]
    %v1730 = vld [vmem:[#allocation10 + $0x178] sm:$0xff]
    %v1731 = vld [vmem:[#allocation10 + $0x180] sm:$0xff]
    %v1732 = vld [vmem:[#allocation10 + $0x188] sm:$0xff]
    %v1733 = vld [vmem:[#allocation10 + $0x190] sm:$0xff]
    %v1734 = vld [vmem:[#allocation10 + $0x198] sm:$0xff]
    %v1735 = vld [vmem:[#allocation10 + $0x1a0] sm:$0xff]
    %v1736 = vld [vmem:[#allocation10 + $0x1a8] sm:$0xff]
    %v1737 = vld [vmem:[#allocation10 + $0x1b0] sm:$0xff]
    %v1738 = vld [vmem:[#allocation10 + $0x1b8] sm:$0xff]
    %v1739 = vld [vmem:[#allocation10 + $0x1c0] sm:$0xff]
    %v1740 = vld [vmem:[#allocation10 + $0x1c8] sm:$0xff]
    %v1741 = vld [vmem:[#allocation10 + $0x1d0] sm:$0xff]
    %v1742 = vld [vmem:[#allocation10 + $0x1d8] sm:$0xff]
    %v1743 = vld [vmem:[#allocation10 + $0x1e0] sm:$0xff]
    %v1744 = vld [vmem:[#allocation10 + $0x1e8] sm:$0xff]
    %v1745 = vld [vmem:[#allocation10 + $0x1f0] sm:$0xff]
    %v1746 = vld [vmem:[#allocation10 + $0x1f8] sm:$0xff]
    %v1747 = vld [vmem:[#allocation10 + $0x200] sm:$0xff]
    %v1748 = vld [vmem:[#allocation10 + $0x208] sm:$0xff]
    %v1749 = vld [vmem:[#allocation10 + $0x210] sm:$0xff]
    %v1750 = vld [vmem:[#allocation10 + $0x218] sm:$0xff]
    %v1751 = vld [vmem:[#allocation10 + $0x220] sm:$0xff]
    %v1752 = vld [vmem:[#allocation10 + $0x228] sm:$0xff]
    %v1753 = vld [vmem:[#allocation10 + $0x230] sm:$0xff]
    %v1754 = vld [vmem:[#allocation10 + $0x238] sm:$0xff]
    %v1755 = vld [vmem:[#allocation10 + $0x240] sm:$0xff]
    %v1756 = vld [vmem:[#allocation10 + $0x248] sm:$0xff]
    %v1757 = vld [vmem:[#allocation10 + $0x250] sm:$0xff]
    %v1758 = vld [vmem:[#allocation10 + $0x258] sm:$0xff]
    %v1759 = vld [vmem:[#allocation10 + $0x260] sm:$0xff]
    %v1760 = vld [vmem:[#allocation10 + $0x268] sm:$0xff]
    %v1761 = vld [vmem:[#allocation10 + $0x270] sm:$0xff]
    %v1762 = vld [vmem:[#allocation10 + $0x278] sm:$0xff]
    %v1763 = vld [vmem:[#allocation10 + $0x280] sm:$0xff]
    %v1764 = vld [vmem:[#allocation10 + $0x288] sm:$0xff]
    %v1765 = vld [vmem:[#allocation10 + $0x290] sm:$0xff]
    %v1766 = vld [vmem:[#allocation10 + $0x298] sm:$0xff]
    %v1767 = vld [vmem:[#allocation10 + $0x2a0] sm:$0xff]
    %v1768 = vld [vmem:[#allocation10 + $0x2a8] sm:$0xff]
    %v1769 = vld [vmem:[#allocation10 + $0x2b0] sm:$0xff]
    %v1770 = vld [vmem:[#allocation10 + $0x2b8] sm:$0xff]
    %v1771 = vld [vmem:[#allocation10 + $0x2c0] sm:$0xff]
    %v1772 = vld [vmem:[#allocation10 + $0x2c8] sm:$0xff]
    %v1773 = vld [vmem:[#allocation10 + $0x2d0] sm:$0xff]
    %v1774 = vld [vmem:[#allocation10 + $0x2d8] sm:$0xff]
    %v1775 = vld [vmem:[#allocation10 + $0x2e0] sm:$0xff]
    %v1776 = vld [vmem:[#allocation10 + $0x2e8] sm:$0xff]
    %v1777 = vld [vmem:[#allocation10 + $0x2f0] sm:$0xff]
    %v1778 = vld [vmem:[#allocation10 + $0x2f8] sm:$0xff]
    %v1779 = vld [vmem:[#allocation10 + $0x300] sm:$0xff]
    %v1780 = vld [vmem:[#allocation10 + $0x308] sm:$0xff]
    %v1781 = vld [vmem:[#allocation10 + $0x310] sm:$0xff]
    %v1782 = vld [vmem:[#allocation10 + $0x318] sm:$0xff]
    %v1783 = vld [vmem:[#allocation10 + $0x320] sm:$0xff]
    %v1784 = vld [vmem:[#allocation10 + $0x328] sm:$0xff]
    %v1785 = vld [vmem:[#allocation10 + $0x330] sm:$0xff]
    %v1786 = vld [vmem:[#allocation10 + $0x338] sm:$0xff]
    %v1787 = vld [vmem:[#allocation10 + $0x340] sm:$0xff]
    %v1788 = vld [vmem:[#allocation10 + $0x348] sm:$0xff]
    %v1789 = vld [vmem:[#allocation10 + $0x350] sm:$0xff]
    %v1790 = vld [vmem:[#allocation10 + $0x358] sm:$0xff]
    %v1791 = vld [vmem:[#allocation10 + $0x360] sm:$0xff]
    %v1792 = vld [vmem:[#allocation10 + $0x368] sm:$0xff]
    %v1793 = vld [vmem:[#allocation10 + $0x370] sm:$0xff]
    %v1794 = vld [vmem:[#allocation10 + $0x378] sm:$0xff]
    %v1795 = vld [vmem:[#allocation10 + $0x380] sm:$0xff]
    %v1796 = vld [vmem:[#allocation10 + $0x388] sm:$0xff]
    %v1797 = vld [vmem:[#allocation10 + $0x390] sm:$0xff]
    %v1798 = vld [vmem:[#allocation10 + $0x398] sm:$0xff]
    %v1799 = vld [vmem:[#allocation10 + $0x3a0] sm:$0xff]
    %v1800 = vld [vmem:[#allocation10 + $0x3a8] sm:$0xff]
    %v1801 = vld [vmem:[#allocation10 + $0x3b0] sm:$0xff]
    %v1802 = vld [vmem:[#allocation10 + $0x3b8] sm:$0xff]
    %v1803 = vld [vmem:[#allocation10 + $0x3c0] sm:$0xff]
    %v1804 = vld [vmem:[#allocation10 + $0x3c8] sm:$0xff]
    %v1805 = vld [vmem:[#allocation10 + $0x3d0] sm:$0xff]
    %v1806 = vld [vmem:[#allocation10 + $0x3d8] sm:$0xff]
    %v1807 = vld [vmem:[#allocation10 + $0x3e0] sm:$0xff]
    %v1808 = vld [vmem:[#allocation10 + $0x3e8] sm:$0xff]
    %v1809 = vld [vmem:[#allocation10 + $0x3f0] sm:$0xff]
    %v1810 = vld [vmem:[#allocation10 + $0x3f8] sm:$0xff]
    %v1811 = vld [vmem:[#allocation10 + $0x400] sm:$0xff]
    %v1812 = vld [vmem:[#allocation10 + $0x408] sm:$0xff]
    %v1813 = vld [vmem:[#allocation10 + $0x410] sm:$0xff]
    %v1814 = vld [vmem:[#allocation10 + $0x418] sm:$0xff]
    %v1815 = vld [vmem:[#allocation10 + $0x420] sm:$0xff]
    %v1816 = vld [vmem:[#allocation10 + $0x428] sm:$0xff]
    %v1817 = vld [vmem:[#allocation10 + $0x430] sm:$0xff]
    %v1818 = vld [vmem:[#allocation10 + $0x438] sm:$0xff]
    %v1819 = vld [vmem:[#allocation10 + $0x440] sm:$0xff]
    %v1820 = vld [vmem:[#allocation10 + $0x448] sm:$0xff]
    %v1821 = vld [vmem:[#allocation10 + $0x450] sm:$0xff]
    %v1822 = vld [vmem:[#allocation10 + $0x458] sm:$0xff]
    %v1823 = vld [vmem:[#allocation10 + $0x460] sm:$0xff]
    %v1824 = vld [vmem:[#allocation10 + $0x468] sm:$0xff]
    %v1825 = vld [vmem:[#allocation10 + $0x470] sm:$0xff]
    %v1826 = vld [vmem:[#allocation10 + $0x478] sm:$0xff]
    %v1827 = vld [vmem:[#allocation10 + $0x480] sm:$0xff]
    %v1828 = vld [vmem:[#allocation10 + $0x488] sm:$0xff]
    %v1829 = vld [vmem:[#allocation10 + $0x490] sm:$0xff]
    %v1830 = vld [vmem:[#allocation10 + $0x498] sm:$0xff]
    %v1831 = vld [vmem:[#allocation10 + $0x4a0] sm:$0xff]
    %v1832 = vld [vmem:[#allocation10 + $0x4a8] sm:$0xff]
    %v1833 = vld [vmem:[#allocation10 + $0x4b0] sm:$0xff]
    %v1834 = vld [vmem:[#allocation10 + $0x4b8] sm:$0xff]
    %v1835 = vld [vmem:[#allocation10 + $0x4c0] sm:$0xff]
    %v1836 = vld [vmem:[#allocation10 + $0x4c8] sm:$0xff]
    %v1837 = vld [vmem:[#allocation10 + $0x4d0] sm:$0xff]
    %v1838 = vld [vmem:[#allocation10 + $0x4d8] sm:$0xff]
    %v1839 = vld [vmem:[#allocation10 + $0x4e0] sm:$0xff]
    %v1840 = vld [vmem:[#allocation10 + $0x4e8] sm:$0xff]
    %v1841 = vld [vmem:[#allocation10 + $0x4f0] sm:$0xff]
    %v1842 = vld [vmem:[#allocation10 + $0x4f8] sm:$0xff]
    %v1843 = vld [vmem:[#allocation10 + $0x500] sm:$0xff]
    %v1844 = vld [vmem:[#allocation10 + $0x508] sm:$0xff]
    %v1845 = vld [vmem:[#allocation10 + $0x510] sm:$0xff]
    %v1846 = vld [vmem:[#allocation10 + $0x518] sm:$0xff]
    %v1847 = vld [vmem:[#allocation10 + $0x520] sm:$0xff]
    %v1848 = vld [vmem:[#allocation10 + $0x528] sm:$0xff]
    %v1849 = vld [vmem:[#allocation10 + $0x530] sm:$0xff]
    %v1850 = vld [vmem:[#allocation10 + $0x538] sm:$0xff]
    %v1851 = vld [vmem:[#allocation10 + $0x540] sm:$0xff]
    %v1852 = vld [vmem:[#allocation10 + $0x548] sm:$0xff]
    %v1853 = vld [vmem:[#allocation10 + $0x550] sm:$0xff]
    %v1854 = vld [vmem:[#allocation10 + $0x558] sm:$0xff]
    %v1855 = vld [vmem:[#allocation10 + $0x560] sm:$0xff]
    %v1856 = vld [vmem:[#allocation10 + $0x568] sm:$0xff]
    %v1857 = vld [vmem:[#allocation10 + $0x570] sm:$0xff]
    %v1858 = vld [vmem:[#allocation10 + $0x578] sm:$0xff]
    %v1859 = vld [vmem:[#allocation10 + $0x580] sm:$0xff]
    %v1860 = vld [vmem:[#allocation10 + $0x588] sm:$0xff]
    %v1861 = vld [vmem:[#allocation10 + $0x590] sm:$0xff]
    %v1862 = vld [vmem:[#allocation10 + $0x598] sm:$0xff]
    %v1863 = vld [vmem:[#allocation10 + $0x5a0] sm:$0xff]
    %v1864 = vld [vmem:[#allocation10 + $0x5a8] sm:$0xff]
    %v1865 = vld [vmem:[#allocation10 + $0x5b0] sm:$0xff]
    %v1866 = vld [vmem:[#allocation10 + $0x5b8] sm:$0xff]
    %v1867 = vld [vmem:[#allocation10 + $0x5c0] sm:$0xff]
    %v1868 = vld [vmem:[#allocation10 + $0x5c8] sm:$0xff]
    %v1869 = vld [vmem:[#allocation10 + $0x5d0] sm:$0xff]
    %v1870 = vld [vmem:[#allocation10 + $0x5d8] sm:$0xff]
    %v1871 = vld [vmem:[#allocation10 + $0x5e0] sm:$0xff]
    %v1872 = vld [vmem:[#allocation10 + $0x5e8] sm:$0xff]
    %v1873 = vld [vmem:[#allocation10 + $0x5f0] sm:$0xff]
    %v1874 = vld [vmem:[#allocation10 + $0x5f8] sm:$0xff]
    %v1875 = vld [vmem:[#allocation10 + $0x600] sm:$0xff]
    %v1876 = vld [vmem:[#allocation10 + $0x608] sm:$0xff]
    %v1877 = vld [vmem:[#allocation10 + $0x610] sm:$0xff]
    %v1878 = vld [vmem:[#allocation10 + $0x618] sm:$0xff]
    %v1879 = vld [vmem:[#allocation10 + $0x620] sm:$0xff]
    %v1880 = vld [vmem:[#allocation10 + $0x628] sm:$0xff]
    %v1881 = vld [vmem:[#allocation10 + $0x630] sm:$0xff]
    %v1882 = vld [vmem:[#allocation10 + $0x638] sm:$0xff]
    %v1883 = vld [vmem:[#allocation10 + $0x640] sm:$0xff]
    %v1884 = vld [vmem:[#allocation10 + $0x648] sm:$0xff]
    %v1885 = vld [vmem:[#allocation10 + $0x650] sm:$0xff]
    %v1886 = vld [vmem:[#allocation10 + $0x658] sm:$0xff]
    %v1887 = vld [vmem:[#allocation10 + $0x660] sm:$0xff]
    %v1888 = vld [vmem:[#allocation10 + $0x668] sm:$0xff]
    %v1889 = vld [vmem:[#allocation10 + $0x670] sm:$0xff]
    %v1890 = vld [vmem:[#allocation10 + $0x678] sm:$0xff]
    %v1891 = vld [vmem:[#allocation10 + $0x680] sm:$0xff]
    %v1892 = vld [vmem:[#allocation10 + $0x688] sm:$0xff]
    %v1893 = vld [vmem:[#allocation10 + $0x690] sm:$0xff]
    %v1894 = vld [vmem:[#allocation10 + $0x698] sm:$0xff]
    %v1895 = vld [vmem:[#allocation10 + $0x6a0] sm:$0xff]
    %v1896 = vld [vmem:[#allocation10 + $0x6a8] sm:$0xff]
    %v1897 = vld [vmem:[#allocation10 + $0x6b0] sm:$0xff]
    %v1898 = vld [vmem:[#allocation10 + $0x6b8] sm:$0xff]
    %v1899 = vld [vmem:[#allocation10 + $0x6c0] sm:$0xff]
    %v1900 = vld [vmem:[#allocation10 + $0x6c8] sm:$0xff]
    %v1901 = vld [vmem:[#allocation10 + $0x6d0] sm:$0xff]
    %v1902 = vld [vmem:[#allocation10 + $0x6d8] sm:$0xff]
    %v1903 = vld [vmem:[#allocation10 + $0x6e0] sm:$0xff]
    %v1904 = vld [vmem:[#allocation10 + $0x6e8] sm:$0xff]
    %v1905 = vld [vmem:[#allocation10 + $0x6f0] sm:$0xff]
    %v1906 = vld [vmem:[#allocation10 + $0x6f8] sm:$0xff]
    %v1907 = vld [vmem:[#allocation10 + $0x700] sm:$0xff]
    %v1908 = vld [vmem:[#allocation10 + $0x708] sm:$0xff]
    %v1909 = vld [vmem:[#allocation10 + $0x710] sm:$0xff]
    %v1910 = vld [vmem:[#allocation10 + $0x718] sm:$0xff]
    %v1911 = vld [vmem:[#allocation10 + $0x720] sm:$0xff]
    %v1912 = vld [vmem:[#allocation10 + $0x728] sm:$0xff]
    %v1913 = vld [vmem:[#allocation10 + $0x730] sm:$0xff]
    %v1914 = vld [vmem:[#allocation10 + $0x738] sm:$0xff]
    %v1915 = vld [vmem:[#allocation10 + $0x740] sm:$0xff]
    %v1916 = vld [vmem:[#allocation10 + $0x748] sm:$0xff]
    %v1917 = vld [vmem:[#allocation10 + $0x750] sm:$0xff]
    %v1918 = vld [vmem:[#allocation10 + $0x758] sm:$0xff]
    %v1919 = vld [vmem:[#allocation10 + $0x760] sm:$0xff]
    %v1920 = vld [vmem:[#allocation10 + $0x768] sm:$0xff]
    %v1921 = vld [vmem:[#allocation10 + $0x770] sm:$0xff]
    %v1922 = vld [vmem:[#allocation10 + $0x778] sm:$0xff]
    %v1923 = vld [vmem:[#allocation10 + $0x780] sm:$0xff]
    %v1924 = vld [vmem:[#allocation10 + $0x788] sm:$0xff]
    %v1925 = vld [vmem:[#allocation10 + $0x790] sm:$0xff]
    %v1926 = vld [vmem:[#allocation10 + $0x798] sm:$0xff]
    %v1927 = vld [vmem:[#allocation10 + $0x7a0] sm:$0xff]
    %v1928 = vld [vmem:[#allocation10 + $0x7a8] sm:$0xff]
    %v1929 = vld [vmem:[#allocation10 + $0x7b0] sm:$0xff]
    %v1930 = vld [vmem:[#allocation10 + $0x7b8] sm:$0xff]
    %v1931 = vld [vmem:[#allocation10 + $0x7c0] sm:$0xff]
    %v1932 = vld [vmem:[#allocation10 + $0x7c8] sm:$0xff]
    %v1933 = vld [vmem:[#allocation10 + $0x7d0] sm:$0xff]
    %v1934 = vld [vmem:[#allocation10 + $0x7d8] sm:$0xff]
    %v1935 = vld [vmem:[#allocation10 + $0x7e0] sm:$0xff]
    %v1936 = vld [vmem:[#allocation10 + $0x7e8] sm:$0xff]
    %v1937 = vld [vmem:[#allocation10 + $0x7f0] sm:$0xff]
    %v1938 = vld [vmem:[#allocation10 + $0x7f8] sm:$0xff]
    %v1939 = vld [vmem:[%s6] sm:$0xf]
    %v1941 = vlaneseq
    %v1942 = vshrl.u32 %v1941, 7
    %v1943 = vsub.s32 0, %v1942
    %v1944 = vrot.slane %v1939, %v1943
    %v1945 = vlaneseq
    %v1946 = vshrl.u32 %v1945, 7
    %v1947 = vsub.s32 1, %v1946
    %v1948 = vrot.slane %v1939, %v1947
    %v1949 = vlaneseq
    %v1950 = vshrl.u32 %v1949, 7
    %v1951 = vsub.s32 2, %v1950
    %v1952 = vrot.slane %v1939, %v1951
    %v1953 = vlaneseq
    %v1954 = vshrl.u32 %v1953, 7
    %v1955 = vsub.s32 3, %v1954
    %v1956 = vrot.slane %v1939, %v1955
    %v2217 = vunpack.c.l.b16 %v1683
    %v2218 = vunpack.c.h.b16 %v1683
    %v2219 = vunpack.c.l.b16 %v1684
    %v2220 = vunpack.c.h.b16 %v1684
    %v2221 = vunpack.c.l.b16 %v1685
    %v2222 = vunpack.c.h.b16 %v1685
    %v2223 = vunpack.c.l.b16 %v1686
    %v2224 = vunpack.c.h.b16 %v1686
    %v2225 = vunpack.c.l.b16 %v1687
    %v2226 = vunpack.c.h.b16 %v1687
    %v2227 = vunpack.c.l.b16 %v1688
    %v2228 = vunpack.c.h.b16 %v1688
    %v2229 = vunpack.c.l.b16 %v1689
    %v2230 = vunpack.c.h.b16 %v1689
    %v2231 = vunpack.c.l.b16 %v1690
    %v2232 = vunpack.c.h.b16 %v1690
    %v2233 = vunpack.c.l.b16 %v1691
    %v2234 = vunpack.c.h.b16 %v1691
    %v2235 = vunpack.c.l.b16 %v1692
    %v2236 = vunpack.c.h.b16 %v1692
    %v2237 = vunpack.c.l.b16 %v1693
    %v2238 = vunpack.c.h.b16 %v1693
    %v2239 = vunpack.c.l.b16 %v1694
    %v2240 = vunpack.c.h.b16 %v1694
    %v2241 = vunpack.c.l.b16 %v1695
    %v2242 = vunpack.c.h.b16 %v1695
    %v2243 = vunpack.c.l.b16 %v1696
    %v2244 = vunpack.c.h.b16 %v1696
    %v2245 = vunpack.c.l.b16 %v1697
    %v2246 = vunpack.c.h.b16 %v1697
    %v2247 = vunpack.c.l.b16 %v1698
    %v2248 = vunpack.c.h.b16 %v1698
    %v2249 = vunpack.c.l.b16 %v1699
    %v2250 = vunpack.c.h.b16 %v1699
    %v2251 = vunpack.c.l.b16 %v1700
    %v2252 = vunpack.c.h.b16 %v1700
    %v2253 = vunpack.c.l.b16 %v1701
    %v2254 = vunpack.c.h.b16 %v1701
    %v2255 = vunpack.c.l.b16 %v1702
    %v2256 = vunpack.c.h.b16 %v1702
    %v2257 = vunpack.c.l.b16 %v1703
    %v2258 = vunpack.c.h.b16 %v1703
    %v2259 = vunpack.c.l.b16 %v1704
    %v2260 = vunpack.c.h.b16 %v1704
    %v2261 = vunpack.c.l.b16 %v1705
    %v2262 = vunpack.c.h.b16 %v1705
    %v2263 = vunpack.c.l.b16 %v1706
    %v2264 = vunpack.c.h.b16 %v1706
    %v2265 = vunpack.c.l.b16 %v1707
    %v2266 = vunpack.c.h.b16 %v1707
    %v2267 = vunpack.c.l.b16 %v1708
    %v2268 = vunpack.c.h.b16 %v1708
    %v2269 = vunpack.c.l.b16 %v1709
    %v2270 = vunpack.c.h.b16 %v1709
    %v2271 = vunpack.c.l.b16 %v1710
    %v2272 = vunpack.c.h.b16 %v1710
    %v2273 = vunpack.c.l.b16 %v1711
    %v2274 = vunpack.c.h.b16 %v1711
    %v2275 = vunpack.c.l.b16 %v1712
    %v2276 = vunpack.c.h.b16 %v1712
    %v2277 = vunpack.c.l.b16 %v1713
    %v2278 = vunpack.c.h.b16 %v1713
    %v2279 = vunpack.c.l.b16 %v1714
    %v2280 = vunpack.c.h.b16 %v1714
    %v2281 = vunpack.c.l.b16 %v1715
    %v2282 = vunpack.c.h.b16 %v1715
    %v2283 = vunpack.c.l.b16 %v1716
    %v2284 = vunpack.c.h.b16 %v1716
    %v2285 = vunpack.c.l.b16 %v1717
    %v2286 = vunpack.c.h.b16 %v1717
    %v2287 = vunpack.c.l.b16 %v1718
    %v2288 = vunpack.c.h.b16 %v1718
    %v2289 = vunpack.c.l.b16 %v1719
    %v2290 = vunpack.c.h.b16 %v1719
    %v2291 = vunpack.c.l.b16 %v1720
    %v2292 = vunpack.c.h.b16 %v1720
    %v2293 = vunpack.c.l.b16 %v1721
    %v2294 = vunpack.c.h.b16 %v1721
    %v2295 = vunpack.c.l.b16 %v1722
    %v2296 = vunpack.c.h.b16 %v1722
    %v2297 = vunpack.c.l.b16 %v1723
    %v2298 = vunpack.c.h.b16 %v1723
    %v2299 = vunpack.c.l.b16 %v1724
    %v2300 = vunpack.c.h.b16 %v1724
    %v2301 = vunpack.c.l.b16 %v1725
    %v2302 = vunpack.c.h.b16 %v1725
    %v2303 = vunpack.c.l.b16 %v1726
    %v2304 = vunpack.c.h.b16 %v1726
    %v2305 = vunpack.c.l.b16 %v1727
    %v2306 = vunpack.c.h.b16 %v1727
    %v2307 = vunpack.c.l.b16 %v1728
    %v2308 = vunpack.c.h.b16 %v1728
    %v2309 = vunpack.c.l.b16 %v1729
    %v2310 = vunpack.c.h.b16 %v1729
    %v2311 = vunpack.c.l.b16 %v1730
    %v2312 = vunpack.c.h.b16 %v1730
    %v2313 = vunpack.c.l.b16 %v1731
    %v2314 = vunpack.c.h.b16 %v1731
    %v2315 = vunpack.c.l.b16 %v1732
    %v2316 = vunpack.c.h.b16 %v1732
    %v2317 = vunpack.c.l.b16 %v1733
    %v2318 = vunpack.c.h.b16 %v1733
    %v2319 = vunpack.c.l.b16 %v1734
    %v2320 = vunpack.c.h.b16 %v1734
    %v2321 = vunpack.c.l.b16 %v1735
    %v2322 = vunpack.c.h.b16 %v1735
    %v2323 = vunpack.c.l.b16 %v1736
    %v2324 = vunpack.c.h.b16 %v1736
    %v2325 = vunpack.c.l.b16 %v1737
    %v2326 = vunpack.c.h.b16 %v1737
    %v2327 = vunpack.c.l.b16 %v1738
    %v2328 = vunpack.c.h.b16 %v1738
    %v2329 = vunpack.c.l.b16 %v1739
    %v2330 = vunpack.c.h.b16 %v1739
    %v2331 = vunpack.c.l.b16 %v1740
    %v2332 = vunpack.c.h.b16 %v1740
    %v2333 = vunpack.c.l.b16 %v1741
    %v2334 = vunpack.c.h.b16 %v1741
    %v2335 = vunpack.c.l.b16 %v1742
    %v2336 = vunpack.c.h.b16 %v1742
    %v2337 = vunpack.c.l.b16 %v1743
    %v2338 = vunpack.c.h.b16 %v1743
    %v2339 = vunpack.c.l.b16 %v1744
    %v2340 = vunpack.c.h.b16 %v1744
    %v2341 = vunpack.c.l.b16 %v1745
    %v2342 = vunpack.c.h.b16 %v1745
    %v2343 = vunpack.c.l.b16 %v1746
    %v2344 = vunpack.c.h.b16 %v1746
    %v2345 = vunpack.c.l.b16 %v1747
    %v2346 = vunpack.c.h.b16 %v1747
    %v2347 = vunpack.c.l.b16 %v1748
    %v2348 = vunpack.c.h.b16 %v1748
    %v2349 = vunpack.c.l.b16 %v1749
    %v2350 = vunpack.c.h.b16 %v1749
    %v2351 = vunpack.c.l.b16 %v1750
    %v2352 = vunpack.c.h.b16 %v1750
    %v2353 = vunpack.c.l.b16 %v1751
    %v2354 = vunpack.c.h.b16 %v1751
    %v2355 = vunpack.c.l.b16 %v1752
    %v2356 = vunpack.c.h.b16 %v1752
    %v2357 = vunpack.c.l.b16 %v1753
    %v2358 = vunpack.c.h.b16 %v1753
    %v2359 = vunpack.c.l.b16 %v1754
    %v2360 = vunpack.c.h.b16 %v1754
    %v2361 = vunpack.c.l.b16 %v1755
    %v2362 = vunpack.c.h.b16 %v1755
    %v2363 = vunpack.c.l.b16 %v1756
    %v2364 = vunpack.c.h.b16 %v1756
    %v2365 = vunpack.c.l.b16 %v1757
    %v2366 = vunpack.c.h.b16 %v1757
    %v2367 = vunpack.c.l.b16 %v1758
    %v2368 = vunpack.c.h.b16 %v1758
    %v2369 = vunpack.c.l.b16 %v1759
    %v2370 = vunpack.c.h.b16 %v1759
    %v2371 = vunpack.c.l.b16 %v1760
    %v2372 = vunpack.c.h.b16 %v1760
    %v2373 = vunpack.c.l.b16 %v1761
    %v2374 = vunpack.c.h.b16 %v1761
    %v2375 = vunpack.c.l.b16 %v1762
    %v2376 = vunpack.c.h.b16 %v1762
    %v2377 = vunpack.c.l.b16 %v1763
    %v2378 = vunpack.c.h.b16 %v1763
    %v2379 = vunpack.c.l.b16 %v1764
    %v2380 = vunpack.c.h.b16 %v1764
    %v2381 = vunpack.c.l.b16 %v1765
    %v2382 = vunpack.c.h.b16 %v1765
    %v2383 = vunpack.c.l.b16 %v1766
    %v2384 = vunpack.c.h.b16 %v1766
    %v2385 = vunpack.c.l.b16 %v1767
    %v2386 = vunpack.c.h.b16 %v1767
    %v2387 = vunpack.c.l.b16 %v1768
    %v2388 = vunpack.c.h.b16 %v1768
    %v2389 = vunpack.c.l.b16 %v1769
    %v2390 = vunpack.c.h.b16 %v1769
    %v2391 = vunpack.c.l.b16 %v1770
    %v2392 = vunpack.c.h.b16 %v1770
    %v2393 = vunpack.c.l.b16 %v1771
    %v2394 = vunpack.c.h.b16 %v1771
    %v2395 = vunpack.c.l.b16 %v1772
    %v2396 = vunpack.c.h.b16 %v1772
    %v2397 = vunpack.c.l.b16 %v1773
    %v2398 = vunpack.c.h.b16 %v1773
    %v2399 = vunpack.c.l.b16 %v1774
    %v2400 = vunpack.c.h.b16 %v1774
    %v2401 = vunpack.c.l.b16 %v1775
    %v2402 = vunpack.c.h.b16 %v1775
    %v2403 = vunpack.c.l.b16 %v1776
    %v2404 = vunpack.c.h.b16 %v1776
    %v2405 = vunpack.c.l.b16 %v1777
    %v2406 = vunpack.c.h.b16 %v1777
    %v2407 = vunpack.c.l.b16 %v1778
    %v2408 = vunpack.c.h.b16 %v1778
    %v2409 = vunpack.c.l.b16 %v1779
    %v2410 = vunpack.c.h.b16 %v1779
    %v2411 = vunpack.c.l.b16 %v1780
    %v2412 = vunpack.c.h.b16 %v1780
    %v2413 = vunpack.c.l.b16 %v1781
    %v2414 = vunpack.c.h.b16 %v1781
    %v2415 = vunpack.c.l.b16 %v1782
    %v2416 = vunpack.c.h.b16 %v1782
    %v2417 = vunpack.c.l.b16 %v1783
    %v2418 = vunpack.c.h.b16 %v1783
    %v2419 = vunpack.c.l.b16 %v1784
    %v2420 = vunpack.c.h.b16 %v1784
    %v2421 = vunpack.c.l.b16 %v1785
    %v2422 = vunpack.c.h.b16 %v1785
    %v2423 = vunpack.c.l.b16 %v1786
    %v2424 = vunpack.c.h.b16 %v1786
    %v2425 = vunpack.c.l.b16 %v1787
    %v2426 = vunpack.c.h.b16 %v1787
    %v2427 = vunpack.c.l.b16 %v1788
    %v2428 = vunpack.c.h.b16 %v1788
    %v2429 = vunpack.c.l.b16 %v1789
    %v2430 = vunpack.c.h.b16 %v1789
    %v2431 = vunpack.c.l.b16 %v1790
    %v2432 = vunpack.c.h.b16 %v1790
    %v2433 = vunpack.c.l.b16 %v1791
    %v2434 = vunpack.c.h.b16 %v1791
    %v2435 = vunpack.c.l.b16 %v1792
    %v2436 = vunpack.c.h.b16 %v1792
    %v2437 = vunpack.c.l.b16 %v1793
    %v2438 = vunpack.c.h.b16 %v1793
    %v2439 = vunpack.c.l.b16 %v1794
    %v2440 = vunpack.c.h.b16 %v1794
    %v2441 = vunpack.c.l.b16 %v1795
    %v2442 = vunpack.c.h.b16 %v1795
    %v2443 = vunpack.c.l.b16 %v1796
    %v2444 = vunpack.c.h.b16 %v1796
    %v2445 = vunpack.c.l.b16 %v1797
    %v2446 = vunpack.c.h.b16 %v1797
    %v2447 = vunpack.c.l.b16 %v1798
    %v2448 = vunpack.c.h.b16 %v1798
    %v2449 = vunpack.c.l.b16 %v1799
    %v2450 = vunpack.c.h.b16 %v1799
    %v2451 = vunpack.c.l.b16 %v1800
    %v2452 = vunpack.c.h.b16 %v1800
    %v2453 = vunpack.c.l.b16 %v1801
    %v2454 = vunpack.c.h.b16 %v1801
    %v2455 = vunpack.c.l.b16 %v1802
    %v2456 = vunpack.c.h.b16 %v1802
    %v2457 = vunpack.c.l.b16 %v1803
    %v2458 = vunpack.c.h.b16 %v1803
    %v2459 = vunpack.c.l.b16 %v1804
    %v2460 = vunpack.c.h.b16 %v1804
    %v2461 = vunpack.c.l.b16 %v1805
    %v2462 = vunpack.c.h.b16 %v1805
    %v2463 = vunpack.c.l.b16 %v1806
    %v2464 = vunpack.c.h.b16 %v1806
    %v2465 = vunpack.c.l.b16 %v1807
    %v2466 = vunpack.c.h.b16 %v1807
    %v2467 = vunpack.c.l.b16 %v1808
    %v2468 = vunpack.c.h.b16 %v1808
    %v2469 = vunpack.c.l.b16 %v1809
    %v2470 = vunpack.c.h.b16 %v1809
    %v2471 = vunpack.c.l.b16 %v1810
    %v2472 = vunpack.c.h.b16 %v1810
    %v2473 = vunpack.c.l.b16 %v1811
    %v2474 = vunpack.c.h.b16 %v1811
    %v2475 = vunpack.c.l.b16 %v1812
    %v2476 = vunpack.c.h.b16 %v1812
    %v2477 = vunpack.c.l.b16 %v1813
    %v2478 = vunpack.c.h.b16 %v1813
    %v2479 = vunpack.c.l.b16 %v1814
    %v2480 = vunpack.c.h.b16 %v1814
    %v2481 = vunpack.c.l.b16 %v1815
    %v2482 = vunpack.c.h.b16 %v1815
    %v2483 = vunpack.c.l.b16 %v1816
    %v2484 = vunpack.c.h.b16 %v1816
    %v2485 = vunpack.c.l.b16 %v1817
    %v2486 = vunpack.c.h.b16 %v1817
    %v2487 = vunpack.c.l.b16 %v1818
    %v2488 = vunpack.c.h.b16 %v1818
    %v2489 = vunpack.c.l.b16 %v1819
    %v2490 = vunpack.c.h.b16 %v1819
    %v2491 = vunpack.c.l.b16 %v1820
    %v2492 = vunpack.c.h.b16 %v1820
    %v2493 = vunpack.c.l.b16 %v1821
    %v2494 = vunpack.c.h.b16 %v1821
    %v2495 = vunpack.c.l.b16 %v1822
    %v2496 = vunpack.c.h.b16 %v1822
    %v2497 = vunpack.c.l.b16 %v1823
    %v2498 = vunpack.c.h.b16 %v1823
    %v2499 = vunpack.c.l.b16 %v1824
    %v2500 = vunpack.c.h.b16 %v1824
    %v2501 = vunpack.c.l.b16 %v1825
    %v2502 = vunpack.c.h.b16 %v1825
    %v2503 = vunpack.c.l.b16 %v1826
    %v2504 = vunpack.c.h.b16 %v1826
    %v2505 = vunpack.c.l.b16 %v1827
    %v2506 = vunpack.c.h.b16 %v1827
    %v2507 = vunpack.c.l.b16 %v1828
    %v2508 = vunpack.c.h.b16 %v1828
    %v2509 = vunpack.c.l.b16 %v1829
    %v2510 = vunpack.c.h.b16 %v1829
    %v2511 = vunpack.c.l.b16 %v1830
    %v2512 = vunpack.c.h.b16 %v1830
    %v2513 = vunpack.c.l.b16 %v1831
    %v2514 = vunpack.c.h.b16 %v1831
    %v2515 = vunpack.c.l.b16 %v1832
    %v2516 = vunpack.c.h.b16 %v1832
    %v2517 = vunpack.c.l.b16 %v1833
    %v2518 = vunpack.c.h.b16 %v1833
    %v2519 = vunpack.c.l.b16 %v1834
    %v2520 = vunpack.c.h.b16 %v1834
    %v2521 = vunpack.c.l.b16 %v1835
    %v2522 = vunpack.c.h.b16 %v1835
    %v2523 = vunpack.c.l.b16 %v1836
    %v2524 = vunpack.c.h.b16 %v1836
    %v2525 = vunpack.c.l.b16 %v1837
    %v2526 = vunpack.c.h.b16 %v1837
    %v2527 = vunpack.c.l.b16 %v1838
    %v2528 = vunpack.c.h.b16 %v1838
    %v2529 = vunpack.c.l.b16 %v1839
    %v2530 = vunpack.c.h.b16 %v1839
    %v2531 = vunpack.c.l.b16 %v1840
    %v2532 = vunpack.c.h.b16 %v1840
    %v2533 = vunpack.c.l.b16 %v1841
    %v2534 = vunpack.c.h.b16 %v1841
    %v2535 = vunpack.c.l.b16 %v1842
    %v2536 = vunpack.c.h.b16 %v1842
    %v2537 = vunpack.c.l.b16 %v1843
    %v2538 = vunpack.c.h.b16 %v1843
    %v2539 = vunpack.c.l.b16 %v1844
    %v2540 = vunpack.c.h.b16 %v1844
    %v2541 = vunpack.c.l.b16 %v1845
    %v2542 = vunpack.c.h.b16 %v1845
    %v2543 = vunpack.c.l.b16 %v1846
    %v2544 = vunpack.c.h.b16 %v1846
    %v2545 = vunpack.c.l.b16 %v1847
    %v2546 = vunpack.c.h.b16 %v1847
    %v2547 = vunpack.c.l.b16 %v1848
    %v2548 = vunpack.c.h.b16 %v1848
    %v2549 = vunpack.c.l.b16 %v1849
    %v2550 = vunpack.c.h.b16 %v1849
    %v2551 = vunpack.c.l.b16 %v1850
    %v2552 = vunpack.c.h.b16 %v1850
    %v2553 = vunpack.c.l.b16 %v1851
    %v2554 = vunpack.c.h.b16 %v1851
    %v2555 = vunpack.c.l.b16 %v1852
    %v2556 = vunpack.c.h.b16 %v1852
    %v2557 = vunpack.c.l.b16 %v1853
    %v2558 = vunpack.c.h.b16 %v1853
    %v2559 = vunpack.c.l.b16 %v1854
    %v2560 = vunpack.c.h.b16 %v1854
    %v2561 = vunpack.c.l.b16 %v1855
    %v2562 = vunpack.c.h.b16 %v1855
    %v2563 = vunpack.c.l.b16 %v1856
    %v2564 = vunpack.c.h.b16 %v1856
    %v2565 = vunpack.c.l.b16 %v1857
    %v2566 = vunpack.c.h.b16 %v1857
    %v2567 = vunpack.c.l.b16 %v1858
    %v2568 = vunpack.c.h.b16 %v1858
    %v2569 = vunpack.c.l.b16 %v1859
    %v2570 = vunpack.c.h.b16 %v1859
    %v2571 = vunpack.c.l.b16 %v1860
    %v2572 = vunpack.c.h.b16 %v1860
    %v2573 = vunpack.c.l.b16 %v1861
    %v2574 = vunpack.c.h.b16 %v1861
    %v2575 = vunpack.c.l.b16 %v1862
    %v2576 = vunpack.c.h.b16 %v1862
    %v2577 = vunpack.c.l.b16 %v1863
    %v2578 = vunpack.c.h.b16 %v1863
    %v2579 = vunpack.c.l.b16 %v1864
    %v2580 = vunpack.c.h.b16 %v1864
    %v2581 = vunpack.c.l.b16 %v1865
    %v2582 = vunpack.c.h.b16 %v1865
    %v2583 = vunpack.c.l.b16 %v1866
    %v2584 = vunpack.c.h.b16 %v1866
    %v2585 = vunpack.c.l.b16 %v1867
    %v2586 = vunpack.c.h.b16 %v1867
    %v2587 = vunpack.c.l.b16 %v1868
    %v2588 = vunpack.c.h.b16 %v1868
    %v2589 = vunpack.c.l.b16 %v1869
    %v2590 = vunpack.c.h.b16 %v1869
    %v2591 = vunpack.c.l.b16 %v1870
    %v2592 = vunpack.c.h.b16 %v1870
    %v2593 = vunpack.c.l.b16 %v1871
    %v2594 = vunpack.c.h.b16 %v1871
    %v2595 = vunpack.c.l.b16 %v1872
    %v2596 = vunpack.c.h.b16 %v1872
    %v2597 = vunpack.c.l.b16 %v1873
    %v2598 = vunpack.c.h.b16 %v1873
    %v2599 = vunpack.c.l.b16 %v1874
    %v2600 = vunpack.c.h.b16 %v1874
    %v2601 = vunpack.c.l.b16 %v1875
    %v2602 = vunpack.c.h.b16 %v1875
    %v2603 = vunpack.c.l.b16 %v1876
    %v2604 = vunpack.c.h.b16 %v1876
    %v2605 = vunpack.c.l.b16 %v1877
    %v2606 = vunpack.c.h.b16 %v1877
    %v2607 = vunpack.c.l.b16 %v1878
    %v2608 = vunpack.c.h.b16 %v1878
    %v2609 = vunpack.c.l.b16 %v1879
    %v2610 = vunpack.c.h.b16 %v1879
    %v2611 = vunpack.c.l.b16 %v1880
    %v2612 = vunpack.c.h.b16 %v1880
    %v2613 = vunpack.c.l.b16 %v1881
    %v2614 = vunpack.c.h.b16 %v1881
    %v2615 = vunpack.c.l.b16 %v1882
    %v2616 = vunpack.c.h.b16 %v1882
    %v2617 = vunpack.c.l.b16 %v1883
    %v2618 = vunpack.c.h.b16 %v1883
    %v2619 = vunpack.c.l.b16 %v1884
    %v2620 = vunpack.c.h.b16 %v1884
    %v2621 = vunpack.c.l.b16 %v1885
    %v2622 = vunpack.c.h.b16 %v1885
    %v2623 = vunpack.c.l.b16 %v1886
    %v2624 = vunpack.c.h.b16 %v1886
    %v2625 = vunpack.c.l.b16 %v1887
    %v2626 = vunpack.c.h.b16 %v1887
    %v2627 = vunpack.c.l.b16 %v1888
    %v2628 = vunpack.c.h.b16 %v1888
    %v2629 = vunpack.c.l.b16 %v1889
    %v2630 = vunpack.c.h.b16 %v1889
    %v2631 = vunpack.c.l.b16 %v1890
    %v2632 = vunpack.c.h.b16 %v1890
    %v2633 = vunpack.c.l.b16 %v1891
    %v2634 = vunpack.c.h.b16 %v1891
    %v2635 = vunpack.c.l.b16 %v1892
    %v2636 = vunpack.c.h.b16 %v1892
    %v2637 = vunpack.c.l.b16 %v1893
    %v2638 = vunpack.c.h.b16 %v1893
    %v2639 = vunpack.c.l.b16 %v1894
    %v2640 = vunpack.c.h.b16 %v1894
    %v2641 = vunpack.c.l.b16 %v1895
    %v2642 = vunpack.c.h.b16 %v1895
    %v2643 = vunpack.c.l.b16 %v1896
    %v2644 = vunpack.c.h.b16 %v1896
    %v2645 = vunpack.c.l.b16 %v1897
    %v2646 = vunpack.c.h.b16 %v1897
    %v2647 = vunpack.c.l.b16 %v1898
    %v2648 = vunpack.c.h.b16 %v1898
    %v2649 = vunpack.c.l.b16 %v1899
    %v2650 = vunpack.c.h.b16 %v1899
    %v2651 = vunpack.c.l.b16 %v1900
    %v2652 = vunpack.c.h.b16 %v1900
    %v2653 = vunpack.c.l.b16 %v1901
    %v2654 = vunpack.c.h.b16 %v1901
    %v2655 = vunpack.c.l.b16 %v1902
    %v2656 = vunpack.c.h.b16 %v1902
    %v2657 = vunpack.c.l.b16 %v1903
    %v2658 = vunpack.c.h.b16 %v1903
    %v2659 = vunpack.c.l.b16 %v1904
    %v2660 = vunpack.c.h.b16 %v1904
    %v2661 = vunpack.c.l.b16 %v1905
    %v2662 = vunpack.c.h.b16 %v1905
    %v2663 = vunpack.c.l.b16 %v1906
    %v2664 = vunpack.c.h.b16 %v1906
    %v2665 = vunpack.c.l.b16 %v1907
    %v2666 = vunpack.c.h.b16 %v1907
    %v2667 = vunpack.c.l.b16 %v1908
    %v2668 = vunpack.c.h.b16 %v1908
    %v2669 = vunpack.c.l.b16 %v1909
    %v2670 = vunpack.c.h.b16 %v1909
    %v2671 = vunpack.c.l.b16 %v1910
    %v2672 = vunpack.c.h.b16 %v1910
    %v2673 = vunpack.c.l.b16 %v1911
    %v2674 = vunpack.c.h.b16 %v1911
    %v2675 = vunpack.c.l.b16 %v1912
    %v2676 = vunpack.c.h.b16 %v1912
    %v2677 = vunpack.c.l.b16 %v1913
    %v2678 = vunpack.c.h.b16 %v1913
    %v2679 = vunpack.c.l.b16 %v1914
    %v2680 = vunpack.c.h.b16 %v1914
    %v2681 = vunpack.c.l.b16 %v1915
    %v2682 = vunpack.c.h.b16 %v1915
    %v2683 = vunpack.c.l.b16 %v1916
    %v2684 = vunpack.c.h.b16 %v1916
    %v2685 = vunpack.c.l.b16 %v1917
    %v2686 = vunpack.c.h.b16 %v1917
    %v2687 = vunpack.c.l.b16 %v1918
    %v2688 = vunpack.c.h.b16 %v1918
    %v2689 = vunpack.c.l.b16 %v1919
    %v2690 = vunpack.c.h.b16 %v1919
    %v2691 = vunpack.c.l.b16 %v1920
    %v2692 = vunpack.c.h.b16 %v1920
    %v2693 = vunpack.c.l.b16 %v1921
    %v2694 = vunpack.c.h.b16 %v1921
    %v2695 = vunpack.c.l.b16 %v1922
    %v2696 = vunpack.c.h.b16 %v1922
    %v2697 = vunpack.c.l.b16 %v1923
    %v2698 = vunpack.c.h.b16 %v1923
    %v2699 = vunpack.c.l.b16 %v1924
    %v2700 = vunpack.c.h.b16 %v1924
    %v2701 = vunpack.c.l.b16 %v1925
    %v2702 = vunpack.c.h.b16 %v1925
    %v2703 = vunpack.c.l.b16 %v1926
    %v2704 = vunpack.c.h.b16 %v1926
    %v2705 = vunpack.c.l.b16 %v1927
    %v2706 = vunpack.c.h.b16 %v1927
    %v2707 = vunpack.c.l.b16 %v1928
    %v2708 = vunpack.c.h.b16 %v1928
    %v2709 = vunpack.c.l.b16 %v1929
    %v2710 = vunpack.c.h.b16 %v1929
    %v2711 = vunpack.c.l.b16 %v1930
    %v2712 = vunpack.c.h.b16 %v1930
    %v2713 = vunpack.c.l.b16 %v1931
    %v2714 = vunpack.c.h.b16 %v1931
    %v2715 = vunpack.c.l.b16 %v1932
    %v2716 = vunpack.c.h.b16 %v1932
    %v2717 = vunpack.c.l.b16 %v1933
    %v2718 = vunpack.c.h.b16 %v1933
    %v2719 = vunpack.c.l.b16 %v1934
    %v2720 = vunpack.c.h.b16 %v1934
    %v2721 = vunpack.c.l.b16 %v1935
    %v2722 = vunpack.c.h.b16 %v1935
    %v2723 = vunpack.c.l.b16 %v1936
    %v2724 = vunpack.c.h.b16 %v1936
    %v2725 = vunpack.c.l.b16 %v1937
    %v2726 = vunpack.c.h.b16 %v1937
    %v2727 = vunpack.c.l.b16 %v1938
    %v2728 = vunpack.c.h.b16 %v1938
    %v2729 = vpack.c.b16 %v2221, %v2217
    %v2730 = vpack.c.b16 %v2222, %v2218
    %v2731 = vpack.c.b16 %v2223, %v2219
    %v2732 = vpack.c.b16 %v2224, %v2220
    %v2733 = vpack.c.b16 %v2229, %v2225
    %v2734 = vpack.c.b16 %v2230, %v2226
    %v2735 = vpack.c.b16 %v2231, %v2227
    %v2736 = vpack.c.b16 %v2232, %v2228
    %v2737 = vpack.c.b16 %v2237, %v2233
    %v2738 = vpack.c.b16 %v2238, %v2234
    %v2739 = vpack.c.b16 %v2239, %v2235
    %v2740 = vpack.c.b16 %v2240, %v2236
    %v2741 = vpack.c.b16 %v2245, %v2241
    %v2742 = vpack.c.b16 %v2246, %v2242
    %v2743 = vpack.c.b16 %v2247, %v2243
    %v2744 = vpack.c.b16 %v2248, %v2244
    %v2745 = vpack.c.b16 %v2253, %v2249
    %v2746 = vpack.c.b16 %v2254, %v2250
    %v2747 = vpack.c.b16 %v2255, %v2251
    %v2748 = vpack.c.b16 %v2256, %v2252
    %v2749 = vpack.c.b16 %v2261, %v2257
    %v2750 = vpack.c.b16 %v2262, %v2258
    %v2751 = vpack.c.b16 %v2263, %v2259
    %v2752 = vpack.c.b16 %v2264, %v2260
    %v2753 = vpack.c.b16 %v2269, %v2265
    %v2754 = vpack.c.b16 %v2270, %v2266
    %v2755 = vpack.c.b16 %v2271, %v2267
    %v2756 = vpack.c.b16 %v2272, %v2268
    %v2757 = vpack.c.b16 %v2277, %v2273
    %v2758 = vpack.c.b16 %v2278, %v2274
    %v2759 = vpack.c.b16 %v2279, %v2275
    %v2760 = vpack.c.b16 %v2280, %v2276
    %v2761 = vpack.c.b16 %v2285, %v2281
    %v2762 = vpack.c.b16 %v2286, %v2282
    %v2763 = vpack.c.b16 %v2287, %v2283
    %v2764 = vpack.c.b16 %v2288, %v2284
    %v2765 = vpack.c.b16 %v2293, %v2289
    %v2766 = vpack.c.b16 %v2294, %v2290
    %v2767 = vpack.c.b16 %v2295, %v2291
    %v2768 = vpack.c.b16 %v2296, %v2292
    %v2769 = vpack.c.b16 %v2301, %v2297
    %v2770 = vpack.c.b16 %v2302, %v2298
    %v2771 = vpack.c.b16 %v2303, %v2299
    %v2772 = vpack.c.b16 %v2304, %v2300
    %v2773 = vpack.c.b16 %v2309, %v2305
    %v2774 = vpack.c.b16 %v2310, %v2306
    %v2775 = vpack.c.b16 %v2311, %v2307
    %v2776 = vpack.c.b16 %v2312, %v2308
    %v2777 = vpack.c.b16 %v2317, %v2313
    %v2778 = vpack.c.b16 %v2318, %v2314
    %v2779 = vpack.c.b16 %v2319, %v2315
    %v2780 = vpack.c.b16 %v2320, %v2316
    %v2781 = vpack.c.b16 %v2325, %v2321
    %v2782 = vpack.c.b16 %v2326, %v2322
    %v2783 = vpack.c.b16 %v2327, %v2323
    %v2784 = vpack.c.b16 %v2328, %v2324
    %v2785 = vpack.c.b16 %v2333, %v2329
    %v2786 = vpack.c.b16 %v2334, %v2330
    %v2787 = vpack.c.b16 %v2335, %v2331
    %v2788 = vpack.c.b16 %v2336, %v2332
    %v2789 = vpack.c.b16 %v2341, %v2337
    %v2790 = vpack.c.b16 %v2342, %v2338
    %v2791 = vpack.c.b16 %v2343, %v2339
    %v2792 = vpack.c.b16 %v2344, %v2340
    %v2793 = vpack.c.b16 %v2349, %v2345
    %v2794 = vpack.c.b16 %v2350, %v2346
    %v2795 = vpack.c.b16 %v2351, %v2347
    %v2796 = vpack.c.b16 %v2352, %v2348
    %v2797 = vpack.c.b16 %v2357, %v2353
    %v2798 = vpack.c.b16 %v2358, %v2354
    %v2799 = vpack.c.b16 %v2359, %v2355
    %v2800 = vpack.c.b16 %v2360, %v2356
    %v2801 = vpack.c.b16 %v2365, %v2361
    %v2802 = vpack.c.b16 %v2366, %v2362
    %v2803 = vpack.c.b16 %v2367, %v2363
    %v2804 = vpack.c.b16 %v2368, %v2364
    %v2805 = vpack.c.b16 %v2373, %v2369
    %v2806 = vpack.c.b16 %v2374, %v2370
    %v2807 = vpack.c.b16 %v2375, %v2371
    %v2808 = vpack.c.b16 %v2376, %v2372
    %v2809 = vpack.c.b16 %v2381, %v2377
    %v2810 = vpack.c.b16 %v2382, %v2378
    %v2811 = vpack.c.b16 %v2383, %v2379
    %v2812 = vpack.c.b16 %v2384, %v2380
    %v2813 = vpack.c.b16 %v2389, %v2385
    %v2814 = vpack.c.b16 %v2390, %v2386
    %v2815 = vpack.c.b16 %v2391, %v2387
    %v2816 = vpack.c.b16 %v2392, %v2388
    %v2817 = vpack.c.b16 %v2397, %v2393
    %v2818 = vpack.c.b16 %v2398, %v2394
    %v2819 = vpack.c.b16 %v2399, %v2395
    %v2820 = vpack.c.b16 %v2400, %v2396
    %v2821 = vpack.c.b16 %v2405, %v2401
    %v2822 = vpack.c.b16 %v2406, %v2402
    %v2823 = vpack.c.b16 %v2407, %v2403
    %v2824 = vpack.c.b16 %v2408, %v2404
    %v2825 = vpack.c.b16 %v2413, %v2409
    %v2826 = vpack.c.b16 %v2414, %v2410
    %v2827 = vpack.c.b16 %v2415, %v2411
    %v2828 = vpack.c.b16 %v2416, %v2412
    %v2829 = vpack.c.b16 %v2421, %v2417
    %v2830 = vpack.c.b16 %v2422, %v2418
    %v2831 = vpack.c.b16 %v2423, %v2419
    %v2832 = vpack.c.b16 %v2424, %v2420
    %v2833 = vpack.c.b16 %v2429, %v2425
    %v2834 = vpack.c.b16 %v2430, %v2426
    %v2835 = vpack.c.b16 %v2431, %v2427
    %v2836 = vpack.c.b16 %v2432, %v2428
    %v2837 = vpack.c.b16 %v2437, %v2433
    %v2838 = vpack.c.b16 %v2438, %v2434
    %v2839 = vpack.c.b16 %v2439, %v2435
    %v2840 = vpack.c.b16 %v2440, %v2436
    %v2841 = vpack.c.b16 %v2445, %v2441
    %v2842 = vpack.c.b16 %v2446, %v2442
    %v2843 = vpack.c.b16 %v2447, %v2443
    %v2844 = vpack.c.b16 %v2448, %v2444
    %v2845 = vpack.c.b16 %v2453, %v2449
    %v2846 = vpack.c.b16 %v2454, %v2450
    %v2847 = vpack.c.b16 %v2455, %v2451
    %v2848 = vpack.c.b16 %v2456, %v2452
    %v2849 = vpack.c.b16 %v2461, %v2457
    %v2850 = vpack.c.b16 %v2462, %v2458
    %v2851 = vpack.c.b16 %v2463, %v2459
    %v2852 = vpack.c.b16 %v2464, %v2460
    %v2853 = vpack.c.b16 %v2469, %v2465
    %v2854 = vpack.c.b16 %v2470, %v2466
    %v2855 = vpack.c.b16 %v2471, %v2467
    %v2856 = vpack.c.b16 %v2472, %v2468
    %v2857 = vpack.c.b16 %v2477, %v2473
    %v2858 = vpack.c.b16 %v2478, %v2474
    %v2859 = vpack.c.b16 %v2479, %v2475
    %v2860 = vpack.c.b16 %v2480, %v2476
    %v2861 = vpack.c.b16 %v2485, %v2481
    %v2862 = vpack.c.b16 %v2486, %v2482
    %v2863 = vpack.c.b16 %v2487, %v2483
    %v2864 = vpack.c.b16 %v2488, %v2484
    %v2865 = vpack.c.b16 %v2493, %v2489
    %v2866 = vpack.c.b16 %v2494, %v2490
    %v2867 = vpack.c.b16 %v2495, %v2491
    %v2868 = vpack.c.b16 %v2496, %v2492
    %v2869 = vpack.c.b16 %v2501, %v2497
    %v2870 = vpack.c.b16 %v2502, %v2498
    %v2871 = vpack.c.b16 %v2503, %v2499
    %v2872 = vpack.c.b16 %v2504, %v2500
    %v2873 = vpack.c.b16 %v2509, %v2505
    %v2874 = vpack.c.b16 %v2510, %v2506
    %v2875 = vpack.c.b16 %v2511, %v2507
    %v2876 = vpack.c.b16 %v2512, %v2508
    %v2877 = vpack.c.b16 %v2517, %v2513
    %v2878 = vpack.c.b16 %v2518, %v2514
    %v2879 = vpack.c.b16 %v2519, %v2515
    %v2880 = vpack.c.b16 %v2520, %v2516
    %v2881 = vpack.c.b16 %v2525, %v2521
    %v2882 = vpack.c.b16 %v2526, %v2522
    %v2883 = vpack.c.b16 %v2527, %v2523
    %v2884 = vpack.c.b16 %v2528, %v2524
    %v2885 = vpack.c.b16 %v2533, %v2529
    %v2886 = vpack.c.b16 %v2534, %v2530
    %v2887 = vpack.c.b16 %v2535, %v2531
    %v2888 = vpack.c.b16 %v2536, %v2532
    %v2889 = vpack.c.b16 %v2541, %v2537
    %v2890 = vpack.c.b16 %v2542, %v2538
    %v2891 = vpack.c.b16 %v2543, %v2539
    %v2892 = vpack.c.b16 %v2544, %v2540
    %v2893 = vpack.c.b16 %v2549, %v2545
    %v2894 = vpack.c.b16 %v2550, %v2546
    %v2895 = vpack.c.b16 %v2551, %v2547
    %v2896 = vpack.c.b16 %v2552, %v2548
    %v2897 = vpack.c.b16 %v2557, %v2553
    %v2898 = vpack.c.b16 %v2558, %v2554
    %v2899 = vpack.c.b16 %v2559, %v2555
    %v2900 = vpack.c.b16 %v2560, %v2556
    %v2901 = vpack.c.b16 %v2565, %v2561
    %v2902 = vpack.c.b16 %v2566, %v2562
    %v2903 = vpack.c.b16 %v2567, %v2563
    %v2904 = vpack.c.b16 %v2568, %v2564
    %v2905 = vpack.c.b16 %v2573, %v2569
    %v2906 = vpack.c.b16 %v2574, %v2570
    %v2907 = vpack.c.b16 %v2575, %v2571
    %v2908 = vpack.c.b16 %v2576, %v2572
    %v2909 = vpack.c.b16 %v2581, %v2577
    %v2910 = vpack.c.b16 %v2582, %v2578
    %v2911 = vpack.c.b16 %v2583, %v2579
    %v2912 = vpack.c.b16 %v2584, %v2580
    %v2913 = vpack.c.b16 %v2589, %v2585
    %v2914 = vpack.c.b16 %v2590, %v2586
    %v2915 = vpack.c.b16 %v2591, %v2587
    %v2916 = vpack.c.b16 %v2592, %v2588
    %v2917 = vpack.c.b16 %v2597, %v2593
    %v2918 = vpack.c.b16 %v2598, %v2594
    %v2919 = vpack.c.b16 %v2599, %v2595
    %v2920 = vpack.c.b16 %v2600, %v2596
    %v2921 = vpack.c.b16 %v2605, %v2601
    %v2922 = vpack.c.b16 %v2606, %v2602
    %v2923 = vpack.c.b16 %v2607, %v2603
    %v2924 = vpack.c.b16 %v2608, %v2604
    %v2925 = vpack.c.b16 %v2613, %v2609
    %v2926 = vpack.c.b16 %v2614, %v2610
    %v2927 = vpack.c.b16 %v2615, %v2611
    %v2928 = vpack.c.b16 %v2616, %v2612
    %v2929 = vpack.c.b16 %v2621, %v2617
    %v2930 = vpack.c.b16 %v2622, %v2618
    %v2931 = vpack.c.b16 %v2623, %v2619
    %v2932 = vpack.c.b16 %v2624, %v2620
    %v2933 = vpack.c.b16 %v2629, %v2625
    %v2934 = vpack.c.b16 %v2630, %v2626
    %v2935 = vpack.c.b16 %v2631, %v2627
    %v2936 = vpack.c.b16 %v2632, %v2628
    %v2937 = vpack.c.b16 %v2637, %v2633
    %v2938 = vpack.c.b16 %v2638, %v2634
    %v2939 = vpack.c.b16 %v2639, %v2635
    %v2940 = vpack.c.b16 %v2640, %v2636
    %v2941 = vpack.c.b16 %v2645, %v2641
    %v2942 = vpack.c.b16 %v2646, %v2642
    %v2943 = vpack.c.b16 %v2647, %v2643
    %v2944 = vpack.c.b16 %v2648, %v2644
    %v2945 = vpack.c.b16 %v2653, %v2649
    %v2946 = vpack.c.b16 %v2654, %v2650
    %v2947 = vpack.c.b16 %v2655, %v2651
    %v2948 = vpack.c.b16 %v2656, %v2652
    %v2949 = vpack.c.b16 %v2661, %v2657
    %v2950 = vpack.c.b16 %v2662, %v2658
    %v2951 = vpack.c.b16 %v2663, %v2659
    %v2952 = vpack.c.b16 %v2664, %v2660
    %v2953 = vpack.c.b16 %v2669, %v2665
    %v2954 = vpack.c.b16 %v2670, %v2666
    %v2955 = vpack.c.b16 %v2671, %v2667
    %v2956 = vpack.c.b16 %v2672, %v2668
    %v2957 = vpack.c.b16 %v2677, %v2673
    %v2958 = vpack.c.b16 %v2678, %v2674
    %v2959 = vpack.c.b16 %v2679, %v2675
    %v2960 = vpack.c.b16 %v2680, %v2676
    %v2961 = vpack.c.b16 %v2685, %v2681
    %v2962 = vpack.c.b16 %v2686, %v2682
    %v2963 = vpack.c.b16 %v2687, %v2683
    %v2964 = vpack.c.b16 %v2688, %v2684
    %v2965 = vpack.c.b16 %v2693, %v2689
    %v2966 = vpack.c.b16 %v2694, %v2690
    %v2967 = vpack.c.b16 %v2695, %v2691
    %v2968 = vpack.c.b16 %v2696, %v2692
    %v2969 = vpack.c.b16 %v2701, %v2697
    %v2970 = vpack.c.b16 %v2702, %v2698
    %v2971 = vpack.c.b16 %v2703, %v2699
    %v2972 = vpack.c.b16 %v2704, %v2700
    %v2973 = vpack.c.b16 %v2709, %v2705
    %v2974 = vpack.c.b16 %v2710, %v2706
    %v2975 = vpack.c.b16 %v2711, %v2707
    %v2976 = vpack.c.b16 %v2712, %v2708
    %v2977 = vpack.c.b16 %v2717, %v2713
    %v2978 = vpack.c.b16 %v2718, %v2714
    %v2979 = vpack.c.b16 %v2719, %v2715
    %v2980 = vpack.c.b16 %v2720, %v2716
    %v2981 = vpack.c.b16 %v2725, %v2721
    %v2982 = vpack.c.b16 %v2726, %v2722
    %v2983 = vpack.c.b16 %v2727, %v2723
    %v2984 = vpack.c.b16 %v2728, %v2724
    %3241 = vmatprep.subr.bf16.mxu0 %v2730
    %3242 = vmatpush1.bf16.msra.mxu0 %v2729
    %3243 = vmatprep.subr.bf16.mxu0 %v2734
    %3244 = vmatpush1.bf16.msra.mxu0 %v2733
    %3245 = vmatprep.subr.bf16.mxu0 %v2738
    %3246 = vmatpush1.bf16.msra.mxu0 %v2737
    %3247 = vmatprep.subr.bf16.mxu0 %v2742
    %3248 = vmatpush1.bf16.msra.mxu0 %v2741
    %3249 = vmatprep.subr.bf16.mxu0 %v2746
    %3250 = vmatpush1.bf16.msra.mxu0 %v2745
    %3251 = vmatprep.subr.bf16.mxu0 %v2750
    %3252 = vmatpush1.bf16.msra.mxu0 %v2749
    %3253 = vmatprep.subr.bf16.mxu0 %v2754
    %3254 = vmatpush1.bf16.msra.mxu0 %v2753
    %3255 = vmatprep.subr.bf16.mxu0 %v2758
    %3256 = vmatpush1.bf16.msra.mxu0 %v2757
    %3257 = vmatprep.subr.bf16.mxu0 %v2762
    %3258 = vmatpush1.bf16.msra.mxu0 %v2761
    %3259 = vmatprep.subr.bf16.mxu0 %v2766
    %3260 = vmatpush1.bf16.msra.mxu0 %v2765
    %3261 = vmatprep.subr.bf16.mxu0 %v2770
    %3262 = vmatpush1.bf16.msra.mxu0 %v2769
    %3263 = vmatprep.subr.bf16.mxu0 %v2774
    %3264 = vmatpush1.bf16.msra.mxu0 %v2773
    %3265 = vmatprep.subr.bf16.mxu0 %v2778
    %3266 = vmatpush1.bf16.msra.mxu0 %v2777
    %3267 = vmatprep.subr.bf16.mxu0 %v2782
    %3268 = vmatpush1.bf16.msra.mxu0 %v2781
    %3269 = vmatprep.subr.bf16.mxu0 %v2786
    %3270 = vmatpush1.bf16.msra.mxu0 %v2785
    %3271 = vmatprep.subr.bf16.mxu0 %v2790
    %3272 = vmatpush1.bf16.msra.mxu0 %v2789
    %3273 = vmatprep.mubr.bf16.mxu0 %v1676
    %3274 = vmatmul.mubr.bf16.gmra.mrb[0].mxu0 %v1675
    %v3275 = vpop.f32.mrb[0].mxu0
    %v3276 = vadd.f32 %v1944, %v3275
    %v3277 = vpop.f32.mrb[0].mxu0
    %v3278 = vadd.f32 %v1948, %v3277
    %v3279 = vpop.f32.mrb[0].mxu0
    %v3280 = vpop.f32.mrb[0].mxu0
    %3281 = vdwg.mxu0
    %3282 = vmatprep.subr.bf16.mxu0 %v2794
    %3283 = vmatpush1.bf16.msra.mxu0 %v2793
    %3284 = vmatprep.subr.bf16.mxu0 %v2798
    %3285 = vmatpush1.bf16.msra.mxu0 %v2797
    %3286 = vmatprep.subr.bf16.mxu0 %v2802
    %3287 = vmatpush1.bf16.msra.mxu0 %v2801
    %3288 = vmatprep.subr.bf16.mxu0 %v2806
    %3289 = vmatpush1.bf16.msra.mxu0 %v2805
    %3290 = vmatprep.subr.bf16.mxu0 %v2810
    %3291 = vmatpush1.bf16.msra.mxu0 %v2809
    %3292 = vmatprep.subr.bf16.mxu0 %v2814
    %3293 = vmatpush1.bf16.msra.mxu0 %v2813
    %3294 = vmatprep.subr.bf16.mxu0 %v2818
    %3295 = vmatpush1.bf16.msra.mxu0 %v2817
    %3296 = vmatprep.subr.bf16.mxu0 %v2822
    %3297 = vmatpush1.bf16.msra.mxu0 %v2821
    %3298 = vmatprep.subr.bf16.mxu0 %v2826
    %3299 = vmatpush1.bf16.msra.mxu0 %v2825
    %3300 = vmatprep.subr.bf16.mxu0 %v2830
    %3301 = vmatpush1.bf16.msra.mxu0 %v2829
    %3302 = vmatprep.subr.bf16.mxu0 %v2834
    %3303 = vmatpush1.bf16.msra.mxu0 %v2833
    %3304 = vmatprep.subr.bf16.mxu0 %v2838
    %3305 = vmatpush1.bf16.msra.mxu0 %v2837
    %3306 = vmatprep.subr.bf16.mxu0 %v2842
    %3307 = vmatpush1.bf16.msra.mxu0 %v2841
    %3308 = vmatprep.subr.bf16.mxu0 %v2846
    %3309 = vmatpush1.bf16.msra.mxu0 %v2845
    %3310 = vmatprep.subr.bf16.mxu0 %v2850
    %3311 = vmatpush1.bf16.msra.mxu0 %v2849
    %3312 = vmatprep.subr.bf16.mxu0 %v2854
    %3313 = vmatpush1.bf16.msra.mxu0 %v2853
    %3314 = vmatprep.mubr.bf16.mxu0 %v1678
    %3315 = vmatmul.mubr.bf16.gmra.mrb[0].mxu0 %v1677
    %v3316 = vpop.f32.mrb[0].mxu0
    %v3317 = vadd.f32 %v3276, %v3316
    %v3318 = vpop.f32.mrb[0].mxu0
    %v3319 = vadd.f32 %v3278, %v3318
    %v3320 = vpop.f32.mrb[0].mxu0
    %v3321 = vpop.f32.mrb[0].mxu0
    %3322 = vdwg.mxu0
    %3323 = vmatprep.subr.bf16.mxu0 %v2858
    %3324 = vmatpush1.bf16.msra.mxu0 %v2857
    %3325 = vmatprep.subr.bf16.mxu0 %v2862
    %3326 = vmatpush1.bf16.msra.mxu0 %v2861
    %3327 = vmatprep.subr.bf16.mxu0 %v2866
    %3328 = vmatpush1.bf16.msra.mxu0 %v2865
    %3329 = vmatprep.subr.bf16.mxu0 %v2870
    %3330 = vmatpush1.bf16.msra.mxu0 %v2869
    %3331 = vmatprep.subr.bf16.mxu0 %v2874
    %3332 = vmatpush1.bf16.msra.mxu0 %v2873
    %3333 = vmatprep.subr.bf16.mxu0 %v2878
    %3334 = vmatpush1.bf16.msra.mxu0 %v2877
    %3335 = vmatprep.subr.bf16.mxu0 %v2882
    %3336 = vmatpush1.bf16.msra.mxu0 %v2881
    %3337 = vmatprep.subr.bf16.mxu0 %v2886
    %3338 = vmatpush1.bf16.msra.mxu0 %v2885
    %3339 = vmatprep.subr.bf16.mxu0 %v2890
    %3340 = vmatpush1.bf16.msra.mxu0 %v2889
    %3341 = vmatprep.subr.bf16.mxu0 %v2894
    %3342 = vmatpush1.bf16.msra.mxu0 %v2893
    %3343 = vmatprep.subr.bf16.mxu0 %v2898
    %3344 = vmatpush1.bf16.msra.mxu0 %v2897
    %3345 = vmatprep.subr.bf16.mxu0 %v2902
    %3346 = vmatpush1.bf16.msra.mxu0 %v2901
    %3347 = vmatprep.subr.bf16.mxu0 %v2906
    %3348 = vmatpush1.bf16.msra.mxu0 %v2905
    %3349 = vmatprep.subr.bf16.mxu0 %v2910
    %3350 = vmatpush1.bf16.msra.mxu0 %v2909
    %3351 = vmatprep.subr.bf16.mxu0 %v2914
    %3352 = vmatpush1.bf16.msra.mxu0 %v2913
    %3353 = vmatprep.subr.bf16.mxu0 %v2918
    %3354 = vmatpush1.bf16.msra.mxu0 %v2917
    %3355 = vmatprep.mubr.bf16.mxu0 %v1680
    %3356 = vmatmul.mubr.bf16.gmra.mrb[0].mxu0 %v1679
    %v3357 = vpop.f32.mrb[0].mxu0
    %v3358 = vadd.f32 %v3317, %v3357
    %v3359 = vpop.f32.mrb[0].mxu0
    %v3360 = vadd.f32 %v3319, %v3359
    %v3361 = vpop.f32.mrb[0].mxu0
    %v3362 = vpop.f32.mrb[0].mxu0
    %3363 = vdwg.mxu0
    %3364 = vmatprep.subr.bf16.mxu0 %v2922
    %3365 = vmatpush1.bf16.msra.mxu0 %v2921
    %3366 = vmatprep.subr.bf16.mxu0 %v2926
    %3367 = vmatpush1.bf16.msra.mxu0 %v2925
    %3368 = vmatprep.subr.bf16.mxu0 %v2930
    %3369 = vmatpush1.bf16.msra.mxu0 %v2929
    %3370 = vmatprep.subr.bf16.mxu0 %v2934
    %3371 = vmatpush1.bf16.msra.mxu0 %v2933
    %3372 = vmatprep.subr.bf16.mxu0 %v2938
    %3373 = vmatpush1.bf16.msra.mxu0 %v2937
    %3374 = vmatprep.subr.bf16.mxu0 %v2942
    %3375 = vmatpush1.bf16.msra.mxu0 %v2941
    %3376 = vmatprep.subr.bf16.mxu0 %v2946
    %3377 = vmatpush1.bf16.msra.mxu0 %v2945
    %3378 = vmatprep.subr.bf16.mxu0 %v2950
    %3379 = vmatpush1.bf16.msra.mxu0 %v2949
    %3380 = vmatprep.subr.bf16.mxu0 %v2954
    %3381 = vmatpush1.bf16.msra.mxu0 %v2953
    %3382 = vmatprep.subr.bf16.mxu0 %v2958
    %3383 = vmatpush1.bf16.msra.mxu0 %v2957
    %3384 = vmatprep.subr.bf16.mxu0 %v2962
    %3385 = vmatpush1.bf16.msra.mxu0 %v2961
    %3386 = vmatprep.subr.bf16.mxu0 %v2966
    %3387 = vmatpush1.bf16.msra.mxu0 %v2965
    %3388 = vmatprep.subr.bf16.mxu0 %v2970
    %3389 = vmatpush1.bf16.msra.mxu0 %v2969
    %3390 = vmatprep.subr.bf16.mxu0 %v2974
    %3391 = vmatpush1.bf16.msra.mxu0 %v2973
    %3392 = vmatprep.subr.bf16.mxu0 %v2978
    %3393 = vmatpush1.bf16.msra.mxu0 %v2977
    %3394 = vmatprep.subr.bf16.mxu0 %v2982
    %3395 = vmatpush1.bf16.msra.mxu0 %v2981
    %3396 = vmatprep.mubr.bf16.mxu0 %v1682
    %3397 = vmatmul.mubr.bf16.gmra.mrb[0].mxu0 %v1681
    %v3398 = vpop.f32.mrb[0].mxu0
    %v3399 = vadd.f32 %v3358, %v3398
    %v3400 = vpop.f32.mrb[0].mxu0
    %v3401 = vadd.f32 %v3360, %v3400
    %v3402 = vpop.f32.mrb[0].mxu0
    %v3403 = vpop.f32.mrb[0].mxu0
    %3404 = vdwg.mxu0
    %3405 = vmatprep.subr.bf16.mxu0 %v2732
    %3406 = vmatpush1.bf16.msra.mxu0 %v2731
    %3407 = vmatprep.subr.bf16.mxu0 %v2736
    %3408 = vmatpush1.bf16.msra.mxu0 %v2735
    %3409 = vmatprep.subr.bf16.mxu0 %v2740
    %3410 = vmatpush1.bf16.msra.mxu0 %v2739
    %3411 = vmatprep.subr.bf16.mxu0 %v2744
    %3412 = vmatpush1.bf16.msra.mxu0 %v2743
    %3413 = vmatprep.subr.bf16.mxu0 %v2748
    %3414 = vmatpush1.bf16.msra.mxu0 %v2747
    %3415 = vmatprep.subr.bf16.mxu0 %v2752
    %3416 = vmatpush1.bf16.msra.mxu0 %v2751
    %3417 = vmatprep.subr.bf16.mxu0 %v2756
    %3418 = vmatpush1.bf16.msra.mxu0 %v2755
    %3419 = vmatprep.subr.bf16.mxu0 %v2760
    %3420 = vmatpush1.bf16.msra.mxu0 %v2759
    %3421 = vmatprep.subr.bf16.mxu0 %v2764
    %3422 = vmatpush1.bf16.msra.mxu0 %v2763
    %3423 = vmatprep.subr.bf16.mxu0 %v2768
    %3424 = vmatpush1.bf16.msra.mxu0 %v2767
    %3425 = vmatprep.subr.bf16.mxu0 %v2772
    %3426 = vmatpush1.bf16.msra.mxu0 %v2771
    %3427 = vmatprep.subr.bf16.mxu0 %v2776
    %3428 = vmatpush1.bf16.msra.mxu0 %v2775
    %3429 = vmatprep.subr.bf16.mxu0 %v2780
    %3430 = vmatpush1.bf16.msra.mxu0 %v2779
    %3431 = vmatprep.subr.bf16.mxu0 %v2784
    %3432 = vmatpush1.bf16.msra.mxu0 %v2783
    %3433 = vmatprep.subr.bf16.mxu0 %v2788
    %3434 = vmatpush1.bf16.msra.mxu0 %v2787
    %3435 = vmatprep.subr.bf16.mxu0 %v2792
    %3436 = vmatpush1.bf16.msra.mxu0 %v2791
    %3437 = vmatprep.mubr.bf16.mxu0 %v1676
    %3438 = vmatmul.mubr.bf16.gmra.mrb[0].mxu0 %v1675
    %v3439 = vpop.f32.mrb[0].mxu0
    %v3440 = vadd.f32 %v1952, %v3439
    %v3441 = vpop.f32.mrb[0].mxu0
    %v3442 = vadd.f32 %v1956, %v3441
    %v3443 = vpop.f32.mrb[0].mxu0
    %v3444 = vpop.f32.mrb[0].mxu0
    %3445 = vdwg.mxu0
    %3446 = vmatprep.subr.bf16.mxu0 %v2796
    %3447 = vmatpush1.bf16.msra.mxu0 %v2795
    %3448 = vmatprep.subr.bf16.mxu0 %v2800
    %3449 = vmatpush1.bf16.msra.mxu0 %v2799
    %3450 = vmatprep.subr.bf16.mxu0 %v2804
    %3451 = vmatpush1.bf16.msra.mxu0 %v2803
    %3452 = vmatprep.subr.bf16.mxu0 %v2808
    %3453 = vmatpush1.bf16.msra.mxu0 %v2807
    %3454 = vmatprep.subr.bf16.mxu0 %v2812
    %3455 = vmatpush1.bf16.msra.mxu0 %v2811
    %3456 = vmatprep.subr.bf16.mxu0 %v2816
    %3457 = vmatpush1.bf16.msra.mxu0 %v2815
    %3458 = vmatprep.subr.bf16.mxu0 %v2820
    %3459 = vmatpush1.bf16.msra.mxu0 %v2819
    %3460 = vmatprep.subr.bf16.mxu0 %v2824
    %3461 = vmatpush1.bf16.msra.mxu0 %v2823
    %3462 = vmatprep.subr.bf16.mxu0 %v2828
    %3463 = vmatpush1.bf16.msra.mxu0 %v2827
    %3464 = vmatprep.subr.bf16.mxu0 %v2832
    %3465 = vmatpush1.bf16.msra.mxu0 %v2831
    %3466 = vmatprep.subr.bf16.mxu0 %v2836
    %3467 = vmatpush1.bf16.msra.mxu0 %v2835
    %3468 = vmatprep.subr.bf16.mxu0 %v2840
    %3469 = vmatpush1.bf16.msra.mxu0 %v2839
    %3470 = vmatprep.subr.bf16.mxu0 %v2844
    %3471 = vmatpush1.bf16.msra.mxu0 %v2843
    %3472 = vmatprep.subr.bf16.mxu0 %v2848
    %3473 = vmatpush1.bf16.msra.mxu0 %v2847
    %3474 = vmatprep.subr.bf16.mxu0 %v2852
    %3475 = vmatpush1.bf16.msra.mxu0 %v2851
    %3476 = vmatprep.subr.bf16.mxu0 %v2856
    %3477 = vmatpush1.bf16.msra.mxu0 %v2855
    %3478 = vmatprep.mubr.bf16.mxu0 %v1678
    %3479 = vmatmul.mubr.bf16.gmra.mrb[0].mxu0 %v1677
    %v3480 = vpop.f32.mrb[0].mxu0
    %v3481 = vadd.f32 %v3440, %v3480
    %v3482 = vpop.f32.mrb[0].mxu0
    %v3483 = vadd.f32 %v3442, %v3482
    %v3484 = vpop.f32.mrb[0].mxu0
    %v3485 = vpop.f32.mrb[0].mxu0
    %3486 = vdwg.mxu0
    %3487 = vmatprep.subr.bf16.mxu0 %v2860
    %3488 = vmatpush1.bf16.msra.mxu0 %v2859
    %3489 = vmatprep.subr.bf16.mxu0 %v2864
    %3490 = vmatpush1.bf16.msra.mxu0 %v2863
    %3491 = vmatprep.subr.bf16.mxu0 %v2868
    %3492 = vmatpush1.bf16.msra.mxu0 %v2867
    %3493 = vmatprep.subr.bf16.mxu0 %v2872
    %3494 = vmatpush1.bf16.msra.mxu0 %v2871
    %3495 = vmatprep.subr.bf16.mxu0 %v2876
    %3496 = vmatpush1.bf16.msra.mxu0 %v2875
    %3497 = vmatprep.subr.bf16.mxu0 %v2880
    %3498 = vmatpush1.bf16.msra.mxu0 %v2879
    %3499 = vmatprep.subr.bf16.mxu0 %v2884
    %3500 = vmatpush1.bf16.msra.mxu0 %v2883
    %3501 = vmatprep.subr.bf16.mxu0 %v2888
    %3502 = vmatpush1.bf16.msra.mxu0 %v2887
    %3503 = vmatprep.subr.bf16.mxu0 %v2892
    %3504 = vmatpush1.bf16.msra.mxu0 %v2891
    %3505 = vmatprep.subr.bf16.mxu0 %v2896
    %3506 = vmatpush1.bf16.msra.mxu0 %v2895
    %3507 = vmatprep.subr.bf16.mxu0 %v2900
    %3508 = vmatpush1.bf16.msra.mxu0 %v2899
    %3509 = vmatprep.subr.bf16.mxu0 %v2904
    %3510 = vmatpush1.bf16.msra.mxu0 %v2903
    %3511 = vmatprep.subr.bf16.mxu0 %v2908
    %3512 = vmatpush1.bf16.msra.mxu0 %v2907
    %3513 = vmatprep.subr.bf16.mxu0 %v2912
    %3514 = vmatpush1.bf16.msra.mxu0 %v2911
    %3515 = vmatprep.subr.bf16.mxu0 %v2916
    %3516 = vmatpush1.bf16.msra.mxu0 %v2915
    %3517 = vmatprep.subr.bf16.mxu0 %v2920
    %3518 = vmatpush1.bf16.msra.mxu0 %v2919
    %3519 = vmatprep.mubr.bf16.mxu0 %v1680
    %3520 = vmatmul.mubr.bf16.gmra.mrb[0].mxu0 %v1679
    %v3521 = vpop.f32.mrb[0].mxu0
    %v3522 = vadd.f32 %v3481, %v3521
    %v3523 = vpop.f32.mrb[0].mxu0
    %v3524 = vadd.f32 %v3483, %v3523
    %v3525 = vpop.f32.mrb[0].mxu0
    %v3526 = vpop.f32.mrb[0].mxu0
    %3527 = vdwg.mxu0
    %3528 = vmatprep.subr.bf16.mxu0 %v2924
    %3529 = vmatpush1.bf16.msra.mxu0 %v2923
    %3530 = vmatprep.subr.bf16.mxu0 %v2928
    %3531 = vmatpush1.bf16.msra.mxu0 %v2927
    %3532 = vmatprep.subr.bf16.mxu0 %v2932
    %3533 = vmatpush1.bf16.msra.mxu0 %v2931
    %3534 = vmatprep.subr.bf16.mxu0 %v2936
    %3535 = vmatpush1.bf16.msra.mxu0 %v2935
    %3536 = vmatprep.subr.bf16.mxu0 %v2940
    %3537 = vmatpush1.bf16.msra.mxu0 %v2939
    %3538 = vmatprep.subr.bf16.mxu0 %v2944
    %3539 = vmatpush1.bf16.msra.mxu0 %v2943
    %3540 = vmatprep.subr.bf16.mxu0 %v2948
    %3541 = vmatpush1.bf16.msra.mxu0 %v2947
    %3542 = vmatprep.subr.bf16.mxu0 %v2952
    %3543 = vmatpush1.bf16.msra.mxu0 %v2951
    %3544 = vmatprep.subr.bf16.mxu0 %v2956
    %3545 = vmatpush1.bf16.msra.mxu0 %v2955
    %3546 = vmatprep.subr.bf16.mxu0 %v2960
    %3547 = vmatpush1.bf16.msra.mxu0 %v2959
    %3548 = vmatprep.subr.bf16.mxu0 %v2964
    %3549 = vmatpush1.bf16.msra.mxu0 %v2963
    %3550 = vmatprep.subr.bf16.mxu0 %v2968
    %3551 = vmatpush1.bf16.msra.mxu0 %v2967
    %3552 = vmatprep.subr.bf16.mxu0 %v2972
    %3553 = vmatpush1.bf16.msra.mxu0 %v2971
    %3554 = vmatprep.subr.bf16.mxu0 %v2976
    %3555 = vmatpush1.bf16.msra.mxu0 %v2975
    %3556 = vmatprep.subr.bf16.mxu0 %v2980
    %3557 = vmatpush1.bf16.msra.mxu0 %v2979
    %3558 = vmatprep.subr.bf16.mxu0 %v2984
    %3559 = vmatpush1.bf16.msra.mxu0 %v2983
    %3560 = vmatprep.mubr.bf16.mxu0 %v1682
    %3561 = vmatmul.mubr.bf16.gmra.mrb[0].mxu0 %v1681
    %v3562 = vpop.f32.mrb[0].mxu0
    %v3563 = vadd.f32 %v3522, %v3562
    %v3564 = vpop.f32.mrb[0].mxu0
    %v3565 = vadd.f32 %v3524, %v3564
    %v3566 = vpop.f32.mrb[0].mxu0
    %v3567 = vpop.f32.mrb[0].mxu0
    %3568 = vdwg.mxu0
    %v3569 = vtanh.pop %v3399
    %v3570 = vtanh.pop %v3401
    %v3571 = vtanh.pop %v3563
    %v3572 = vtanh.pop %v3565
    %v3573 = vpack.c.bf16 %v3569, %v3569
    %v3574 = vpack.c.bf16 %v3570, %v3570
    %v3575 = vpack.c.bf16 %v3571, %v3571
    %v3576 = vpack.c.bf16 %v3572, %v3572
    %v3577 = vld [vmem:[#allocation11] sm:$0xff]
    %v3578 = vld [vmem:[#allocation11 + $0x8] sm:$0xff]
    %v3579 = vld [vmem:[#allocation11 + $0x10] sm:$0xff]
    %v3580 = vld [vmem:[#allocation11 + $0x18] sm:$0xff]
    %v3581 = vld [vmem:[#allocation11 + $0x20] sm:$0xff]
    %v3582 = vld [vmem:[#allocation11 + $0x28] sm:$0xff]
    %v3583 = vld [vmem:[#allocation11 + $0x30] sm:$0xff]
    %v3584 = vld [vmem:[#allocation11 + $0x38] sm:$0xff]
    %v3585 = vld [vmem:[#allocation11 + $0x40] sm:$0xff]
    %v3586 = vld [vmem:[#allocation11 + $0x48] sm:$0xff]
    %v3587 = vld [vmem:[#allocation11 + $0x50] sm:$0xff]
    %v3588 = vld [vmem:[#allocation11 + $0x58] sm:$0xff]
    %v3589 = vld [vmem:[#allocation11 + $0x60] sm:$0xff]
    %v3590 = vld [vmem:[#allocation11 + $0x68] sm:$0xff]
    %v3591 = vld [vmem:[#allocation11 + $0x70] sm:$0xff]
    %v3592 = vld [vmem:[#allocation11 + $0x78] sm:$0xff]
    %v3593 = vld [vmem:[#allocation11 + $0x80] sm:$0xff]
    %v3594 = vld [vmem:[#allocation11 + $0x88] sm:$0xff]
    %v3595 = vld [vmem:[#allocation11 + $0x90] sm:$0xff]
    %v3596 = vld [vmem:[#allocation11 + $0x98] sm:$0xff]
    %v3597 = vld [vmem:[#allocation11 + $0xa0] sm:$0xff]
    %v3598 = vld [vmem:[#allocation11 + $0xa8] sm:$0xff]
    %v3599 = vld [vmem:[#allocation11 + $0xb0] sm:$0xff]
    %v3600 = vld [vmem:[#allocation11 + $0xb8] sm:$0xff]
    %v3601 = vld [vmem:[#allocation11 + $0xc0] sm:$0xff]
    %v3602 = vld [vmem:[#allocation11 + $0xc8] sm:$0xff]
    %v3603 = vld [vmem:[#allocation11 + $0xd0] sm:$0xff]
    %v3604 = vld [vmem:[#allocation11 + $0xd8] sm:$0xff]
    %v3605 = vld [vmem:[#allocation11 + $0xe0] sm:$0xff]
    %v3606 = vld [vmem:[#allocation11 + $0xe8] sm:$0xff]
    %v3607 = vld [vmem:[#allocation11 + $0xf0] sm:$0xff]
    %v3608 = vld [vmem:[#allocation11 + $0xf8] sm:$0xff]
    %v3609 = vld [vmem:[#allocation11 + $0x100] sm:$0xff]
    %v3610 = vld [vmem:[#allocation11 + $0x108] sm:$0xff]
    %v3611 = vld [vmem:[#allocation11 + $0x110] sm:$0xff]
    %v3612 = vld [vmem:[#allocation11 + $0x118] sm:$0xff]
    %v3613 = vld [vmem:[#allocation11 + $0x120] sm:$0xff]
    %v3614 = vld [vmem:[#allocation11 + $0x128] sm:$0xff]
    %v3615 = vld [vmem:[#allocation11 + $0x130] sm:$0xff]
    %v3616 = vld [vmem:[#allocation11 + $0x138] sm:$0xff]
    %v3617 = vld [vmem:[#allocation11 + $0x140] sm:$0xff]
    %v3618 = vld [vmem:[#allocation11 + $0x148] sm:$0xff]
    %v3619 = vld [vmem:[#allocation11 + $0x150] sm:$0xff]
    %v3620 = vld [vmem:[#allocation11 + $0x158] sm:$0xff]
    %v3621 = vld [vmem:[#allocation11 + $0x160] sm:$0xff]
    %v3622 = vld [vmem:[#allocation11 + $0x168] sm:$0xff]
    %v3623 = vld [vmem:[#allocation11 + $0x170] sm:$0xff]
    %v3624 = vld [vmem:[#allocation11 + $0x178] sm:$0xff]
    %v3625 = vld [vmem:[#allocation11 + $0x180] sm:$0xff]
    %v3626 = vld [vmem:[#allocation11 + $0x188] sm:$0xff]
    %v3627 = vld [vmem:[#allocation11 + $0x190] sm:$0xff]
    %v3628 = vld [vmem:[#allocation11 + $0x198] sm:$0xff]
    %v3629 = vld [vmem:[#allocation11 + $0x1a0] sm:$0xff]
    %v3630 = vld [vmem:[#allocation11 + $0x1a8] sm:$0xff]
    %v3631 = vld [vmem:[#allocation11 + $0x1b0] sm:$0xff]
    %v3632 = vld [vmem:[#allocation11 + $0x1b8] sm:$0xff]
    %v3633 = vld [vmem:[#allocation11 + $0x1c0] sm:$0xff]
    %v3634 = vld [vmem:[#allocation11 + $0x1c8] sm:$0xff]
    %v3635 = vld [vmem:[#allocation11 + $0x1d0] sm:$0xff]
    %v3636 = vld [vmem:[#allocation11 + $0x1d8] sm:$0xff]
    %v3637 = vld [vmem:[#allocation11 + $0x1e0] sm:$0xff]
    %v3638 = vld [vmem:[#allocation11 + $0x1e8] sm:$0xff]
    %v3639 = vld [vmem:[#allocation11 + $0x1f0] sm:$0xff]
    %v3640 = vld [vmem:[#allocation11 + $0x1f8] sm:$0xff]
    %v3641 = vld [vmem:[%s8] sm:$0x3]
    %v3643 = vlaneseq
    %v3644 = vshrl.u32 %v3643, 7
    %v3645 = vsub.s32 0, %v3644
    %v3646 = vrot.slane %v3641, %v3645
    %v3647 = vlaneseq
    %v3648 = vshrl.u32 %v3647, 7
    %v3649 = vsub.s32 1, %v3648
    %v3650 = vrot.slane %v3641, %v3649
    %v3717 = vunpack.c.l.b16 %v3577
    %v3718 = vunpack.c.h.b16 %v3577
    %v3719 = vunpack.c.l.b16 %v3578
    %v3720 = vunpack.c.h.b16 %v3578
    %v3721 = vunpack.c.l.b16 %v3579
    %v3722 = vunpack.c.h.b16 %v3579
    %v3723 = vunpack.c.l.b16 %v3580
    %v3724 = vunpack.c.h.b16 %v3580
    %v3725 = vunpack.c.l.b16 %v3581
    %v3726 = vunpack.c.h.b16 %v3581
    %v3727 = vunpack.c.l.b16 %v3582
    %v3728 = vunpack.c.h.b16 %v3582
    %v3729 = vunpack.c.l.b16 %v3583
    %v3730 = vunpack.c.h.b16 %v3583
    %v3731 = vunpack.c.l.b16 %v3584
    %v3732 = vunpack.c.h.b16 %v3584
    %v3733 = vunpack.c.l.b16 %v3585
    %v3734 = vunpack.c.h.b16 %v3585
    %v3735 = vunpack.c.l.b16 %v3586
    %v3736 = vunpack.c.h.b16 %v3586
    %v3737 = vunpack.c.l.b16 %v3587
    %v3738 = vunpack.c.h.b16 %v3587
    %v3739 = vunpack.c.l.b16 %v3588
    %v3740 = vunpack.c.h.b16 %v3588
    %v3741 = vunpack.c.l.b16 %v3589
    %v3742 = vunpack.c.h.b16 %v3589
    %v3743 = vunpack.c.l.b16 %v3590
    %v3744 = vunpack.c.h.b16 %v3590
    %v3745 = vunpack.c.l.b16 %v3591
    %v3746 = vunpack.c.h.b16 %v3591
    %v3747 = vunpack.c.l.b16 %v3592
    %v3748 = vunpack.c.h.b16 %v3592
    %v3749 = vunpack.c.l.b16 %v3593
    %v3750 = vunpack.c.h.b16 %v3593
    %v3751 = vunpack.c.l.b16 %v3594
    %v3752 = vunpack.c.h.b16 %v3594
    %v3753 = vunpack.c.l.b16 %v3595
    %v3754 = vunpack.c.h.b16 %v3595
    %v3755 = vunpack.c.l.b16 %v3596
    %v3756 = vunpack.c.h.b16 %v3596
    %v3757 = vunpack.c.l.b16 %v3597
    %v3758 = vunpack.c.h.b16 %v3597
    %v3759 = vunpack.c.l.b16 %v3598
    %v3760 = vunpack.c.h.b16 %v3598
    %v3761 = vunpack.c.l.b16 %v3599
    %v3762 = vunpack.c.h.b16 %v3599
    %v3763 = vunpack.c.l.b16 %v3600
    %v3764 = vunpack.c.h.b16 %v3600
    %v3765 = vunpack.c.l.b16 %v3601
    %v3766 = vunpack.c.h.b16 %v3601
    %v3767 = vunpack.c.l.b16 %v3602
    %v3768 = vunpack.c.h.b16 %v3602
    %v3769 = vunpack.c.l.b16 %v3603
    %v3770 = vunpack.c.h.b16 %v3603
    %v3771 = vunpack.c.l.b16 %v3604
    %v3772 = vunpack.c.h.b16 %v3604
    %v3773 = vunpack.c.l.b16 %v3605
    %v3774 = vunpack.c.h.b16 %v3605
    %v3775 = vunpack.c.l.b16 %v3606
    %v3776 = vunpack.c.h.b16 %v3606
    %v3777 = vunpack.c.l.b16 %v3607
    %v3778 = vunpack.c.h.b16 %v3607
    %v3779 = vunpack.c.l.b16 %v3608
    %v3780 = vunpack.c.h.b16 %v3608
    %v3781 = vunpack.c.l.b16 %v3609
    %v3782 = vunpack.c.h.b16 %v3609
    %v3783 = vunpack.c.l.b16 %v3610
    %v3784 = vunpack.c.h.b16 %v3610
    %v3785 = vunpack.c.l.b16 %v3611
    %v3786 = vunpack.c.h.b16 %v3611
    %v3787 = vunpack.c.l.b16 %v3612
    %v3788 = vunpack.c.h.b16 %v3612
    %v3789 = vunpack.c.l.b16 %v3613
    %v3790 = vunpack.c.h.b16 %v3613
    %v3791 = vunpack.c.l.b16 %v3614
    %v3792 = vunpack.c.h.b16 %v3614
    %v3793 = vunpack.c.l.b16 %v3615
    %v3794 = vunpack.c.h.b16 %v3615
    %v3795 = vunpack.c.l.b16 %v3616
    %v3796 = vunpack.c.h.b16 %v3616
    %v3797 = vunpack.c.l.b16 %v3617
    %v3798 = vunpack.c.h.b16 %v3617
    %v3799 = vunpack.c.l.b16 %v3618
    %v3800 = vunpack.c.h.b16 %v3618
    %v3801 = vunpack.c.l.b16 %v3619
    %v3802 = vunpack.c.h.b16 %v3619
    %v3803 = vunpack.c.l.b16 %v3620
    %v3804 = vunpack.c.h.b16 %v3620
    %v3805 = vunpack.c.l.b16 %v3621
    %v3806 = vunpack.c.h.b16 %v3621
    %v3807 = vunpack.c.l.b16 %v3622
    %v3808 = vunpack.c.h.b16 %v3622
    %v3809 = vunpack.c.l.b16 %v3623
    %v3810 = vunpack.c.h.b16 %v3623
    %v3811 = vunpack.c.l.b16 %v3624
    %v3812 = vunpack.c.h.b16 %v3624
    %v3813 = vunpack.c.l.b16 %v3625
    %v3814 = vunpack.c.h.b16 %v3625
    %v3815 = vunpack.c.l.b16 %v3626
    %v3816 = vunpack.c.h.b16 %v3626
    %v3817 = vunpack.c.l.b16 %v3627
    %v3818 = vunpack.c.h.b16 %v3627
    %v3819 = vunpack.c.l.b16 %v3628
    %v3820 = vunpack.c.h.b16 %v3628
    %v3821 = vunpack.c.l.b16 %v3629
    %v3822 = vunpack.c.h.b16 %v3629
    %v3823 = vunpack.c.l.b16 %v3630
    %v3824 = vunpack.c.h.b16 %v3630
    %v3825 = vunpack.c.l.b16 %v3631
    %v3826 = vunpack.c.h.b16 %v3631
    %v3827 = vunpack.c.l.b16 %v3632
    %v3828 = vunpack.c.h.b16 %v3632
    %v3829 = vunpack.c.l.b16 %v3633
    %v3830 = vunpack.c.h.b16 %v3633
    %v3831 = vunpack.c.l.b16 %v3634
    %v3832 = vunpack.c.h.b16 %v3634
    %v3833 = vunpack.c.l.b16 %v3635
    %v3834 = vunpack.c.h.b16 %v3635
    %v3835 = vunpack.c.l.b16 %v3636
    %v3836 = vunpack.c.h.b16 %v3636
    %v3837 = vunpack.c.l.b16 %v3637
    %v3838 = vunpack.c.h.b16 %v3637
    %v3839 = vunpack.c.l.b16 %v3638
    %v3840 = vunpack.c.h.b16 %v3638
    %v3841 = vunpack.c.l.b16 %v3639
    %v3842 = vunpack.c.h.b16 %v3639
    %v3843 = vunpack.c.l.b16 %v3640
    %v3844 = vunpack.c.h.b16 %v3640
    %v3845 = vpack.c.b16 %v3719, %v3717
    %v3846 = vpack.c.b16 %v3720, %v3718
    %v3847 = vpack.c.b16 %v3723, %v3721
    %v3848 = vpack.c.b16 %v3724, %v3722
    %v3849 = vpack.c.b16 %v3727, %v3725
    %v3850 = vpack.c.b16 %v3728, %v3726
    %v3851 = vpack.c.b16 %v3731, %v3729
    %v3852 = vpack.c.b16 %v3732, %v3730
    %v3853 = vpack.c.b16 %v3735, %v3733
    %v3854 = vpack.c.b16 %v3736, %v3734
    %v3855 = vpack.c.b16 %v3739, %v3737
    %v3856 = vpack.c.b16 %v3740, %v3738
    %v3857 = vpack.c.b16 %v3743, %v3741
    %v3858 = vpack.c.b16 %v3744, %v3742
    %v3859 = vpack.c.b16 %v3747, %v3745
    %v3860 = vpack.c.b16 %v3748, %v3746
    %v3861 = vpack.c.b16 %v3751, %v3749
    %v3862 = vpack.c.b16 %v3752, %v3750
    %v3863 = vpack.c.b16 %v3755, %v3753
    %v3864 = vpack.c.b16 %v3756, %v3754
    %v3865 = vpack.c.b16 %v3759, %v3757
    %v3866 = vpack.c.b16 %v3760, %v3758
    %v3867 = vpack.c.b16 %v3763, %v3761
    %v3868 = vpack.c.b16 %v3764, %v3762
    %v3869 = vpack.c.b16 %v3767, %v3765
    %v3870 = vpack.c.b16 %v3768, %v3766
    %v3871 = vpack.c.b16 %v3771, %v3769
    %v3872 = vpack.c.b16 %v3772, %v3770
    %v3873 = vpack.c.b16 %v3775, %v3773
    %v3874 = vpack.c.b16 %v3776, %v3774
    %v3875 = vpack.c.b16 %v3779, %v3777
    %v3876 = vpack.c.b16 %v3780, %v3778
    %v3877 = vpack.c.b16 %v3783, %v3781
    %v3878 = vpack.c.b16 %v3784, %v3782
    %v3879 = vpack.c.b16 %v3787, %v3785
    %v3880 = vpack.c.b16 %v3788, %v3786
    %v3881 = vpack.c.b16 %v3791, %v3789
    %v3882 = vpack.c.b16 %v3792, %v3790
    %v3883 = vpack.c.b16 %v3795, %v3793
    %v3884 = vpack.c.b16 %v3796, %v3794
    %v3885 = vpack.c.b16 %v3799, %v3797
    %v3886 = vpack.c.b16 %v3800, %v3798
    %v3887 = vpack.c.b16 %v3803, %v3801
    %v3888 = vpack.c.b16 %v3804, %v3802
    %v3889 = vpack.c.b16 %v3807, %v3805
    %v3890 = vpack.c.b16 %v3808, %v3806
    %v3891 = vpack.c.b16 %v3811, %v3809
    %v3892 = vpack.c.b16 %v3812, %v3810
    %v3893 = vpack.c.b16 %v3815, %v3813
    %v3894 = vpack.c.b16 %v3816, %v3814
    %v3895 = vpack.c.b16 %v3819, %v3817
    %v3896 = vpack.c.b16 %v3820, %v3818
    %v3897 = vpack.c.b16 %v3823, %v3821
    %v3898 = vpack.c.b16 %v3824, %v3822
    %v3899 = vpack.c.b16 %v3827, %v3825
    %v3900 = vpack.c.b16 %v3828, %v3826
    %v3901 = vpack.c.b16 %v3831, %v3829
    %v3902 = vpack.c.b16 %v3832, %v3830
    %v3903 = vpack.c.b16 %v3835, %v3833
    %v3904 = vpack.c.b16 %v3836, %v3834
    %v3905 = vpack.c.b16 %v3839, %v3837
    %v3906 = vpack.c.b16 %v3840, %v3838
    %v3907 = vpack.c.b16 %v3843, %v3841
    %v3908 = vpack.c.b16 %v3844, %v3842
    %3973 = vmatprep.subr.bf16.mxu0 %v3846
    %3974 = vmatpush1.bf16.msra.mxu0 %v3845
    %3975 = vmatprep.subr.bf16.mxu0 %v3848
    %3976 = vmatpush1.bf16.msra.mxu0 %v3847
    %3977 = vmatprep.subr.bf16.mxu0 %v3850
    %3978 = vmatpush1.bf16.msra.mxu0 %v3849
    %3979 = vmatprep.subr.bf16.mxu0 %v3852
    %3980 = vmatpush1.bf16.msra.mxu0 %v3851
    %3981 = vmatprep.subr.bf16.mxu0 %v3854
    %3982 = vmatpush1.bf16.msra.mxu0 %v3853
    %3983 = vmatprep.subr.bf16.mxu0 %v3856
    %3984 = vmatpush1.bf16.msra.mxu0 %v3855
    %3985 = vmatprep.subr.bf16.mxu0 %v3858
    %3986 = vmatpush1.bf16.msra.mxu0 %v3857
    %3987 = vmatprep.subr.bf16.mxu0 %v3860
    %3988 = vmatpush1.bf16.msra.mxu0 %v3859
    %3989 = vmatprep.subr.bf16.mxu0 %v3862
    %3990 = vmatpush1.bf16.msra.mxu0 %v3861
    %3991 = vmatprep.subr.bf16.mxu0 %v3864
    %3992 = vmatpush1.bf16.msra.mxu0 %v3863
    %3993 = vmatprep.subr.bf16.mxu0 %v3866
    %3994 = vmatpush1.bf16.msra.mxu0 %v3865
    %3995 = vmatprep.subr.bf16.mxu0 %v3868
    %3996 = vmatpush1.bf16.msra.mxu0 %v3867
    %3997 = vmatprep.subr.bf16.mxu0 %v3870
    %3998 = vmatpush1.bf16.msra.mxu0 %v3869
    %3999 = vmatprep.subr.bf16.mxu0 %v3872
    %4000 = vmatpush1.bf16.msra.mxu0 %v3871
    %4001 = vmatprep.subr.bf16.mxu0 %v3874
    %4002 = vmatpush1.bf16.msra.mxu0 %v3873
    %4003 = vmatprep.subr.bf16.mxu0 %v3876
    %4004 = vmatpush1.bf16.msra.mxu0 %v3875
    %4005 = vmatprep.mubr.bf16.mxu0 %v3574
    %4006 = vmatmul.mubr.bf16.gmra.mrb[0].mxu0 %v3573
    %v4007 = vpop.f32.mrb[0].mxu0
    %v4008 = vadd.f32 %v3646, %v4007
    %v4009 = vpop.f32.mrb[0].mxu0
    %v4010 = vadd.f32 %v3650, %v4009
    %v4011 = vpop.f32.mrb[0].mxu0
    %v4012 = vpop.f32.mrb[0].mxu0
    %4013 = vdwg.mxu0
    %4014 = vmatprep.subr.bf16.mxu0 %v3878
    %4015 = vmatpush1.bf16.msra.mxu0 %v3877
    %4016 = vmatprep.subr.bf16.mxu0 %v3880
    %4017 = vmatpush1.bf16.msra.mxu0 %v3879
    %4018 = vmatprep.subr.bf16.mxu0 %v3882
    %4019 = vmatpush1.bf16.msra.mxu0 %v3881
    %4020 = vmatprep.subr.bf16.mxu0 %v3884
    %4021 = vmatpush1.bf16.msra.mxu0 %v3883
    %4022 = vmatprep.subr.bf16.mxu0 %v3886
    %4023 = vmatpush1.bf16.msra.mxu0 %v3885
    %4024 = vmatprep.subr.bf16.mxu0 %v3888
    %4025 = vmatpush1.bf16.msra.mxu0 %v3887
    %4026 = vmatprep.subr.bf16.mxu0 %v3890
    %4027 = vmatpush1.bf16.msra.mxu0 %v3889
    %4028 = vmatprep.subr.bf16.mxu0 %v3892
    %4029 = vmatpush1.bf16.msra.mxu0 %v3891
    %4030 = vmatprep.subr.bf16.mxu0 %v3894
    %4031 = vmatpush1.bf16.msra.mxu0 %v3893
    %4032 = vmatprep.subr.bf16.mxu0 %v3896
    %4033 = vmatpush1.bf16.msra.mxu0 %v3895
    %4034 = vmatprep.subr.bf16.mxu0 %v3898
    %4035 = vmatpush1.bf16.msra.mxu0 %v3897
    %4036 = vmatprep.subr.bf16.mxu0 %v3900
    %4037 = vmatpush1.bf16.msra.mxu0 %v3899
    %4038 = vmatprep.subr.bf16.mxu0 %v3902
    %4039 = vmatpush1.bf16.msra.mxu0 %v3901
    %4040 = vmatprep.subr.bf16.mxu0 %v3904
    %4041 = vmatpush1.bf16.msra.mxu0 %v3903
    %4042 = vmatprep.subr.bf16.mxu0 %v3906
    %4043 = vmatpush1.bf16.msra.mxu0 %v3905
    %4044 = vmatprep.subr.bf16.mxu0 %v3908
    %4045 = vmatpush1.bf16.msra.mxu0 %v3907
    %4046 = vmatprep.mubr.bf16.mxu0 %v3576
    %4047 = vmatmul.mubr.bf16.gmra.mrb[0].mxu0 %v3575
    %v4048 = vpop.f32.mrb[0].mxu0
    %v4049 = vadd.f32 %v4008, %v4048
    %v4050 = vpop.f32.mrb[0].mxu0
    %v4051 = vadd.f32 %v4010, %v4050
    %v4052 = vpop.f32.mrb[0].mxu0
    %v4053 = vpop.f32.mrb[0].mxu0
    %4054 = vdwg.mxu0
    %v4055 = vtanh.pop %v4049
    %v4056 = vtanh.pop %v4051
    %v4057 = vpack.c.bf16 %v4055, %v4055
    %v4058 = vpack.c.bf16 %v4056, %v4056
    %v4059 = vld [vmem:[#allocation13] sm:$0xf]
    %v4060 = vld [vmem:[#allocation13 + $0x4] sm:$0xf]
    %v4061 = vld [vmem:[#allocation13 + $0x8] sm:$0xf]
    %v4062 = vld [vmem:[#allocation13 + $0xc] sm:$0xf]
    %v4063 = vld [vmem:[#allocation13 + $0x10] sm:$0xf]
    %v4064 = vld [vmem:[#allocation13 + $0x14] sm:$0xf]
    %v4065 = vld [vmem:[#allocation13 + $0x18] sm:$0xf]
    %v4066 = vld [vmem:[#allocation13 + $0x1c] sm:$0xf]
    %v4067 = vld [vmem:[#allocation13 + $0x20] sm:$0xf]
    %v4068 = vld [vmem:[#allocation13 + $0x24] sm:$0xf]
    %v4069 = vld [vmem:[#allocation13 + $0x28] sm:$0xf]
    %v4070 = vld [vmem:[#allocation13 + $0x2c] sm:$0xf]
    %v4071 = vld [vmem:[#allocation13 + $0x30] sm:$0xf]
    %v4072 = vld [vmem:[#allocation13 + $0x34] sm:$0xf]
    %v4073 = vld [vmem:[#allocation13 + $0x38] sm:$0xf]
    %v4074 = vld [vmem:[#allocation13 + $0x3c] sm:$0xf]
    %v4075 = vld [vmem:[#allocation13 + $0x40] sm:$0xf]
    %v4076 = vld [vmem:[#allocation13 + $0x44] sm:$0xf]
    %v4077 = vld [vmem:[#allocation13 + $0x48] sm:$0xf]
    %v4078 = vld [vmem:[#allocation13 + $0x4c] sm:$0xf]
    %v4079 = vld [vmem:[#allocation13 + $0x50] sm:$0xf]
    %v4080 = vld [vmem:[#allocation13 + $0x54] sm:$0xf]
    %v4081 = vld [vmem:[#allocation13 + $0x58] sm:$0xf]
    %v4082 = vld [vmem:[#allocation13 + $0x5c] sm:$0xf]
    %v4083 = vld [vmem:[#allocation13 + $0x60] sm:$0xf]
    %v4084 = vld [vmem:[#allocation13 + $0x64] sm:$0xf]
    %v4085 = vld [vmem:[#allocation13 + $0x68] sm:$0xf]
    %v4086 = vld [vmem:[#allocation13 + $0x6c] sm:$0xf]
    %v4087 = vld [vmem:[#allocation13 + $0x70] sm:$0xf]
    %v4088 = vld [vmem:[#allocation13 + $0x74] sm:$0xf]
    %v4089 = vld [vmem:[#allocation13 + $0x78] sm:$0xf]
    %v4090 = vld [vmem:[#allocation13 + $0x7c] sm:$0xf]
    %v4091 = vld [vmem:[%s10] sm:$0x1]
    %v4093 = vlaneseq
    %v4094 = vshrl.u32 %v4093, 7
    %v4095 = vsub.s32 0, %v4094
    %v4096 = vrot.slane %v4091, %v4095
    %v4130 = vunpack.c.l.b16 %v4059
    %v4131 = vunpack.c.l.b16 %v4060
    %v4132 = vunpack.c.l.b16 %v4061
    %v4133 = vunpack.c.l.b16 %v4062
    %v4134 = vunpack.c.l.b16 %v4063
    %v4135 = vunpack.c.l.b16 %v4064
    %v4136 = vunpack.c.l.b16 %v4065
    %v4137 = vunpack.c.l.b16 %v4066
    %v4138 = vunpack.c.l.b16 %v4067
    %v4139 = vunpack.c.l.b16 %v4068
    %v4140 = vunpack.c.l.b16 %v4069
    %v4141 = vunpack.c.l.b16 %v4070
    %v4142 = vunpack.c.l.b16 %v4071
    %v4143 = vunpack.c.l.b16 %v4072
    %v4144 = vunpack.c.l.b16 %v4073
    %v4145 = vunpack.c.l.b16 %v4074
    %v4146 = vunpack.c.l.b16 %v4075
    %v4147 = vunpack.c.l.b16 %v4076
    %v4148 = vunpack.c.l.b16 %v4077
    %v4149 = vunpack.c.l.b16 %v4078
    %v4150 = vunpack.c.l.b16 %v4079
    %v4151 = vunpack.c.l.b16 %v4080
    %v4152 = vunpack.c.l.b16 %v4081
    %v4153 = vunpack.c.l.b16 %v4082
    %v4154 = vunpack.c.l.b16 %v4083
    %v4155 = vunpack.c.l.b16 %v4084
    %v4156 = vunpack.c.l.b16 %v4085
    %v4157 = vunpack.c.l.b16 %v4086
    %v4158 = vunpack.c.l.b16 %v4087
    %v4159 = vunpack.c.l.b16 %v4088
    %v4160 = vunpack.c.l.b16 %v4089
    %v4161 = vunpack.c.l.b16 %v4090
    %v4162 = vpack.c.b16 %v4131, %v4130
    %v4163 = vpack.c.b16 %v4133, %v4132
    %v4164 = vpack.c.b16 %v4135, %v4134
    %v4165 = vpack.c.b16 %v4137, %v4136
    %v4166 = vpack.c.b16 %v4139, %v4138
    %v4167 = vpack.c.b16 %v4141, %v4140
    %v4168 = vpack.c.b16 %v4143, %v4142
    %v4169 = vpack.c.b16 %v4145, %v4144
    %v4170 = vpack.c.b16 %v4147, %v4146
    %v4171 = vpack.c.b16 %v4149, %v4148
    %v4172 = vpack.c.b16 %v4151, %v4150
    %v4173 = vpack.c.b16 %v4153, %v4152
    %v4174 = vpack.c.b16 %v4155, %v4154
    %v4175 = vpack.c.b16 %v4157, %v4156
    %v4176 = vpack.c.b16 %v4159, %v4158
    %v4177 = vpack.c.b16 %v4161, %v4160
    %4194 = vmatprep.subr.bf16.mxu0 0
    %4195 = vmatpush1.bf16.msra.mxu0 %v4162
    %4196 = vmatprep.subr.bf16.mxu0 0
    %4197 = vmatpush1.bf16.msra.mxu0 %v4163
    %4198 = vmatprep.subr.bf16.mxu0 0
    %4199 = vmatpush1.bf16.msra.mxu0 %v4164
    %4200 = vmatprep.subr.bf16.mxu0 0
    %4201 = vmatpush1.bf16.msra.mxu0 %v4165
    %4202 = vmatprep.subr.bf16.mxu0 0
    %4203 = vmatpush1.bf16.msra.mxu0 %v4166
    %4204 = vmatprep.subr.bf16.mxu0 0
    %4205 = vmatpush1.bf16.msra.mxu0 %v4167
    %4206 = vmatprep.subr.bf16.mxu0 0
    %4207 = vmatpush1.bf16.msra.mxu0 %v4168
    %4208 = vmatprep.subr.bf16.mxu0 0
    %4209 = vmatpush1.bf16.msra.mxu0 %v4169
    %4210 = vmatprep.subr.bf16.mxu0 0
    %4211 = vmatpush1.bf16.msra.mxu0 %v4170
    %4212 = vmatprep.subr.bf16.mxu0 0
    %4213 = vmatpush1.bf16.msra.mxu0 %v4171
    %4214 = vmatprep.subr.bf16.mxu0 0
    %4215 = vmatpush1.bf16.msra.mxu0 %v4172
    %4216 = vmatprep.subr.bf16.mxu0 0
    %4217 = vmatpush1.bf16.msra.mxu0 %v4173
    %4218 = vmatprep.subr.bf16.mxu0 0
    %4219 = vmatpush1.bf16.msra.mxu0 %v4174
    %4220 = vmatprep.subr.bf16.mxu0 0
    %4221 = vmatpush1.bf16.msra.mxu0 %v4175
    %4222 = vmatprep.subr.bf16.mxu0 0
    %4223 = vmatpush1.bf16.msra.mxu0 %v4176
    %4224 = vmatprep.subr.bf16.mxu0 0
    %4225 = vmatpush1.bf16.msra.mxu0 %v4177
    %4226 = vmatprep.mubr.bf16.mxu0 %v4058
    %4227 = vmatmul.mubr.bf16.gmra.mrb[0].mxu0 %v4057
    %v4228 = vpop.f32.mrb[0].mxu0
    %v4229 = vadd.f32 %v4096, %v4228
    %v4230 = vpop.f32.mrb[0].mxu0
    %v4231 = vpop.f32.mrb[0].mxu0
    %v4232 = vpop.f32.mrb[0].mxu0
    %4233 = vdwg.mxu0
    %v4234 = vpack.c.bf16 %v4229, %v4229
    %4235 = vst [vmem:[#allocation14] sm:$0xf] %v4234
    // Predicated region
    $region74: #{tpu_custom_call.1} parent=1 // pred_check
      _
    $region75: #{tpu_custom_call.1} parent=1 // pred_check_branch
      %4237 = sbr.rel (0) target = $region77
    $region76: #{tpu_custom_call.1} parent=1 // pred_region
      %s4239 = ssub.s32 64, 64
      %4240 = vsyncadd [#allocation4], %s4239
      %s4242 = sshll.u32 [#allocation14], 4
      %s4243 = int_to_ptr.vmem [resolvable:$true] %s4242
      %4245 = dma.vmem_to_hbm [thread:$0]  %s4243, 64, %s11, [#allocation4]
    $region77: #{tpu_custom_call.1} parent=1 // pred_fallthru
      _
    // Predicated region
    $region78: #{tpu_custom_call.1} parent=1 // pred_check
      _
    $region79: #{tpu_custom_call.1} parent=1 // pred_check_branch
      %4247 = sbr.rel (0) target = $region81
    $region80: #{tpu_custom_call.1} parent=1 // pred_region
      %4248 = dma.done [#allocation4], 64
    $region81: #{tpu_custom_call.1} parent=1 // pred_fallthru
      _
    %4249 = vsyncpa [#allocation3], 1
    %4250 = vsyncpa [#allocation6], 1
    %4251 = vsyncpa [#allocation9], 1
    %4252 = vsyncpa [#allocation12], 1
    %4253 = vsyncpa [#allocation4], 1

</llo_original>
